<compile_context>
chip_gen: v5e
topology: v5e:2x2
jax: 0.10.0
libtpu: 0.0.40
codegen_flags: <defaults>
</compile_context>

<pallas_src>
from functools import partial
from itertools import combinations

import numpy as np
import jax
import jax.numpy as jnp
from jax.experimental import pallas as pl
from jax.experimental.pallas import tpu as pltpu

NUM_LAGS = 10
WINDOWS = 3
PACK = 4          # batch samples packed per vreg row (4 * H=32 = 128 lanes)
SLOT = 8          # xs slot dim padded 4 -> 8 so the layer-1 contraction is sublane-aligned


def build_lag_adjacency(num_lags=NUM_LAGS, windows=WINDOWS):
    """Dense in-adjacency A[dst, src] replicating get_batch_graph() for one graph."""
    A = np.zeros((num_lags, num_lags), dtype=np.float32)
    for j in range(windows, num_lags + 1):
        t = list(range(j - windows, j))
        edges = list(combinations(t, 2))
        for (s, d) in edges[:-1]:          # edges[0:-1] in the original code
            A[d, s] += 1.0
    A[num_lags - 1, num_lags - 2] += 1.0   # g.add_edge(max_len-2, max_len-1)
    A[0, num_lags - 1] += 1.0              # g.add_edge(max_len-1, 0)
    return A


def regression_kernel(tbp, num_lags, hp_dim, n_reg, adj_np, pack,
                      xs_ref, ew1_ref, b1_ref, w2_ref, b2_ref,
                      wx_ref, bx_ref, wh_ref, bhn_ref, wreg_ref, breg_ref,
                      out_ref):
    f32 = jnp.float32
    L = num_lags
    Hp = hp_dim                                          # pack * hidden = 128 lanes

    ew1 = ew1_ref[...]                                   # (SLOT, Hp)  lag-select * w1
    w2 = w2_ref[...]                                     # (Hp, Hp)    block-diag
    wx = wx_ref[...]                                     # (Hp, 3*Hp)  merge+GRU-input, [R|Z|N]
    # Hoist loop-invariant bias broadcasts (JAX does not CSE broadcast_in_dim).
    b1 = jnp.broadcast_to(b1_ref[...], (tbp, Hp))
    b2 = jnp.broadcast_to(b2_ref[...], (tbp, Hp))
    bx = jnp.broadcast_to(bx_ref[...], (tbp, 3 * Hp))

    # lags_hidden200 (Linear(1,H)+tanh) and lags_hidden50 (BN folded + Linear(H,H)+tanh),
    # one lane-dense (tbp, 128) block per lag.  Dropout layers are eval-mode identity.
    h = []
    for l in range(L):
        hl = jnp.tanh(jnp.dot(xs_ref[l], ew1, preferred_element_type=f32) + b1)
        hl = jnp.tanh(jnp.dot(hl, w2, preferred_element_type=f32) + b2)
        h.append(hl)

    # MGN: in-neighbor sum over the *static* lag graph (edges baked in at trace time ->
    # a few per-lag adds, no adjacency matmul).  The merge Linear is folded host-side
    # into the GRU input projection, so each message sum feeds one
    # (tbp,128)x(128,384) matmul.  Gate columns are packed [R | Z | N], 128 lanes each.
    xproj = []
    for d in range(L):
        acc = None
        for s in range(L):
            w = float(adj_np[d, s])
            if w == 0.0:
                continue
            term = h[s] if w == 1.0 else h[s] * w
            acc = term if acc is None else acc + term
        if acc is None:                                  # zero in-degree: never hit here
            acc = jnp.zeros((tbp, Hp), f32)
        xproj.append(jnp.dot(acc, wx, preferred_element_type=f32) + bx)   # (tbp, 3*Hp)

    # GRU over the lags (h0 = 0): one hidden-state matmul per step on the serial chain,
    # whole-vreg gate slices, and the regression Linear accumulated on the fly
    # (no (tb, L*H) scratch / lane-offset stores).
    wh = wh_ref[...]                                     # (Hp, 3*Hp)
    bhn = jnp.broadcast_to(bhn_ref[...], (tbp, Hp))
    h_t = jnp.zeros((tbp, Hp), f32)
    out_acc = jnp.zeros((tbp, pack * n_reg), f32)
    for t in range(L):                                   # static, fully unrolled
        xp = xproj[t]
        hp = jnp.dot(h_t, wh, preferred_element_type=f32)
        rz = jax.nn.sigmoid(xp[:, :2 * Hp] + hp[:, :2 * Hp])   # r and z in one 256-lane op
        r = rz[:, :Hp]
        z = rz[:, Hp:]
        n = jnp.tanh(xp[:, 2 * Hp:] + r * (hp[:, 2 * Hp:] + bhn))
        h_t = (1.0 - z) * n + z * h_t
        out_acc = out_acc + jnp.dot(h_t, wreg_ref[t], preferred_element_type=f32)

    out_ref[...] = out_acc + breg_ref[...]


def _round_up(v, m):
    return ((v + m - 1) // m) * m


def _kron_eye(w, p):
    """Block-diagonal p-fold replication: (K, N) -> (p*K, p*N)."""
    return jnp.kron(jnp.eye(p, dtype=w.dtype), w)


def _pack_gate_w(w3, p, h):
    """(H, 3H) gate-fused weight [r|z|n] -> (p*H, 3*p*H) packed [R | Z | N]."""
    return jnp.concatenate(
        [_kron_eye(w3[:, g * h:(g + 1) * h], p) for g in range(3)], axis=1)


def _pack_gate_b(b3, p, h):
    """(1, 3H) gate-fused bias -> (1, 3*p*H) packed [R | Z | N]."""
    return jnp.concatenate(
        [jnp.tile(b3[:, g * h:(g + 1) * h], (1, p)) for g in range(3)], axis=1)


def regression_forward(x, params, n_reg):
    f32 = jnp.float32
    P = PACK
    bs_orig, L = x.shape
    H = params["w1"].shape[1]
    Hp = P * H

    x = x.astype(f32)

    # --- batch tiling: large tiles amortize grid-step overhead; 2 tiles for large
    #     batches so both v7x TensorCores get work; batch padded to a tile multiple
    #     (padded rows never mix with real rows: message passing only mixes lags).
    TB_CAP = 2048
    bs_pad = _round_up(bs_orig, 8 * P)                   # packed rows stay sublane-aligned
    if bs_pad <= 256:
        tb = bs_pad
    elif bs_pad <= 2 * TB_CAP:
        tb = _round_up((bs_pad + 1) // 2, 8 * P)
    else:
        tb = TB_CAP
    bs_p = _round_up(bs_pad, tb)
    tbp = tb // P

    if bs_p != bs_orig:
        x = jnp.concatenate([x, jnp.zeros((bs_p - bs_orig, L), f32)], axis=0)

    # lag-major, 4-sample-packed input: xs[l, k, s] = x[4k+s, l]; slot dim padded to 8.
    xs = x.reshape(bs_p // P, P, L)
    xs = jnp.concatenate([xs, jnp.zeros((bs_p // P, SLOT - P, L), f32)], axis=1)
    xs = jnp.transpose(xs, (2, 0, 1))                    # (L, bs_p/4, SLOT)

    # --- host-side algebraic folds + 4x block-diagonal packing (all free):
    w2f = params["bn_scale"].reshape(H, 1) * params["w2"]           # BN(eval) into Linear2
    b2f = params["b2"] + params["bn_shift"] @ params["w2"]
    wi = jnp.concatenate([params["w_ir"], params["w_iz"], params["w_in"]], axis=1)
    bi = jnp.concatenate([params["b_r"], params["b_z"], params["b_in"]], axis=1)
    w_mi = params["wm"] @ wi                                        # merge Linear folded in
    b_mi = params["bm"] @ wi + bi
    wh = jnp.concatenate([params["w_hr"], params["w_hz"], params["w_hn"]], axis=1)

    ew1 = jnp.concatenate(
        [_kron_eye(params["w1"], P), jnp.zeros((SLOT - P, Hp), f32)], axis=0)   # (SLOT, Hp)
    b1p = jnp.tile(params["b1"], (1, P))                 # (1, Hp)
    w2p = _kron_eye(w2f, P)                              # (Hp, Hp)
    b2p = jnp.tile(b2f, (1, P))                          # (1, Hp)
    wxp = _pack_gate_w(w_mi, P, H)                       # (Hp, 3*Hp)
    bxp = _pack_gate_b(b_mi, P, H)                       # (1, 3*Hp)
    whp = _pack_gate_w(wh, P, H)                         # (Hp, 3*Hp)
    bhnp = jnp.tile(params["b_hn"], (1, P))              # (1, Hp)
    wregp = jnp.stack(
        [_kron_eye(params["w_reg"][t * H:(t + 1) * H, :], P) for t in range(L)],
        axis=0)                                          # (L, Hp, P*n_reg)
    bregp = jnp.tile(params["b_reg"], (1, P))            # (1, P*n_reg)

    adj_np = build_lag_adjacency(L)                      # static graph, baked into kernel

    args = [xs, ew1, b1p, w2p, b2p, wxp, bxp, whp, bhnp, wregp, bregp]

    def const_spec(a):
        nd = a.ndim
        return pl.BlockSpec(a.shape, lambda i: (0,) * nd)

    in_specs = [pl.BlockSpec((L, tbp, SLOT), lambda i: (0, i, 0))]
    in_specs += [const_spec(a) for a in args[1:]]

    kernel = partial(regression_kernel, tbp, L, Hp, n_reg, adj_np, P)
    out_p = pl.pallas_call(
        kernel,
        out_shape=jax.ShapeDtypeStruct((bs_p // P, P * n_reg), f32),
        grid=(bs_p // tb,),
        in_specs=in_specs,
        out_specs=pl.BlockSpec((tbp, P * n_reg), lambda i: (i, 0)),
        compiler_params=pltpu.CompilerParams(
            dimension_semantics=("parallel",),
            vmem_limit_bytes=48 * 1024 * 1024),          # v5e default (16 MiB) is too tight
    )(*args)

    # unpack (bs/4, 4*n_reg) -> (bs, n_reg): packed row k slot s <-> sample 4k+s
    return out_p.reshape(bs_p, n_reg)[:bs_orig]


def init_params(key, in_dim, hidden, n_reg, num_lags):
    assert in_dim == 1, "forward() reshapes inputs to (-1, 1); in_dim must be 1"
    ks = jax.random.split(key, 22)

    def g(k, shape, scale=0.1):
        return (scale * jax.random.normal(k, shape)).astype(jnp.float32)

    eps = 1e-5
    gamma = 1.0 + g(ks[0], (1, hidden))
    beta = g(ks[1], (1, hidden))
    rmean = g(ks[2], (1, hidden))
    rvar = jnp.abs(g(ks[3], (1, hidden))) + 1.0
    bn_scale = gamma / jnp.sqrt(rvar + eps)
    bn_shift = beta - rmean * bn_scale

    return dict(
        w1=g(ks[4], (in_dim, hidden)),  b1=g(ks[5], (1, hidden)),      # lags_hidden200
        bn_scale=bn_scale, bn_shift=bn_shift,                          # lags_norm200 (eval)
        w2=g(ks[6], (hidden, hidden)),  b2=g(ks[7], (1, hidden)),      # lags_hidden50
        adj=jnp.asarray(build_lag_adjacency(num_lags)),
        wm=g(ks[8], (hidden, hidden)),  bm=g(ks[9], (1, hidden)),      # MGN merge_linner
        w_ir=g(ks[10], (hidden, hidden)), w_iz=g(ks[11], (hidden, hidden)),
        w_in=g(ks[12], (hidden, hidden)), w_hr=g(ks[13], (hidden, hidden)),
        w_hz=g(ks[14], (hidden, hidden)), w_hn=g(ks[15], (hidden, hidden)),
        b_r=g(ks[16], (1, hidden)), b_z=g(ks[17], (1, hidden)),        # b_ir+b_hr, b_iz+b_hz
        b_in=g(ks[18], (1, hidden)), b_hn=g(ks[19], (1, hidden)),
        w_reg=g(ks[20], (num_lags * hidden, n_reg)),
        b_reg=g(ks[21], (1, n_reg)),
    )


def regression_reference(x, params):
    """Pure-JAX reference of the same forward pass (batch-major layout, like PyTorch)."""
    bs, L = x.shape
    H = params["w1"].shape[1]
    h = x.reshape(-1, 1)
    h = jnp.tanh(h @ params["w1"] + params["b1"])
    h = h * params["bn_scale"] + params["bn_shift"]
    h = jnp.tanh(h @ params["w2"] + params["b2"])
    h = h.reshape(bs, L, H)
    h = jnp.einsum("vu,bud->bvd", params["adj"], h)
    h = h @ params["wm"] + params["bm"]
    h_t = jnp.zeros((bs, H), jnp.float32)
    outs = []
    for t in range(L):
        x_t = h[:, t, :]
        r = jax.nn.sigmoid(x_t @ params["w_ir"] + h_t @ params["w_hr"] + params["b_r"])
        z = jax.nn.sigmoid(x_t @ params["w_iz"] + h_t @ params["w_hz"] + params["b_z"])
        n = jnp.tanh(x_t @ params["w_in"] + params["b_in"]
                     + r * (h_t @ params["w_hn"] + params["b_hn"]))
        h_t = (1.0 - z) * n + z * h_t
        outs.append(h_t)
    out = jnp.stack(outs, axis=1).reshape(bs, L * H)
    return out @ params["w_reg"] + params["b_reg"]


if __name__ == "__main__":
    bs, in_dim, hidden, n_reg = 8, 1, 32, 4
    key = jax.random.PRNGKey(0)
    kx, kp = jax.random.split(key)
    x = jax.random.normal(kx, (bs, NUM_LAGS), dtype=jnp.float32)
    params = init_params(kp, in_dim, hidden, n_reg, NUM_LAGS)

    out = regression_forward(x, params, n_reg)
    out = jax.block_until_ready(out)
    assert out.shape == (bs, n_reg)

    ref = np.asarray(regression_reference(x, params))
    if not np.allclose(np.asarray(out), ref, rtol=1e-2, atol=1e-2):
        raise AssertionError("Pallas kernel output mismatches JAX reference")
    print("KERNEL_OK")
</pallas_src>

<mosaic_0001>
module attributes {stable_mosaic.version = 11 : i64} {
  func.func @regression_kernel(%arg0: i32, %arg1: memref<10x8x8xf32, #tpu.memory_space<vmem>>, %arg2: memref<8x128xf32, #tpu.memory_space<vmem>>, %arg3: memref<1x128xf32, #tpu.memory_space<vmem>>, %arg4: memref<128x128xf32, #tpu.memory_space<vmem>>, %arg5: memref<1x128xf32, #tpu.memory_space<vmem>>, %arg6: memref<128x384xf32, #tpu.memory_space<vmem>>, %arg7: memref<1x384xf32, #tpu.memory_space<vmem>>, %arg8: memref<128x384xf32, #tpu.memory_space<vmem>>, %arg9: memref<1x128xf32, #tpu.memory_space<vmem>>, %arg10: memref<10x128x16xf32, #tpu.memory_space<vmem>>, %arg11: memref<1x16xf32, #tpu.memory_space<vmem>>, %arg12: memref<8x16xf32, #tpu.memory_space<vmem>>) attributes {dimension_semantics = [#tpu.dimension_semantics<parallel>], iteration_bounds = array<i64: 1>, scalar_prefetch = 0 : i64, scratch_operands = 0 : i64, tpu.core_type = #tpu.core_type<tc>, window_params = [{transform_indices = @transform_0, window_bounds = array<i64: 10, 8, 8>}, {pipeline_mode = #tpu.pipeline_mode<synchronous>, transform_indices = @transform_1, window_bounds = array<i64: 8, 128>}, {pipeline_mode = #tpu.pipeline_mode<synchronous>, transform_indices = @transform_2, window_bounds = array<i64: 1, 128>}, {pipeline_mode = #tpu.pipeline_mode<synchronous>, transform_indices = @transform_3, window_bounds = array<i64: 128, 128>}, {pipeline_mode = #tpu.pipeline_mode<synchronous>, transform_indices = @transform_4, window_bounds = array<i64: 1, 128>}, {pipeline_mode = #tpu.pipeline_mode<synchronous>, transform_indices = @transform_5, window_bounds = array<i64: 128, 384>}, {pipeline_mode = #tpu.pipeline_mode<synchronous>, transform_indices = @transform_6, window_bounds = array<i64: 1, 384>}, {pipeline_mode = #tpu.pipeline_mode<synchronous>, transform_indices = @transform_7, window_bounds = array<i64: 128, 384>}, {pipeline_mode = #tpu.pipeline_mode<synchronous>, transform_indices = @transform_8, window_bounds = array<i64: 1, 128>}, {pipeline_mode = #tpu.pipeline_mode<synchronous>, transform_indices = @transform_9, window_bounds = array<i64: 10, 128, 16>}, {pipeline_mode = #tpu.pipeline_mode<synchronous>, transform_indices = @transform_10, window_bounds = array<i64: 1, 16>}, {transform_indices = @transform_11, window_bounds = array<i64: 8, 16>}]} {
    %c0 = arith.constant 0 : index
    %c0_0 = arith.constant 0 : index
    %0 = vector.load %arg2[%c0, %c0_0] : memref<8x128xf32, #tpu.memory_space<vmem>>, vector<8x128xf32>
    %c0_1 = arith.constant 0 : index
    %c0_2 = arith.constant 0 : index
    %1 = vector.load %arg4[%c0_1, %c0_2] : memref<128x128xf32, #tpu.memory_space<vmem>>, vector<128x128xf32>
    %c0_3 = arith.constant 0 : index
    %c0_4 = arith.constant 0 : index
    %2 = vector.load %arg6[%c0_3, %c0_4] : memref<128x384xf32, #tpu.memory_space<vmem>>, vector<128x384xf32>
    %c0_5 = arith.constant 0 : index
    %c0_6 = arith.constant 0 : index
    %3 = vector.load %arg3[%c0_5, %c0_6] : memref<1x128xf32, #tpu.memory_space<vmem>>, vector<1x128xf32>
    %4 = vector.shape_cast %3 : vector<1x128xf32> to vector<1x128xf32>
    %5 = vector.broadcast %4 : vector<1x128xf32> to vector<8x128xf32>
    %c0_7 = arith.constant 0 : index
    %c0_8 = arith.constant 0 : index
    %6 = vector.load %arg5[%c0_7, %c0_8] : memref<1x128xf32, #tpu.memory_space<vmem>>, vector<1x128xf32>
    %7 = vector.shape_cast %6 : vector<1x128xf32> to vector<1x128xf32>
    %8 = vector.broadcast %7 : vector<1x128xf32> to vector<8x128xf32>
    %c0_9 = arith.constant 0 : index
    %c0_10 = arith.constant 0 : index
    %9 = vector.load %arg7[%c0_9, %c0_10] : memref<1x384xf32, #tpu.memory_space<vmem>>, vector<1x384xf32>
    %10 = vector.shape_cast %9 : vector<1x384xf32> to vector<1x384xf32>
    %11 = vector.broadcast %10 : vector<1x384xf32> to vector<8x384xf32>
    %c0_11 = arith.constant 0 : index
    %c0_12 = arith.constant 0 : index
    %c0_13 = arith.constant 0 : index
    %12 = vector.load %arg1[%c0_11, %c0_12, %c0_13] : memref<10x8x8xf32, #tpu.memory_space<vmem>>, vector<1x8x8xf32>
    %13 = vector.shape_cast %12 : vector<1x8x8xf32> to vector<8x8xf32>
    %cst = arith.constant dense<0.000000e+00> : vector<8x128xf32>
    %14 = tpu.matmul %13, %0, %cst {dimension_numbers = #tpu.dot_dimension_numbers<[1], [0], [0], [1], [0, 0, 1, 1], [], []>} : vector<8x8xf32>, vector<8x128xf32>, vector<8x128xf32> -> vector<8x128xf32>
    %15 = arith.addf %14, %5 : vector<8x128xf32>
    %16 = math.tanh %15 : vector<8x128xf32>
    %cst_14 = arith.constant dense<0.000000e+00> : vector<8x128xf32>
    %17 = tpu.matmul %16, %1, %cst_14 {dimension_numbers = #tpu.dot_dimension_numbers<[1], [0], [0], [1], [0, 0, 1, 1], [], []>} : vector<8x128xf32>, vector<128x128xf32>, vector<8x128xf32> -> vector<8x128xf32>
    %18 = arith.addf %17, %8 : vector<8x128xf32>
    %19 = math.tanh %18 : vector<8x128xf32>
    %c1 = arith.constant 1 : index
    %c0_15 = arith.constant 0 : index
    %c0_16 = arith.constant 0 : index
    %20 = vector.load %arg1[%c1, %c0_15, %c0_16] : memref<10x8x8xf32, #tpu.memory_space<vmem>>, vector<1x8x8xf32>
    %21 = vector.shape_cast %20 : vector<1x8x8xf32> to vector<8x8xf32>
    %cst_17 = arith.constant dense<0.000000e+00> : vector<8x128xf32>
    %22 = tpu.matmul %21, %0, %cst_17 {dimension_numbers = #tpu.dot_dimension_numbers<[1], [0], [0], [1], [0, 0, 1, 1], [], []>} : vector<8x8xf32>, vector<8x128xf32>, vector<8x128xf32> -> vector<8x128xf32>
    %23 = arith.addf %22, %5 : vector<8x128xf32>
    %24 = math.tanh %23 : vector<8x128xf32>
    %cst_18 = arith.constant dense<0.000000e+00> : vector<8x128xf32>
    %25 = tpu.matmul %24, %1, %cst_18 {dimension_numbers = #tpu.dot_dimension_numbers<[1], [0], [0], [1], [0, 0, 1, 1], [], []>} : vector<8x128xf32>, vector<128x128xf32>, vector<8x128xf32> -> vector<8x128xf32>
    %26 = arith.addf %25, %8 : vector<8x128xf32>
    %27 = math.tanh %26 : vector<8x128xf32>
    %c2 = arith.constant 2 : index
    %c0_19 = arith.constant 0 : index
    %c0_20 = arith.constant 0 : index
    %28 = vector.load %arg1[%c2, %c0_19, %c0_20] : memref<10x8x8xf32, #tpu.memory_space<vmem>>, vector<1x8x8xf32>
    %29 = vector.shape_cast %28 : vector<1x8x8xf32> to vector<8x8xf32>
    %cst_21 = arith.constant dense<0.000000e+00> : vector<8x128xf32>
    %30 = tpu.matmul %29, %0, %cst_21 {dimension_numbers = #tpu.dot_dimension_numbers<[1], [0], [0], [1], [0, 0, 1, 1], [], []>} : vector<8x8xf32>, vector<8x128xf32>, vector<8x128xf32> -> vector<8x128xf32>
    %31 = arith.addf %30, %5 : vector<8x128xf32>
    %32 = math.tanh %31 : vector<8x128xf32>
    %cst_22 = arith.constant dense<0.000000e+00> : vector<8x128xf32>
    %33 = tpu.matmul %32, %1, %cst_22 {dimension_numbers = #tpu.dot_dimension_numbers<[1], [0], [0], [1], [0, 0, 1, 1], [], []>} : vector<8x128xf32>, vector<128x128xf32>, vector<8x128xf32> -> vector<8x128xf32>
    %34 = arith.addf %33, %8 : vector<8x128xf32>
    %35 = math.tanh %34 : vector<8x128xf32>
    %c3 = arith.constant 3 : index
    %c0_23 = arith.constant 0 : index
    %c0_24 = arith.constant 0 : index
    %36 = vector.load %arg1[%c3, %c0_23, %c0_24] : memref<10x8x8xf32, #tpu.memory_space<vmem>>, vector<1x8x8xf32>
    %37 = vector.shape_cast %36 : vector<1x8x8xf32> to vector<8x8xf32>
    %cst_25 = arith.constant dense<0.000000e+00> : vector<8x128xf32>
    %38 = tpu.matmul %37, %0, %cst_25 {dimension_numbers = #tpu.dot_dimension_numbers<[1], [0], [0], [1], [0, 0, 1, 1], [], []>} : vector<8x8xf32>, vector<8x128xf32>, vector<8x128xf32> -> vector<8x128xf32>
    %39 = arith.addf %38, %5 : vector<8x128xf32>
    %40 = math.tanh %39 : vector<8x128xf32>
    %cst_26 = arith.constant dense<0.000000e+00> : vector<8x128xf32>
    %41 = tpu.matmul %40, %1, %cst_26 {dimension_numbers = #tpu.dot_dimension_numbers<[1], [0], [0], [1], [0, 0, 1, 1], [], []>} : vector<8x128xf32>, vector<128x128xf32>, vector<8x128xf32> -> vector<8x128xf32>
    %42 = arith.addf %41, %8 : vector<8x128xf32>
    %43 = math.tanh %42 : vector<8x128xf32>
    %c4 = arith.constant 4 : index
    %c0_27 = arith.constant 0 : index
    %c0_28 = arith.constant 0 : index
    %44 = vector.load %arg1[%c4, %c0_27, %c0_28] : memref<10x8x8xf32, #tpu.memory_space<vmem>>, vector<1x8x8xf32>
    %45 = vector.shape_cast %44 : vector<1x8x8xf32> to vector<8x8xf32>
    %cst_29 = arith.constant dense<0.000000e+00> : vector<8x128xf32>
    %46 = tpu.matmul %45, %0, %cst_29 {dimension_numbers = #tpu.dot_dimension_numbers<[1], [0], [0], [1], [0, 0, 1, 1], [], []>} : vector<8x8xf32>, vector<8x128xf32>, vector<8x128xf32> -> vector<8x128xf32>
    %47 = arith.addf %46, %5 : vector<8x128xf32>
    %48 = math.tanh %47 : vector<8x128xf32>
    %cst_30 = arith.constant dense<0.000000e+00> : vector<8x128xf32>
    %49 = tpu.matmul %48, %1, %cst_30 {dimension_numbers = #tpu.dot_dimension_numbers<[1], [0], [0], [1], [0, 0, 1, 1], [], []>} : vector<8x128xf32>, vector<128x128xf32>, vector<8x128xf32> -> vector<8x128xf32>
    %50 = arith.addf %49, %8 : vector<8x128xf32>
    %51 = math.tanh %50 : vector<8x128xf32>
    %c5 = arith.constant 5 : index
    %c0_31 = arith.constant 0 : index
    %c0_32 = arith.constant 0 : index
    %52 = vector.load %arg1[%c5, %c0_31, %c0_32] : memref<10x8x8xf32, #tpu.memory_space<vmem>>, vector<1x8x8xf32>
    %53 = vector.shape_cast %52 : vector<1x8x8xf32> to vector<8x8xf32>
    %cst_33 = arith.constant dense<0.000000e+00> : vector<8x128xf32>
    %54 = tpu.matmul %53, %0, %cst_33 {dimension_numbers = #tpu.dot_dimension_numbers<[1], [0], [0], [1], [0, 0, 1, 1], [], []>} : vector<8x8xf32>, vector<8x128xf32>, vector<8x128xf32> -> vector<8x128xf32>
    %55 = arith.addf %54, %5 : vector<8x128xf32>
    %56 = math.tanh %55 : vector<8x128xf32>
    %cst_34 = arith.constant dense<0.000000e+00> : vector<8x128xf32>
    %57 = tpu.matmul %56, %1, %cst_34 {dimension_numbers = #tpu.dot_dimension_numbers<[1], [0], [0], [1], [0, 0, 1, 1], [], []>} : vector<8x128xf32>, vector<128x128xf32>, vector<8x128xf32> -> vector<8x128xf32>
    %58 = arith.addf %57, %8 : vector<8x128xf32>
    %59 = math.tanh %58 : vector<8x128xf32>
    %c6 = arith.constant 6 : index
    %c0_35 = arith.constant 0 : index
    %c0_36 = arith.constant 0 : index
    %60 = vector.load %arg1[%c6, %c0_35, %c0_36] : memref<10x8x8xf32, #tpu.memory_space<vmem>>, vector<1x8x8xf32>
    %61 = vector.shape_cast %60 : vector<1x8x8xf32> to vector<8x8xf32>
    %cst_37 = arith.constant dense<0.000000e+00> : vector<8x128xf32>
    %62 = tpu.matmul %61, %0, %cst_37 {dimension_numbers = #tpu.dot_dimension_numbers<[1], [0], [0], [1], [0, 0, 1, 1], [], []>} : vector<8x8xf32>, vector<8x128xf32>, vector<8x128xf32> -> vector<8x128xf32>
    %63 = arith.addf %62, %5 : vector<8x128xf32>
    %64 = math.tanh %63 : vector<8x128xf32>
    %cst_38 = arith.constant dense<0.000000e+00> : vector<8x128xf32>
    %65 = tpu.matmul %64, %1, %cst_38 {dimension_numbers = #tpu.dot_dimension_numbers<[1], [0], [0], [1], [0, 0, 1, 1], [], []>} : vector<8x128xf32>, vector<128x128xf32>, vector<8x128xf32> -> vector<8x128xf32>
    %66 = arith.addf %65, %8 : vector<8x128xf32>
    %67 = math.tanh %66 : vector<8x128xf32>
    %c7 = arith.constant 7 : index
    %c0_39 = arith.constant 0 : index
    %c0_40 = arith.constant 0 : index
    %68 = vector.load %arg1[%c7, %c0_39, %c0_40] : memref<10x8x8xf32, #tpu.memory_space<vmem>>, vector<1x8x8xf32>
    %69 = vector.shape_cast %68 : vector<1x8x8xf32> to vector<8x8xf32>
    %cst_41 = arith.constant dense<0.000000e+00> : vector<8x128xf32>
    %70 = tpu.matmul %69, %0, %cst_41 {dimension_numbers = #tpu.dot_dimension_numbers<[1], [0], [0], [1], [0, 0, 1, 1], [], []>} : vector<8x8xf32>, vector<8x128xf32>, vector<8x128xf32> -> vector<8x128xf32>
    %71 = arith.addf %70, %5 : vector<8x128xf32>
    %72 = math.tanh %71 : vector<8x128xf32>
    %cst_42 = arith.constant dense<0.000000e+00> : vector<8x128xf32>
    %73 = tpu.matmul %72, %1, %cst_42 {dimension_numbers = #tpu.dot_dimension_numbers<[1], [0], [0], [1], [0, 0, 1, 1], [], []>} : vector<8x128xf32>, vector<128x128xf32>, vector<8x128xf32> -> vector<8x128xf32>
    %74 = arith.addf %73, %8 : vector<8x128xf32>
    %75 = math.tanh %74 : vector<8x128xf32>
    %c8 = arith.constant 8 : index
    %c0_43 = arith.constant 0 : index
    %c0_44 = arith.constant 0 : index
    %76 = vector.load %arg1[%c8, %c0_43, %c0_44] : memref<10x8x8xf32, #tpu.memory_space<vmem>>, vector<1x8x8xf32>
    %77 = vector.shape_cast %76 : vector<1x8x8xf32> to vector<8x8xf32>
    %cst_45 = arith.constant dense<0.000000e+00> : vector<8x128xf32>
    %78 = tpu.matmul %77, %0, %cst_45 {dimension_numbers = #tpu.dot_dimension_numbers<[1], [0], [0], [1], [0, 0, 1, 1], [], []>} : vector<8x8xf32>, vector<8x128xf32>, vector<8x128xf32> -> vector<8x128xf32>
    %79 = arith.addf %78, %5 : vector<8x128xf32>
    %80 = math.tanh %79 : vector<8x128xf32>
    %cst_46 = arith.constant dense<0.000000e+00> : vector<8x128xf32>
    %81 = tpu.matmul %80, %1, %cst_46 {dimension_numbers = #tpu.dot_dimension_numbers<[1], [0], [0], [1], [0, 0, 1, 1], [], []>} : vector<8x128xf32>, vector<128x128xf32>, vector<8x128xf32> -> vector<8x128xf32>
    %82 = arith.addf %81, %8 : vector<8x128xf32>
    %83 = math.tanh %82 : vector<8x128xf32>
    %c9 = arith.constant 9 : index
    %c0_47 = arith.constant 0 : index
    %c0_48 = arith.constant 0 : index
    %84 = vector.load %arg1[%c9, %c0_47, %c0_48] : memref<10x8x8xf32, #tpu.memory_space<vmem>>, vector<1x8x8xf32>
    %85 = vector.shape_cast %84 : vector<1x8x8xf32> to vector<8x8xf32>
    %cst_49 = arith.constant dense<0.000000e+00> : vector<8x128xf32>
    %86 = tpu.matmul %85, %0, %cst_49 {dimension_numbers = #tpu.dot_dimension_numbers<[1], [0], [0], [1], [0, 0, 1, 1], [], []>} : vector<8x8xf32>, vector<8x128xf32>, vector<8x128xf32> -> vector<8x128xf32>
    %87 = arith.addf %86, %5 : vector<8x128xf32>
    %88 = math.tanh %87 : vector<8x128xf32>
    %cst_50 = arith.constant dense<0.000000e+00> : vector<8x128xf32>
    %89 = tpu.matmul %88, %1, %cst_50 {dimension_numbers = #tpu.dot_dimension_numbers<[1], [0], [0], [1], [0, 0, 1, 1], [], []>} : vector<8x128xf32>, vector<128x128xf32>, vector<8x128xf32> -> vector<8x128xf32>
    %90 = arith.addf %89, %8 : vector<8x128xf32>
    %91 = math.tanh %90 : vector<8x128xf32>
    %cst_51 = arith.constant dense<0.000000e+00> : vector<8x384xf32>
    %92 = tpu.matmul %91, %2, %cst_51 {dimension_numbers = #tpu.dot_dimension_numbers<[1], [0], [0], [1], [0, 0, 1, 1], [], []>} : vector<8x128xf32>, vector<128x384xf32>, vector<8x384xf32> -> vector<8x384xf32>
    %93 = arith.addf %92, %11 : vector<8x384xf32>
    %cst_52 = arith.constant dense<0.000000e+00> : vector<8x384xf32>
    %94 = tpu.matmul %19, %2, %cst_52 {dimension_numbers = #tpu.dot_dimension_numbers<[1], [0], [0], [1], [0, 0, 1, 1], [], []>} : vector<8x128xf32>, vector<128x384xf32>, vector<8x384xf32> -> vector<8x384xf32>
    %95 = arith.addf %94, %11 : vector<8x384xf32>
    %96 = arith.addf %19, %27 : vector<8x128xf32>
    %cst_53 = arith.constant dense<0.000000e+00> : vector<8x384xf32>
    %97 = tpu.matmul %96, %2, %cst_53 {dimension_numbers = #tpu.dot_dimension_numbers<[1], [0], [0], [1], [0, 0, 1, 1], [], []>} : vector<8x128xf32>, vector<128x384xf32>, vector<8x384xf32> -> vector<8x384xf32>
    %98 = arith.addf %97, %11 : vector<8x384xf32>
    %99 = arith.addf %27, %35 : vector<8x128xf32>
    %cst_54 = arith.constant dense<0.000000e+00> : vector<8x384xf32>
    %100 = tpu.matmul %99, %2, %cst_54 {dimension_numbers = #tpu.dot_dimension_numbers<[1], [0], [0], [1], [0, 0, 1, 1], [], []>} : vector<8x128xf32>, vector<128x384xf32>, vector<8x384xf32> -> vector<8x384xf32>
    %101 = arith.addf %100, %11 : vector<8x384xf32>
    %102 = arith.addf %35, %43 : vector<8x128xf32>
    %cst_55 = arith.constant dense<0.000000e+00> : vector<8x384xf32>
    %103 = tpu.matmul %102, %2, %cst_55 {dimension_numbers = #tpu.dot_dimension_numbers<[1], [0], [0], [1], [0, 0, 1, 1], [], []>} : vector<8x128xf32>, vector<128x384xf32>, vector<8x384xf32> -> vector<8x384xf32>
    %104 = arith.addf %103, %11 : vector<8x384xf32>
    %105 = arith.addf %43, %51 : vector<8x128xf32>
    %cst_56 = arith.constant dense<0.000000e+00> : vector<8x384xf32>
    %106 = tpu.matmul %105, %2, %cst_56 {dimension_numbers = #tpu.dot_dimension_numbers<[1], [0], [0], [1], [0, 0, 1, 1], [], []>} : vector<8x128xf32>, vector<128x384xf32>, vector<8x384xf32> -> vector<8x384xf32>
    %107 = arith.addf %106, %11 : vector<8x384xf32>
    %108 = arith.addf %51, %59 : vector<8x128xf32>
    %cst_57 = arith.constant dense<0.000000e+00> : vector<8x384xf32>
    %109 = tpu.matmul %108, %2, %cst_57 {dimension_numbers = #tpu.dot_dimension_numbers<[1], [0], [0], [1], [0, 0, 1, 1], [], []>} : vector<8x128xf32>, vector<128x384xf32>, vector<8x384xf32> -> vector<8x384xf32>
    %110 = arith.addf %109, %11 : vector<8x384xf32>
    %111 = arith.addf %59, %67 : vector<8x128xf32>
    %cst_58 = arith.constant dense<0.000000e+00> : vector<8x384xf32>
    %112 = tpu.matmul %111, %2, %cst_58 {dimension_numbers = #tpu.dot_dimension_numbers<[1], [0], [0], [1], [0, 0, 1, 1], [], []>} : vector<8x128xf32>, vector<128x384xf32>, vector<8x384xf32> -> vector<8x384xf32>
    %113 = arith.addf %112, %11 : vector<8x384xf32>
    %114 = arith.addf %67, %75 : vector<8x128xf32>
    %cst_59 = arith.constant dense<0.000000e+00> : vector<8x384xf32>
    %115 = tpu.matmul %114, %2, %cst_59 {dimension_numbers = #tpu.dot_dimension_numbers<[1], [0], [0], [1], [0, 0, 1, 1], [], []>} : vector<8x128xf32>, vector<128x384xf32>, vector<8x384xf32> -> vector<8x384xf32>
    %116 = arith.addf %115, %11 : vector<8x384xf32>
    %117 = arith.addf %75, %83 : vector<8x128xf32>
    %cst_60 = arith.constant dense<0.000000e+00> : vector<8x384xf32>
    %118 = tpu.matmul %117, %2, %cst_60 {dimension_numbers = #tpu.dot_dimension_numbers<[1], [0], [0], [1], [0, 0, 1, 1], [], []>} : vector<8x128xf32>, vector<128x384xf32>, vector<8x384xf32> -> vector<8x384xf32>
    %119 = arith.addf %118, %11 : vector<8x384xf32>
    %c0_61 = arith.constant 0 : index
    %c0_62 = arith.constant 0 : index
    %120 = vector.load %arg8[%c0_61, %c0_62] : memref<128x384xf32, #tpu.memory_space<vmem>>, vector<128x384xf32>
    %c0_63 = arith.constant 0 : index
    %c0_64 = arith.constant 0 : index
    %121 = vector.load %arg9[%c0_63, %c0_64] : memref<1x128xf32, #tpu.memory_space<vmem>>, vector<1x128xf32>
    %122 = vector.shape_cast %121 : vector<1x128xf32> to vector<1x128xf32>
    %123 = vector.broadcast %122 : vector<1x128xf32> to vector<8x128xf32>
    %cst_65 = arith.constant 0.000000e+00 : f32
    %124 = vector.broadcast %cst_65 : f32 to vector<8x128xf32>
    %cst_66 = arith.constant 0.000000e+00 : f32
    %125 = vector.broadcast %cst_66 : f32 to vector<8x16xf32>
    %cst_67 = arith.constant dense<0.000000e+00> : vector<8x384xf32>
    %126 = tpu.matmul %124, %120, %cst_67 {dimension_numbers = #tpu.dot_dimension_numbers<[1], [0], [0], [1], [0, 0, 1, 1], [], []>} : vector<8x128xf32>, vector<128x384xf32>, vector<8x384xf32> -> vector<8x384xf32>
    %127 = vector.extract_strided_slice %93 {offsets = [0, 0], sizes = [8, 256], strides = [1, 1]} : vector<8x384xf32> to vector<8x256xf32>
    %128 = vector.extract_strided_slice %126 {offsets = [0, 0], sizes = [8, 256], strides = [1, 1]} : vector<8x384xf32> to vector<8x256xf32>
    %129 = arith.addf %127, %128 : vector<8x256xf32>
    %130 = arith.negf %129 : vector<8x256xf32>
    %131 = math.exp %130 : vector<8x256xf32>
    %cst_68 = arith.constant 1.000000e+00 : f32
    %132 = vector.broadcast %cst_68 : f32 to vector<8x256xf32>
    %133 = arith.addf %132, %131 : vector<8x256xf32>
    %134 = arith.divf %132, %133 : vector<8x256xf32>
    %135 = vector.extract_strided_slice %134 {offsets = [0, 0], sizes = [8, 128], strides = [1, 1]} : vector<8x256xf32> to vector<8x128xf32>
    %136 = vector.extract_strided_slice %134 {offsets = [0, 128], sizes = [8, 128], strides = [1, 1]} : vector<8x256xf32> to vector<8x128xf32>
    %137 = vector.extract_strided_slice %93 {offsets = [0, 256], sizes = [8, 128], strides = [1, 1]} : vector<8x384xf32> to vector<8x128xf32>
    %138 = vector.extract_strided_slice %126 {offsets = [0, 256], sizes = [8, 128], strides = [1, 1]} : vector<8x384xf32> to vector<8x128xf32>
    %139 = arith.addf %138, %123 : vector<8x128xf32>
    %140 = arith.mulf %135, %139 : vector<8x128xf32>
    %141 = arith.addf %137, %140 : vector<8x128xf32>
    %142 = math.tanh %141 : vector<8x128xf32>
    %cst_69 = arith.constant 1.000000e+00 : f32
    %143 = vector.broadcast %cst_69 : f32 to vector<8x128xf32>
    %144 = arith.subf %143, %136 : vector<8x128xf32>
    %145 = arith.mulf %144, %142 : vector<8x128xf32>
    %146 = arith.mulf %136, %124 : vector<8x128xf32>
    %147 = arith.addf %145, %146 : vector<8x128xf32>
    %c0_70 = arith.constant 0 : index
    %c0_71 = arith.constant 0 : index
    %c0_72 = arith.constant 0 : index
    %148 = vector.load %arg10[%c0_70, %c0_71, %c0_72] : memref<10x128x16xf32, #tpu.memory_space<vmem>>, vector<1x128x16xf32>
    %149 = vector.shape_cast %148 : vector<1x128x16xf32> to vector<128x16xf32>
    %cst_73 = arith.constant dense<0.000000e+00> : vector<8x16xf32>
    %150 = tpu.matmul %147, %149, %cst_73 {dimension_numbers = #tpu.dot_dimension_numbers<[1], [0], [0], [1], [0, 0, 1, 1], [], []>} : vector<8x128xf32>, vector<128x16xf32>, vector<8x16xf32> -> vector<8x16xf32>
    %151 = arith.addf %125, %150 : vector<8x16xf32>
    %cst_74 = arith.constant dense<0.000000e+00> : vector<8x384xf32>
    %152 = tpu.matmul %147, %120, %cst_74 {dimension_numbers = #tpu.dot_dimension_numbers<[1], [0], [0], [1], [0, 0, 1, 1], [], []>} : vector<8x128xf32>, vector<128x384xf32>, vector<8x384xf32> -> vector<8x384xf32>
    %153 = vector.extract_strided_slice %95 {offsets = [0, 0], sizes = [8, 256], strides = [1, 1]} : vector<8x384xf32> to vector<8x256xf32>
    %154 = vector.extract_strided_slice %152 {offsets = [0, 0], sizes = [8, 256], strides = [1, 1]} : vector<8x384xf32> to vector<8x256xf32>
    %155 = arith.addf %153, %154 : vector<8x256xf32>
    %156 = arith.negf %155 : vector<8x256xf32>
    %157 = math.exp %156 : vector<8x256xf32>
    %cst_75 = arith.constant 1.000000e+00 : f32
    %158 = vector.broadcast %cst_75 : f32 to vector<8x256xf32>
    %159 = arith.addf %158, %157 : vector<8x256xf32>
    %160 = arith.divf %158, %159 : vector<8x256xf32>
    %161 = vector.extract_strided_slice %160 {offsets = [0, 0], sizes = [8, 128], strides = [1, 1]} : vector<8x256xf32> to vector<8x128xf32>
    %162 = vector.extract_strided_slice %160 {offsets = [0, 128], sizes = [8, 128], strides = [1, 1]} : vector<8x256xf32> to vector<8x128xf32>
    %163 = vector.extract_strided_slice %95 {offsets = [0, 256], sizes = [8, 128], strides = [1, 1]} : vector<8x384xf32> to vector<8x128xf32>
    %164 = vector.extract_strided_slice %152 {offsets = [0, 256], sizes = [8, 128], strides = [1, 1]} : vector<8x384xf32> to vector<8x128xf32>
    %165 = arith.addf %164, %123 : vector<8x128xf32>
    %166 = arith.mulf %161, %165 : vector<8x128xf32>
    %167 = arith.addf %163, %166 : vector<8x128xf32>
    %168 = math.tanh %167 : vector<8x128xf32>
    %cst_76 = arith.constant 1.000000e+00 : f32
    %169 = vector.broadcast %cst_76 : f32 to vector<8x128xf32>
    %170 = arith.subf %169, %162 : vector<8x128xf32>
    %171 = arith.mulf %170, %168 : vector<8x128xf32>
    %172 = arith.mulf %162, %147 : vector<8x128xf32>
    %173 = arith.addf %171, %172 : vector<8x128xf32>
    %c1_77 = arith.constant 1 : index
    %c0_78 = arith.constant 0 : index
    %c0_79 = arith.constant 0 : index
    %174 = vector.load %arg10[%c1_77, %c0_78, %c0_79] : memref<10x128x16xf32, #tpu.memory_space<vmem>>, vector<1x128x16xf32>
    %175 = vector.shape_cast %174 : vector<1x128x16xf32> to vector<128x16xf32>
    %cst_80 = arith.constant dense<0.000000e+00> : vector<8x16xf32>
    %176 = tpu.matmul %173, %175, %cst_80 {dimension_numbers = #tpu.dot_dimension_numbers<[1], [0], [0], [1], [0, 0, 1, 1], [], []>} : vector<8x128xf32>, vector<128x16xf32>, vector<8x16xf32> -> vector<8x16xf32>
    %177 = arith.addf %151, %176 : vector<8x16xf32>
    %cst_81 = arith.constant dense<0.000000e+00> : vector<8x384xf32>
    %178 = tpu.matmul %173, %120, %cst_81 {dimension_numbers = #tpu.dot_dimension_numbers<[1], [0], [0], [1], [0, 0, 1, 1], [], []>} : vector<8x128xf32>, vector<128x384xf32>, vector<8x384xf32> -> vector<8x384xf32>
    %179 = vector.extract_strided_slice %98 {offsets = [0, 0], sizes = [8, 256], strides = [1, 1]} : vector<8x384xf32> to vector<8x256xf32>
    %180 = vector.extract_strided_slice %178 {offsets = [0, 0], sizes = [8, 256], strides = [1, 1]} : vector<8x384xf32> to vector<8x256xf32>
    %181 = arith.addf %179, %180 : vector<8x256xf32>
    %182 = arith.negf %181 : vector<8x256xf32>
    %183 = math.exp %182 : vector<8x256xf32>
    %cst_82 = arith.constant 1.000000e+00 : f32
    %184 = vector.broadcast %cst_82 : f32 to vector<8x256xf32>
    %185 = arith.addf %184, %183 : vector<8x256xf32>
    %186 = arith.divf %184, %185 : vector<8x256xf32>
    %187 = vector.extract_strided_slice %186 {offsets = [0, 0], sizes = [8, 128], strides = [1, 1]} : vector<8x256xf32> to vector<8x128xf32>
    %188 = vector.extract_strided_slice %186 {offsets = [0, 128], sizes = [8, 128], strides = [1, 1]} : vector<8x256xf32> to vector<8x128xf32>
    %189 = vector.extract_strided_slice %98 {offsets = [0, 256], sizes = [8, 128], strides = [1, 1]} : vector<8x384xf32> to vector<8x128xf32>
    %190 = vector.extract_strided_slice %178 {offsets = [0, 256], sizes = [8, 128], strides = [1, 1]} : vector<8x384xf32> to vector<8x128xf32>
    %191 = arith.addf %190, %123 : vector<8x128xf32>
    %192 = arith.mulf %187, %191 : vector<8x128xf32>
    %193 = arith.addf %189, %192 : vector<8x128xf32>
    %194 = math.tanh %193 : vector<8x128xf32>
    %cst_83 = arith.constant 1.000000e+00 : f32
    %195 = vector.broadcast %cst_83 : f32 to vector<8x128xf32>
    %196 = arith.subf %195, %188 : vector<8x128xf32>
    %197 = arith.mulf %196, %194 : vector<8x128xf32>
    %198 = arith.mulf %188, %173 : vector<8x128xf32>
    %199 = arith.addf %197, %198 : vector<8x128xf32>
    %c2_84 = arith.constant 2 : index
    %c0_85 = arith.constant 0 : index
    %c0_86 = arith.constant 0 : index
    %200 = vector.load %arg10[%c2_84, %c0_85, %c0_86] : memref<10x128x16xf32, #tpu.memory_space<vmem>>, vector<1x128x16xf32>
    %201 = vector.shape_cast %200 : vector<1x128x16xf32> to vector<128x16xf32>
    %cst_87 = arith.constant dense<0.000000e+00> : vector<8x16xf32>
    %202 = tpu.matmul %199, %201, %cst_87 {dimension_numbers = #tpu.dot_dimension_numbers<[1], [0], [0], [1], [0, 0, 1, 1], [], []>} : vector<8x128xf32>, vector<128x16xf32>, vector<8x16xf32> -> vector<8x16xf32>
    %203 = arith.addf %177, %202 : vector<8x16xf32>
    %cst_88 = arith.constant dense<0.000000e+00> : vector<8x384xf32>
    %204 = tpu.matmul %199, %120, %cst_88 {dimension_numbers = #tpu.dot_dimension_numbers<[1], [0], [0], [1], [0, 0, 1, 1], [], []>} : vector<8x128xf32>, vector<128x384xf32>, vector<8x384xf32> -> vector<8x384xf32>
    %205 = vector.extract_strided_slice %101 {offsets = [0, 0], sizes = [8, 256], strides = [1, 1]} : vector<8x384xf32> to vector<8x256xf32>
    %206 = vector.extract_strided_slice %204 {offsets = [0, 0], sizes = [8, 256], strides = [1, 1]} : vector<8x384xf32> to vector<8x256xf32>
    %207 = arith.addf %205, %206 : vector<8x256xf32>
    %208 = arith.negf %207 : vector<8x256xf32>
    %209 = math.exp %208 : vector<8x256xf32>
    %cst_89 = arith.constant 1.000000e+00 : f32
    %210 = vector.broadcast %cst_89 : f32 to vector<8x256xf32>
    %211 = arith.addf %210, %209 : vector<8x256xf32>
    %212 = arith.divf %210, %211 : vector<8x256xf32>
    %213 = vector.extract_strided_slice %212 {offsets = [0, 0], sizes = [8, 128], strides = [1, 1]} : vector<8x256xf32> to vector<8x128xf32>
    %214 = vector.extract_strided_slice %212 {offsets = [0, 128], sizes = [8, 128], strides = [1, 1]} : vector<8x256xf32> to vector<8x128xf32>
    %215 = vector.extract_strided_slice %101 {offsets = [0, 256], sizes = [8, 128], strides = [1, 1]} : vector<8x384xf32> to vector<8x128xf32>
    %216 = vector.extract_strided_slice %204 {offsets = [0, 256], sizes = [8, 128], strides = [1, 1]} : vector<8x384xf32> to vector<8x128xf32>
    %217 = arith.addf %216, %123 : vector<8x128xf32>
    %218 = arith.mulf %213, %217 : vector<8x128xf32>
    %219 = arith.addf %215, %218 : vector<8x128xf32>
    %220 = math.tanh %219 : vector<8x128xf32>
    %cst_90 = arith.constant 1.000000e+00 : f32
    %221 = vector.broadcast %cst_90 : f32 to vector<8x128xf32>
    %222 = arith.subf %221, %214 : vector<8x128xf32>
    %223 = arith.mulf %222, %220 : vector<8x128xf32>
    %224 = arith.mulf %214, %199 : vector<8x128xf32>
    %225 = arith.addf %223, %224 : vector<8x128xf32>
    %c3_91 = arith.constant 3 : index
    %c0_92 = arith.constant 0 : index
    %c0_93 = arith.constant 0 : index
    %226 = vector.load %arg10[%c3_91, %c0_92, %c0_93] : memref<10x128x16xf32, #tpu.memory_space<vmem>>, vector<1x128x16xf32>
    %227 = vector.shape_cast %226 : vector<1x128x16xf32> to vector<128x16xf32>
    %cst_94 = arith.constant dense<0.000000e+00> : vector<8x16xf32>
    %228 = tpu.matmul %225, %227, %cst_94 {dimension_numbers = #tpu.dot_dimension_numbers<[1], [0], [0], [1], [0, 0, 1, 1], [], []>} : vector<8x128xf32>, vector<128x16xf32>, vector<8x16xf32> -> vector<8x16xf32>
    %229 = arith.addf %203, %228 : vector<8x16xf32>
    %cst_95 = arith.constant dense<0.000000e+00> : vector<8x384xf32>
    %230 = tpu.matmul %225, %120, %cst_95 {dimension_numbers = #tpu.dot_dimension_numbers<[1], [0], [0], [1], [0, 0, 1, 1], [], []>} : vector<8x128xf32>, vector<128x384xf32>, vector<8x384xf32> -> vector<8x384xf32>
    %231 = vector.extract_strided_slice %104 {offsets = [0, 0], sizes = [8, 256], strides = [1, 1]} : vector<8x384xf32> to vector<8x256xf32>
    %232 = vector.extract_strided_slice %230 {offsets = [0, 0], sizes = [8, 256], strides = [1, 1]} : vector<8x384xf32> to vector<8x256xf32>
    %233 = arith.addf %231, %232 : vector<8x256xf32>
    %234 = arith.negf %233 : vector<8x256xf32>
    %235 = math.exp %234 : vector<8x256xf32>
    %cst_96 = arith.constant 1.000000e+00 : f32
    %236 = vector.broadcast %cst_96 : f32 to vector<8x256xf32>
    %237 = arith.addf %236, %235 : vector<8x256xf32>
    %238 = arith.divf %236, %237 : vector<8x256xf32>
    %239 = vector.extract_strided_slice %238 {offsets = [0, 0], sizes = [8, 128], strides = [1, 1]} : vector<8x256xf32> to vector<8x128xf32>
    %240 = vector.extract_strided_slice %238 {offsets = [0, 128], sizes = [8, 128], strides = [1, 1]} : vector<8x256xf32> to vector<8x128xf32>
    %241 = vector.extract_strided_slice %104 {offsets = [0, 256], sizes = [8, 128], strides = [1, 1]} : vector<8x384xf32> to vector<8x128xf32>
    %242 = vector.extract_strided_slice %230 {offsets = [0, 256], sizes = [8, 128], strides = [1, 1]} : vector<8x384xf32> to vector<8x128xf32>
    %243 = arith.addf %242, %123 : vector<8x128xf32>
    %244 = arith.mulf %239, %243 : vector<8x128xf32>
    %245 = arith.addf %241, %244 : vector<8x128xf32>
    %246 = math.tanh %245 : vector<8x128xf32>
    %cst_97 = arith.constant 1.000000e+00 : f32
    %247 = vector.broadcast %cst_97 : f32 to vector<8x128xf32>
    %248 = arith.subf %247, %240 : vector<8x128xf32>
    %249 = arith.mulf %248, %246 : vector<8x128xf32>
    %250 = arith.mulf %240, %225 : vector<8x128xf32>
    %251 = arith.addf %249, %250 : vector<8x128xf32>
    %c4_98 = arith.constant 4 : index
    %c0_99 = arith.constant 0 : index
    %c0_100 = arith.constant 0 : index
    %252 = vector.load %arg10[%c4_98, %c0_99, %c0_100] : memref<10x128x16xf32, #tpu.memory_space<vmem>>, vector<1x128x16xf32>
    %253 = vector.shape_cast %252 : vector<1x128x16xf32> to vector<128x16xf32>
    %cst_101 = arith.constant dense<0.000000e+00> : vector<8x16xf32>
    %254 = tpu.matmul %251, %253, %cst_101 {dimension_numbers = #tpu.dot_dimension_numbers<[1], [0], [0], [1], [0, 0, 1, 1], [], []>} : vector<8x128xf32>, vector<128x16xf32>, vector<8x16xf32> -> vector<8x16xf32>
    %255 = arith.addf %229, %254 : vector<8x16xf32>
    %cst_102 = arith.constant dense<0.000000e+00> : vector<8x384xf32>
    %256 = tpu.matmul %251, %120, %cst_102 {dimension_numbers = #tpu.dot_dimension_numbers<[1], [0], [0], [1], [0, 0, 1, 1], [], []>} : vector<8x128xf32>, vector<128x384xf32>, vector<8x384xf32> -> vector<8x384xf32>
    %257 = vector.extract_strided_slice %107 {offsets = [0, 0], sizes = [8, 256], strides = [1, 1]} : vector<8x384xf32> to vector<8x256xf32>
    %258 = vector.extract_strided_slice %256 {offsets = [0, 0], sizes = [8, 256], strides = [1, 1]} : vector<8x384xf32> to vector<8x256xf32>
    %259 = arith.addf %257, %258 : vector<8x256xf32>
    %260 = arith.negf %259 : vector<8x256xf32>
    %261 = math.exp %260 : vector<8x256xf32>
    %cst_103 = arith.constant 1.000000e+00 : f32
    %262 = vector.broadcast %cst_103 : f32 to vector<8x256xf32>
    %263 = arith.addf %262, %261 : vector<8x256xf32>
    %264 = arith.divf %262, %263 : vector<8x256xf32>
    %265 = vector.extract_strided_slice %264 {offsets = [0, 0], sizes = [8, 128], strides = [1, 1]} : vector<8x256xf32> to vector<8x128xf32>
    %266 = vector.extract_strided_slice %264 {offsets = [0, 128], sizes = [8, 128], strides = [1, 1]} : vector<8x256xf32> to vector<8x128xf32>
    %267 = vector.extract_strided_slice %107 {offsets = [0, 256], sizes = [8, 128], strides = [1, 1]} : vector<8x384xf32> to vector<8x128xf32>
    %268 = vector.extract_strided_slice %256 {offsets = [0, 256], sizes = [8, 128], strides = [1, 1]} : vector<8x384xf32> to vector<8x128xf32>
    %269 = arith.addf %268, %123 : vector<8x128xf32>
    %270 = arith.mulf %265, %269 : vector<8x128xf32>
    %271 = arith.addf %267, %270 : vector<8x128xf32>
    %272 = math.tanh %271 : vector<8x128xf32>
    %cst_104 = arith.constant 1.000000e+00 : f32
    %273 = vector.broadcast %cst_104 : f32 to vector<8x128xf32>
    %274 = arith.subf %273, %266 : vector<8x128xf32>
    %275 = arith.mulf %274, %272 : vector<8x128xf32>
    %276 = arith.mulf %266, %251 : vector<8x128xf32>
    %277 = arith.addf %275, %276 : vector<8x128xf32>
    %c5_105 = arith.constant 5 : index
    %c0_106 = arith.constant 0 : index
    %c0_107 = arith.constant 0 : index
    %278 = vector.load %arg10[%c5_105, %c0_106, %c0_107] : memref<10x128x16xf32, #tpu.memory_space<vmem>>, vector<1x128x16xf32>
    %279 = vector.shape_cast %278 : vector<1x128x16xf32> to vector<128x16xf32>
    %cst_108 = arith.constant dense<0.000000e+00> : vector<8x16xf32>
    %280 = tpu.matmul %277, %279, %cst_108 {dimension_numbers = #tpu.dot_dimension_numbers<[1], [0], [0], [1], [0, 0, 1, 1], [], []>} : vector<8x128xf32>, vector<128x16xf32>, vector<8x16xf32> -> vector<8x16xf32>
    %281 = arith.addf %255, %280 : vector<8x16xf32>
    %cst_109 = arith.constant dense<0.000000e+00> : vector<8x384xf32>
    %282 = tpu.matmul %277, %120, %cst_109 {dimension_numbers = #tpu.dot_dimension_numbers<[1], [0], [0], [1], [0, 0, 1, 1], [], []>} : vector<8x128xf32>, vector<128x384xf32>, vector<8x384xf32> -> vector<8x384xf32>
    %283 = vector.extract_strided_slice %110 {offsets = [0, 0], sizes = [8, 256], strides = [1, 1]} : vector<8x384xf32> to vector<8x256xf32>
    %284 = vector.extract_strided_slice %282 {offsets = [0, 0], sizes = [8, 256], strides = [1, 1]} : vector<8x384xf32> to vector<8x256xf32>
    %285 = arith.addf %283, %284 : vector<8x256xf32>
    %286 = arith.negf %285 : vector<8x256xf32>
    %287 = math.exp %286 : vector<8x256xf32>
    %cst_110 = arith.constant 1.000000e+00 : f32
    %288 = vector.broadcast %cst_110 : f32 to vector<8x256xf32>
    %289 = arith.addf %288, %287 : vector<8x256xf32>
    %290 = arith.divf %288, %289 : vector<8x256xf32>
    %291 = vector.extract_strided_slice %290 {offsets = [0, 0], sizes = [8, 128], strides = [1, 1]} : vector<8x256xf32> to vector<8x128xf32>
    %292 = vector.extract_strided_slice %290 {offsets = [0, 128], sizes = [8, 128], strides = [1, 1]} : vector<8x256xf32> to vector<8x128xf32>
    %293 = vector.extract_strided_slice %110 {offsets = [0, 256], sizes = [8, 128], strides = [1, 1]} : vector<8x384xf32> to vector<8x128xf32>
    %294 = vector.extract_strided_slice %282 {offsets = [0, 256], sizes = [8, 128], strides = [1, 1]} : vector<8x384xf32> to vector<8x128xf32>
    %295 = arith.addf %294, %123 : vector<8x128xf32>
    %296 = arith.mulf %291, %295 : vector<8x128xf32>
    %297 = arith.addf %293, %296 : vector<8x128xf32>
    %298 = math.tanh %297 : vector<8x128xf32>
    %cst_111 = arith.constant 1.000000e+00 : f32
    %299 = vector.broadcast %cst_111 : f32 to vector<8x128xf32>
    %300 = arith.subf %299, %292 : vector<8x128xf32>
    %301 = arith.mulf %300, %298 : vector<8x128xf32>
    %302 = arith.mulf %292, %277 : vector<8x128xf32>
    %303 = arith.addf %301, %302 : vector<8x128xf32>
    %c6_112 = arith.constant 6 : index
    %c0_113 = arith.constant 0 : index
    %c0_114 = arith.constant 0 : index
    %304 = vector.load %arg10[%c6_112, %c0_113, %c0_114] : memref<10x128x16xf32, #tpu.memory_space<vmem>>, vector<1x128x16xf32>
    %305 = vector.shape_cast %304 : vector<1x128x16xf32> to vector<128x16xf32>
    %cst_115 = arith.constant dense<0.000000e+00> : vector<8x16xf32>
    %306 = tpu.matmul %303, %305, %cst_115 {dimension_numbers = #tpu.dot_dimension_numbers<[1], [0], [0], [1], [0, 0, 1, 1], [], []>} : vector<8x128xf32>, vector<128x16xf32>, vector<8x16xf32> -> vector<8x16xf32>
    %307 = arith.addf %281, %306 : vector<8x16xf32>
    %cst_116 = arith.constant dense<0.000000e+00> : vector<8x384xf32>
    %308 = tpu.matmul %303, %120, %cst_116 {dimension_numbers = #tpu.dot_dimension_numbers<[1], [0], [0], [1], [0, 0, 1, 1], [], []>} : vector<8x128xf32>, vector<128x384xf32>, vector<8x384xf32> -> vector<8x384xf32>
    %309 = vector.extract_strided_slice %113 {offsets = [0, 0], sizes = [8, 256], strides = [1, 1]} : vector<8x384xf32> to vector<8x256xf32>
    %310 = vector.extract_strided_slice %308 {offsets = [0, 0], sizes = [8, 256], strides = [1, 1]} : vector<8x384xf32> to vector<8x256xf32>
    %311 = arith.addf %309, %310 : vector<8x256xf32>
    %312 = arith.negf %311 : vector<8x256xf32>
    %313 = math.exp %312 : vector<8x256xf32>
    %cst_117 = arith.constant 1.000000e+00 : f32
    %314 = vector.broadcast %cst_117 : f32 to vector<8x256xf32>
    %315 = arith.addf %314, %313 : vector<8x256xf32>
    %316 = arith.divf %314, %315 : vector<8x256xf32>
    %317 = vector.extract_strided_slice %316 {offsets = [0, 0], sizes = [8, 128], strides = [1, 1]} : vector<8x256xf32> to vector<8x128xf32>
    %318 = vector.extract_strided_slice %316 {offsets = [0, 128], sizes = [8, 128], strides = [1, 1]} : vector<8x256xf32> to vector<8x128xf32>
    %319 = vector.extract_strided_slice %113 {offsets = [0, 256], sizes = [8, 128], strides = [1, 1]} : vector<8x384xf32> to vector<8x128xf32>
    %320 = vector.extract_strided_slice %308 {offsets = [0, 256], sizes = [8, 128], strides = [1, 1]} : vector<8x384xf32> to vector<8x128xf32>
    %321 = arith.addf %320, %123 : vector<8x128xf32>
    %322 = arith.mulf %317, %321 : vector<8x128xf32>
    %323 = arith.addf %319, %322 : vector<8x128xf32>
    %324 = math.tanh %323 : vector<8x128xf32>
    %cst_118 = arith.constant 1.000000e+00 : f32
    %325 = vector.broadcast %cst_118 : f32 to vector<8x128xf32>
    %326 = arith.subf %325, %318 : vector<8x128xf32>
    %327 = arith.mulf %326, %324 : vector<8x128xf32>
    %328 = arith.mulf %318, %303 : vector<8x128xf32>
    %329 = arith.addf %327, %328 : vector<8x128xf32>
    %c7_119 = arith.constant 7 : index
    %c0_120 = arith.constant 0 : index
    %c0_121 = arith.constant 0 : index
    %330 = vector.load %arg10[%c7_119, %c0_120, %c0_121] : memref<10x128x16xf32, #tpu.memory_space<vmem>>, vector<1x128x16xf32>
    %331 = vector.shape_cast %330 : vector<1x128x16xf32> to vector<128x16xf32>
    %cst_122 = arith.constant dense<0.000000e+00> : vector<8x16xf32>
    %332 = tpu.matmul %329, %331, %cst_122 {dimension_numbers = #tpu.dot_dimension_numbers<[1], [0], [0], [1], [0, 0, 1, 1], [], []>} : vector<8x128xf32>, vector<128x16xf32>, vector<8x16xf32> -> vector<8x16xf32>
    %333 = arith.addf %307, %332 : vector<8x16xf32>
    %cst_123 = arith.constant dense<0.000000e+00> : vector<8x384xf32>
    %334 = tpu.matmul %329, %120, %cst_123 {dimension_numbers = #tpu.dot_dimension_numbers<[1], [0], [0], [1], [0, 0, 1, 1], [], []>} : vector<8x128xf32>, vector<128x384xf32>, vector<8x384xf32> -> vector<8x384xf32>
    %335 = vector.extract_strided_slice %116 {offsets = [0, 0], sizes = [8, 256], strides = [1, 1]} : vector<8x384xf32> to vector<8x256xf32>
    %336 = vector.extract_strided_slice %334 {offsets = [0, 0], sizes = [8, 256], strides = [1, 1]} : vector<8x384xf32> to vector<8x256xf32>
    %337 = arith.addf %335, %336 : vector<8x256xf32>
    %338 = arith.negf %337 : vector<8x256xf32>
    %339 = math.exp %338 : vector<8x256xf32>
    %cst_124 = arith.constant 1.000000e+00 : f32
    %340 = vector.broadcast %cst_124 : f32 to vector<8x256xf32>
    %341 = arith.addf %340, %339 : vector<8x256xf32>
    %342 = arith.divf %340, %341 : vector<8x256xf32>
    %343 = vector.extract_strided_slice %342 {offsets = [0, 0], sizes = [8, 128], strides = [1, 1]} : vector<8x256xf32> to vector<8x128xf32>
    %344 = vector.extract_strided_slice %342 {offsets = [0, 128], sizes = [8, 128], strides = [1, 1]} : vector<8x256xf32> to vector<8x128xf32>
    %345 = vector.extract_strided_slice %116 {offsets = [0, 256], sizes = [8, 128], strides = [1, 1]} : vector<8x384xf32> to vector<8x128xf32>
    %346 = vector.extract_strided_slice %334 {offsets = [0, 256], sizes = [8, 128], strides = [1, 1]} : vector<8x384xf32> to vector<8x128xf32>
    %347 = arith.addf %346, %123 : vector<8x128xf32>
    %348 = arith.mulf %343, %347 : vector<8x128xf32>
    %349 = arith.addf %345, %348 : vector<8x128xf32>
    %350 = math.tanh %349 : vector<8x128xf32>
    %cst_125 = arith.constant 1.000000e+00 : f32
    %351 = vector.broadcast %cst_125 : f32 to vector<8x128xf32>
    %352 = arith.subf %351, %344 : vector<8x128xf32>
    %353 = arith.mulf %352, %350 : vector<8x128xf32>
    %354 = arith.mulf %344, %329 : vector<8x128xf32>
    %355 = arith.addf %353, %354 : vector<8x128xf32>
    %c8_126 = arith.constant 8 : index
    %c0_127 = arith.constant 0 : index
    %c0_128 = arith.constant 0 : index
    %356 = vector.load %arg10[%c8_126, %c0_127, %c0_128] : memref<10x128x16xf32, #tpu.memory_space<vmem>>, vector<1x128x16xf32>
    %357 = vector.shape_cast %356 : vector<1x128x16xf32> to vector<128x16xf32>
    %cst_129 = arith.constant dense<0.000000e+00> : vector<8x16xf32>
    %358 = tpu.matmul %355, %357, %cst_129 {dimension_numbers = #tpu.dot_dimension_numbers<[1], [0], [0], [1], [0, 0, 1, 1], [], []>} : vector<8x128xf32>, vector<128x16xf32>, vector<8x16xf32> -> vector<8x16xf32>
    %359 = arith.addf %333, %358 : vector<8x16xf32>
    %cst_130 = arith.constant dense<0.000000e+00> : vector<8x384xf32>
    %360 = tpu.matmul %355, %120, %cst_130 {dimension_numbers = #tpu.dot_dimension_numbers<[1], [0], [0], [1], [0, 0, 1, 1], [], []>} : vector<8x128xf32>, vector<128x384xf32>, vector<8x384xf32> -> vector<8x384xf32>
    %361 = vector.extract_strided_slice %119 {offsets = [0, 0], sizes = [8, 256], strides = [1, 1]} : vector<8x384xf32> to vector<8x256xf32>
    %362 = vector.extract_strided_slice %360 {offsets = [0, 0], sizes = [8, 256], strides = [1, 1]} : vector<8x384xf32> to vector<8x256xf32>
    %363 = arith.addf %361, %362 : vector<8x256xf32>
    %364 = arith.negf %363 : vector<8x256xf32>
    %365 = math.exp %364 : vector<8x256xf32>
    %cst_131 = arith.constant 1.000000e+00 : f32
    %366 = vector.broadcast %cst_131 : f32 to vector<8x256xf32>
    %367 = arith.addf %366, %365 : vector<8x256xf32>
    %368 = arith.divf %366, %367 : vector<8x256xf32>
    %369 = vector.extract_strided_slice %368 {offsets = [0, 0], sizes = [8, 128], strides = [1, 1]} : vector<8x256xf32> to vector<8x128xf32>
    %370 = vector.extract_strided_slice %368 {offsets = [0, 128], sizes = [8, 128], strides = [1, 1]} : vector<8x256xf32> to vector<8x128xf32>
    %371 = vector.extract_strided_slice %119 {offsets = [0, 256], sizes = [8, 128], strides = [1, 1]} : vector<8x384xf32> to vector<8x128xf32>
    %372 = vector.extract_strided_slice %360 {offsets = [0, 256], sizes = [8, 128], strides = [1, 1]} : vector<8x384xf32> to vector<8x128xf32>
    %373 = arith.addf %372, %123 : vector<8x128xf32>
    %374 = arith.mulf %369, %373 : vector<8x128xf32>
    %375 = arith.addf %371, %374 : vector<8x128xf32>
    %376 = math.tanh %375 : vector<8x128xf32>
    %cst_132 = arith.constant 1.000000e+00 : f32
    %377 = vector.broadcast %cst_132 : f32 to vector<8x128xf32>
    %378 = arith.subf %377, %370 : vector<8x128xf32>
    %379 = arith.mulf %378, %376 : vector<8x128xf32>
    %380 = arith.mulf %370, %355 : vector<8x128xf32>
    %381 = arith.addf %379, %380 : vector<8x128xf32>
    %c9_133 = arith.constant 9 : index
    %c0_134 = arith.constant 0 : index
    %c0_135 = arith.constant 0 : index
    %382 = vector.load %arg10[%c9_133, %c0_134, %c0_135] : memref<10x128x16xf32, #tpu.memory_space<vmem>>, vector<1x128x16xf32>
    %383 = vector.shape_cast %382 : vector<1x128x16xf32> to vector<128x16xf32>
    %cst_136 = arith.constant dense<0.000000e+00> : vector<8x16xf32>
    %384 = tpu.matmul %381, %383, %cst_136 {dimension_numbers = #tpu.dot_dimension_numbers<[1], [0], [0], [1], [0, 0, 1, 1], [], []>} : vector<8x128xf32>, vector<128x16xf32>, vector<8x16xf32> -> vector<8x16xf32>
    %385 = arith.addf %359, %384 : vector<8x16xf32>
    %c0_137 = arith.constant 0 : index
    %c0_138 = arith.constant 0 : index
    %386 = vector.load %arg11[%c0_137, %c0_138] : memref<1x16xf32, #tpu.memory_space<vmem>>, vector<1x16xf32>
    %387 = vector.broadcast %386 : vector<1x16xf32> to vector<8x16xf32>
    %388 = arith.addf %385, %387 : vector<8x16xf32>
    %c0_139 = arith.constant 0 : index
    %c0_140 = arith.constant 0 : index
    %389 = vector.load %arg12[%c0_139, %c0_140] : memref<8x16xf32, #tpu.memory_space<vmem>>, vector<8x16xf32>
    tpu.vector_store %arg12[%c0_139, %c0_140], %388 {strides = array<i32>} : memref<8x16xf32, #tpu.memory_space<vmem>>, vector<8x16xf32>,
    return
  }
  func.func @transform_0(%arg0: i32) -> (i32, i32, i32) {
    %c0_i32 = arith.constant 0 : i32
    %c0_i32_0 = arith.constant 0 : i32
    %c0_i32_1 = arith.constant 0 : i32
    return %c0_i32, %arg0, %c0_i32_0 : i32, i32, i32
  }
  func.func @transform_1(%arg0: i32) -> (i32, i32) {
    %c0_i32 = arith.constant 0 : i32
    %c0_i32_0 = arith.constant 0 : i32
    %c0_i32_1 = arith.constant 0 : i32
    return %c0_i32, %c0_i32_0 : i32, i32
  }
  func.func @transform_2(%arg0: i32) -> (i32, i32) {
    %c0_i32 = arith.constant 0 : i32
    %c0_i32_0 = arith.constant 0 : i32
    %c0_i32_1 = arith.constant 0 : i32
    return %c0_i32, %c0_i32_0 : i32, i32
  }
  func.func @transform_3(%arg0: i32) -> (i32, i32) {
    %c0_i32 = arith.constant 0 : i32
    %c0_i32_0 = arith.constant 0 : i32
    %c0_i32_1 = arith.constant 0 : i32
    return %c0_i32, %c0_i32_0 : i32, i32
  }
  func.func @transform_4(%arg0: i32) -> (i32, i32) {
    %c0_i32 = arith.constant 0 : i32
    %c0_i32_0 = arith.constant 0 : i32
    %c0_i32_1 = arith.constant 0 : i32
    return %c0_i32, %c0_i32_0 : i32, i32
  }
  func.func @transform_5(%arg0: i32) -> (i32, i32) {
    %c0_i32 = arith.constant 0 : i32
    %c0_i32_0 = arith.constant 0 : i32
    %c0_i32_1 = arith.constant 0 : i32
    return %c0_i32, %c0_i32_0 : i32, i32
  }
  func.func @transform_6(%arg0: i32) -> (i32, i32) {
    %c0_i32 = arith.constant 0 : i32
    %c0_i32_0 = arith.constant 0 : i32
    %c0_i32_1 = arith.constant 0 : i32
    return %c0_i32, %c0_i32_0 : i32, i32
  }
  func.func @transform_7(%arg0: i32) -> (i32, i32) {
    %c0_i32 = arith.constant 0 : i32
    %c0_i32_0 = arith.constant 0 : i32
    %c0_i32_1 = arith.constant 0 : i32
    return %c0_i32, %c0_i32_0 : i32, i32
  }
  func.func @transform_8(%arg0: i32) -> (i32, i32) {
    %c0_i32 = arith.constant 0 : i32
    %c0_i32_0 = arith.constant 0 : i32
    %c0_i32_1 = arith.constant 0 : i32
    return %c0_i32, %c0_i32_0 : i32, i32
  }
  func.func @transform_9(%arg0: i32) -> (i32, i32, i32) {
    %c0_i32 = arith.constant 0 : i32
    %c0_i32_0 = arith.constant 0 : i32
    %c0_i32_1 = arith.constant 0 : i32
    %c0_i32_2 = arith.constant 0 : i32
    return %c0_i32, %c0_i32_0, %c0_i32_1 : i32, i32, i32
  }
  func.func @transform_10(%arg0: i32) -> (i32, i32) {
    %c0_i32 = arith.constant 0 : i32
    %c0_i32_0 = arith.constant 0 : i32
    %c0_i32_1 = arith.constant 0 : i32
    return %c0_i32, %c0_i32_0 : i32, i32
  }
  func.func @transform_11(%arg0: i32) -> (i32, i32) {
    %c0_i32 = arith.constant 0 : i32
    %c0_i32_0 = arith.constant 0 : i32
    return %arg0, %c0_i32 : i32, i32
  }
}

</mosaic_0001>

<llo_original>
// kernel: tpu_custom_call.1
$region0: #{tpu_custom_call.1}
  #allocation0 [shape = 'u32[]', space=smem, size = 0x4, offset = 0x4, fixed_abs, tag = 'smem constant byte address 0x4 - core index']
  #allocation1 [shape = 'u32[72,128]{1,0:T(1,128)}', space=vmem, size = 0x9000, scoped, tag = 'internal scratch']
  %s0 = inlined_call_operand.vmem [shape: f32[10,8,8], index: 0, kind: input, shape index: {}]
  %s1 = inlined_call_operand.vmem [shape: f32[8,128], index: 1, kind: input, shape index: {}]
  %s2 = inlined_call_operand.vmem [shape: f32[1,128], index: 2, kind: input, shape index: {}]
  %s3 = inlined_call_operand.vmem [shape: f32[128,128], index: 3, kind: input, shape index: {}]
  %s4 = inlined_call_operand.vmem [shape: f32[1,128], index: 4, kind: input, shape index: {}]
  %s5 = inlined_call_operand.vmem [shape: f32[128,384], index: 5, kind: input, shape index: {}]
  %s6 = inlined_call_operand.vmem [shape: f32[1,384], index: 6, kind: input, shape index: {}]
  %s7 = inlined_call_operand.vmem [shape: f32[128,384], index: 7, kind: input, shape index: {}]
  %s8 = inlined_call_operand.vmem [shape: f32[1,128], index: 8, kind: input, shape index: {}]
  %s9 = inlined_call_operand.vmem [shape: f32[10,128,16], index: 9, kind: input, shape index: {}]
  %s10 = inlined_call_operand.vmem [shape: f32[1,16], index: 10, kind: input, shape index: {}]
  %s11 = inlined_call_operand.hbm [shape: f32[8,16], index: 11, kind: output, shape index: {}]
  %s12 = sld [smem:[#allocation0]]
  $region54: #{tpu_custom_call.1} parent=0
    _
  %s14 = ssub.s32 1, %s12
  %s15 = scalar_select 0, %s14, %s12
  $region1: #{tpu_custom_call.1} parent=0
    #allocation2 [shape = 'u8[4096]{0}', space=vmem, size = 0x1000, scoped, tag = 'output window, operand 0, single buffered']
    #allocation3 [shape = 's32[1]{0}', space=sflag, size = 0x4, scoped, tag = 'scoped memory for tpu_custom_call.1']
    %16 = vsyncpa [#allocation3], 0
    // Predicated region
    $region2: #{tpu_custom_call.1} parent=1 // pred_check
      _
    $region3: #{tpu_custom_call.1} parent=1 // pred_check_branch
      %18 = sbr.rel (0) target = $region5
    $region4: #{tpu_custom_call.1} parent=1 // pred_region
      _
    $region5: #{tpu_custom_call.1} parent=1 // pred_fallthru
      _
    // Predicated region
    $region6: #{tpu_custom_call.1} parent=1 // pred_check
      _
    $region7: #{tpu_custom_call.1} parent=1 // pred_check_branch
      %20 = sbr.rel (0) target = $region9
    $region8: #{tpu_custom_call.1} parent=1 // pred_region
      _
    $region9: #{tpu_custom_call.1} parent=1 // pred_fallthru
      _
    // Predicated region
    $region10: #{tpu_custom_call.1} parent=1 // pred_check
      _
    $region11: #{tpu_custom_call.1} parent=1 // pred_check_branch
      %22 = sbr.rel (0) target = $region13
    $region12: #{tpu_custom_call.1} parent=1 // pred_region
      _
    $region13: #{tpu_custom_call.1} parent=1 // pred_fallthru
      _
    // Predicated region
    $region14: #{tpu_custom_call.1} parent=1 // pred_check
      _
    $region15: #{tpu_custom_call.1} parent=1 // pred_check_branch
      %24 = sbr.rel (0) target = $region17
    $region16: #{tpu_custom_call.1} parent=1 // pred_region
      _
    $region17: #{tpu_custom_call.1} parent=1 // pred_fallthru
      _
    // Predicated region
    $region18: #{tpu_custom_call.1} parent=1 // pred_check
      _
    $region19: #{tpu_custom_call.1} parent=1 // pred_check_branch
      %26 = sbr.rel (0) target = $region21
    $region20: #{tpu_custom_call.1} parent=1 // pred_region
      _
    $region21: #{tpu_custom_call.1} parent=1 // pred_fallthru
      _
    // Predicated region
    $region22: #{tpu_custom_call.1} parent=1 // pred_check
      _
    $region23: #{tpu_custom_call.1} parent=1 // pred_check_branch
      %28 = sbr.rel (0) target = $region25
    $region24: #{tpu_custom_call.1} parent=1 // pred_region
      _
    $region25: #{tpu_custom_call.1} parent=1 // pred_fallthru
      _
    // Predicated region
    $region26: #{tpu_custom_call.1} parent=1 // pred_check
      _
    $region27: #{tpu_custom_call.1} parent=1 // pred_check_branch
      %30 = sbr.rel (0) target = $region29
    $region28: #{tpu_custom_call.1} parent=1 // pred_region
      _
    $region29: #{tpu_custom_call.1} parent=1 // pred_fallthru
      _
    // Predicated region
    $region30: #{tpu_custom_call.1} parent=1 // pred_check
      _
    $region31: #{tpu_custom_call.1} parent=1 // pred_check_branch
      %32 = sbr.rel (0) target = $region33
    $region32: #{tpu_custom_call.1} parent=1 // pred_region
      _
    $region33: #{tpu_custom_call.1} parent=1 // pred_fallthru
      _
    // Predicated region
    $region34: #{tpu_custom_call.1} parent=1 // pred_check
      _
    $region35: #{tpu_custom_call.1} parent=1 // pred_check_branch
      %34 = sbr.rel (0) target = $region37
    $region36: #{tpu_custom_call.1} parent=1 // pred_region
      _
    $region37: #{tpu_custom_call.1} parent=1 // pred_fallthru
      _
    // Predicated region
    $region38: #{tpu_custom_call.1} parent=1 // pred_check
      _
    $region39: #{tpu_custom_call.1} parent=1 // pred_check_branch
      %36 = sbr.rel (0) target = $region41
    $region40: #{tpu_custom_call.1} parent=1 // pred_region
      _
    $region41: #{tpu_custom_call.1} parent=1 // pred_fallthru
      _
    // Predicated region
    $region42: #{tpu_custom_call.1} parent=1 // pred_check
      _
    $region43: #{tpu_custom_call.1} parent=1 // pred_check_branch
      %38 = sbr.rel (0) target = $region45
    $region44: #{tpu_custom_call.1} parent=1 // pred_region
      _
    $region45: #{tpu_custom_call.1} parent=1 // pred_fallthru
      _
    %v39 = vld [vmem:[%s1] sm:$0xff]
    %v40 = vld [vmem:[%s3] sm:$0xff]
    %v41 = vld [vmem:[%s3 + $0x8] sm:$0xff]
    %v42 = vld [vmem:[%s3 + $0x10] sm:$0xff]
    %v43 = vld [vmem:[%s3 + $0x18] sm:$0xff]
    %v44 = vld [vmem:[%s3 + $0x20] sm:$0xff]
    %v45 = vld [vmem:[%s3 + $0x28] sm:$0xff]
    %v46 = vld [vmem:[%s3 + $0x30] sm:$0xff]
    %v47 = vld [vmem:[%s3 + $0x38] sm:$0xff]
    %v48 = vld [vmem:[%s3 + $0x40] sm:$0xff]
    %v49 = vld [vmem:[%s3 + $0x48] sm:$0xff]
    %v50 = vld [vmem:[%s3 + $0x50] sm:$0xff]
    %v51 = vld [vmem:[%s3 + $0x58] sm:$0xff]
    %v52 = vld [vmem:[%s3 + $0x60] sm:$0xff]
    %v53 = vld [vmem:[%s3 + $0x68] sm:$0xff]
    %v54 = vld [vmem:[%s3 + $0x70] sm:$0xff]
    %v55 = vld [vmem:[%s3 + $0x78] sm:$0xff]
    %v56 = vld [vmem:[%s5] sm:$0xff]
    %v57 = vld [vmem:[%s5 + $0x8] sm:$0xff]
    %v58 = vld [vmem:[%s5 + $0x10] sm:$0xff]
    %v59 = vld [vmem:[%s5 + $0x18] sm:$0xff]
    %v60 = vld [vmem:[%s5 + $0x20] sm:$0xff]
    %v61 = vld [vmem:[%s5 + $0x28] sm:$0xff]
    %v62 = vld [vmem:[%s5 + $0x30] sm:$0xff]
    %v63 = vld [vmem:[%s5 + $0x38] sm:$0xff]
    %v64 = vld [vmem:[%s5 + $0x40] sm:$0xff]
    %v65 = vld [vmem:[%s5 + $0x48] sm:$0xff]
    %v66 = vld [vmem:[%s5 + $0x50] sm:$0xff]
    %v67 = vld [vmem:[%s5 + $0x58] sm:$0xff]
    %v68 = vld [vmem:[%s5 + $0x60] sm:$0xff]
    %v69 = vld [vmem:[%s5 + $0x68] sm:$0xff]
    %v70 = vld [vmem:[%s5 + $0x70] sm:$0xff]
    %v71 = vld [vmem:[%s5 + $0x78] sm:$0xff]
    %v72 = vld [vmem:[%s5 + $0x80] sm:$0xff]
    %v73 = vld [vmem:[%s5 + $0x88] sm:$0xff]
    %v74 = vld [vmem:[%s5 + $0x90] sm:$0xff]
    %v75 = vld [vmem:[%s5 + $0x98] sm:$0xff]
    %v76 = vld [vmem:[%s5 + $0xa0] sm:$0xff]
    %v77 = vld [vmem:[%s5 + $0xa8] sm:$0xff]
    %v78 = vld [vmem:[%s5 + $0xb0] sm:$0xff]
    %v79 = vld [vmem:[%s5 + $0xb8] sm:$0xff]
    %v80 = vld [vmem:[%s5 + $0xc0] sm:$0xff]
    %v81 = vld [vmem:[%s5 + $0xc8] sm:$0xff]
    %v82 = vld [vmem:[%s5 + $0xd0] sm:$0xff]
    %v83 = vld [vmem:[%s5 + $0xd8] sm:$0xff]
    %v84 = vld [vmem:[%s5 + $0xe0] sm:$0xff]
    %v85 = vld [vmem:[%s5 + $0xe8] sm:$0xff]
    %v86 = vld [vmem:[%s5 + $0xf0] sm:$0xff]
    %v87 = vld [vmem:[%s5 + $0xf8] sm:$0xff]
    %v88 = vld [vmem:[%s5 + $0x100] sm:$0xff]
    %v89 = vld [vmem:[%s5 + $0x108] sm:$0xff]
    %v90 = vld [vmem:[%s5 + $0x110] sm:$0xff]
    %v91 = vld [vmem:[%s5 + $0x118] sm:$0xff]
    %v92 = vld [vmem:[%s5 + $0x120] sm:$0xff]
    %v93 = vld [vmem:[%s5 + $0x128] sm:$0xff]
    %v94 = vld [vmem:[%s5 + $0x130] sm:$0xff]
    %v95 = vld [vmem:[%s5 + $0x138] sm:$0xff]
    %v96 = vld [vmem:[%s5 + $0x140] sm:$0xff]
    %v97 = vld [vmem:[%s5 + $0x148] sm:$0xff]
    %v98 = vld [vmem:[%s5 + $0x150] sm:$0xff]
    %v99 = vld [vmem:[%s5 + $0x158] sm:$0xff]
    %v100 = vld [vmem:[%s5 + $0x160] sm:$0xff]
    %v101 = vld [vmem:[%s5 + $0x168] sm:$0xff]
    %v102 = vld [vmem:[%s5 + $0x170] sm:$0xff]
    %v103 = vld [vmem:[%s5 + $0x178] sm:$0xff]
    %v104 = vld [vmem:[%s2] sm:$0x1]
    %v106 = vperm.slane %v104, 0
    %v108 = vld [vmem:[%s4] sm:$0x1]
    %v110 = vperm.slane %v108, 0
    %v112 = vld [vmem:[%s6] sm:$0x7]
    %v114 = vperm.slane %v112, 0
    %v115 = vperm.slane %v112, 1
    %v116 = vperm.slane %v112, 2
    %v120 = vld [vmem:[%s0] sm:$0xff]
    %vm121 = vcmask 64512
    %v123 = vsel %vm121, %v120, 0
    %125 = vmatpush.msra.mxu0 0.0
    %126 = vmatpush.msra.mxu0 0.0
    %127 = vmatpush.msra.mxu0 0.0
    %128 = vmatpush.msra.mxu0 0.0
    %129 = vmatpush.msra.mxu0 0.0
    %130 = vmatpush.msra.mxu0 0.0
    %131 = vmatpush.msra.mxu0 0.0
    %132 = vmatpush.msra.mxu0 0.0
    %133 = vmatpush.msra.mxu0 0.0
    %134 = vmatpush.msra.mxu0 0.0
    %135 = vmatpush.msra.mxu0 0.0
    %136 = vmatpush.msra.mxu0 0.0
    %137 = vmatpush.msra.mxu0 0.0
    %138 = vmatpush.msra.mxu0 0.0
    %139 = vmatpush.msra.mxu0 0.0
    %140 = vmatpush.msra.mxu0 %v39
    %141 = vmatmul.f32.gmra.mxu0 %v123
    %v142 = vpop.f32.mrf.mxu0
    %v143 = vadd.f32 %v106, %v142
    %144 = vdwg.mxu0
    %v145 = vtanh.pop %v143
    %146 = vmatpush.msra.mxu0 %v55
    %147 = vmatpush.msra.mxu0 %v54
    %148 = vmatpush.msra.mxu0 %v53
    %149 = vmatpush.msra.mxu0 %v52
    %150 = vmatpush.msra.mxu0 %v51
    %151 = vmatpush.msra.mxu0 %v50
    %152 = vmatpush.msra.mxu0 %v49
    %153 = vmatpush.msra.mxu0 %v48
    %154 = vmatpush.msra.mxu0 %v47
    %155 = vmatpush.msra.mxu0 %v46
    %156 = vmatpush.msra.mxu0 %v45
    %157 = vmatpush.msra.mxu0 %v44
    %158 = vmatpush.msra.mxu0 %v43
    %159 = vmatpush.msra.mxu0 %v42
    %160 = vmatpush.msra.mxu0 %v41
    %161 = vmatpush.msra.mxu0 %v40
    %162 = vmatmul.f32.gmra.mxu0 %v145
    %v163 = vpop.f32.mrf.mxu0
    %v164 = vadd.f32 %v110, %v163
    %165 = vdwg.mxu0
    %v166 = vtanh.pop %v164
    %s167 = scalar_lea.vmem %s0, 8
    %v168 = vld [vmem:[%s167] sm:$0xff]
    %v170 = vsel %vm121, %v168, 0
    %172 = vmatpush.msra.mxu0 0.0
    %173 = vmatpush.msra.mxu0 0.0
    %174 = vmatpush.msra.mxu0 0.0
    %175 = vmatpush.msra.mxu0 0.0
    %176 = vmatpush.msra.mxu0 0.0
    %177 = vmatpush.msra.mxu0 0.0
    %178 = vmatpush.msra.mxu0 0.0
    %179 = vmatpush.msra.mxu0 0.0
    %180 = vmatpush.msra.mxu0 0.0
    %181 = vmatpush.msra.mxu0 0.0
    %182 = vmatpush.msra.mxu0 0.0
    %183 = vmatpush.msra.mxu0 0.0
    %184 = vmatpush.msra.mxu0 0.0
    %185 = vmatpush.msra.mxu0 0.0
    %186 = vmatpush.msra.mxu0 0.0
    %187 = vmatpush.msra.mxu0 %v39
    %188 = vmatmul.f32.gmra.mxu0 %v170
    %v189 = vpop.f32.mrf.mxu0
    %v190 = vadd.f32 %v106, %v189
    %191 = vdwg.mxu0
    %v192 = vtanh.pop %v190
    %193 = vmatpush.msra.mxu0 %v55
    %194 = vmatpush.msra.mxu0 %v54
    %195 = vmatpush.msra.mxu0 %v53
    %196 = vmatpush.msra.mxu0 %v52
    %197 = vmatpush.msra.mxu0 %v51
    %198 = vmatpush.msra.mxu0 %v50
    %199 = vmatpush.msra.mxu0 %v49
    %200 = vmatpush.msra.mxu0 %v48
    %201 = vmatpush.msra.mxu0 %v47
    %202 = vmatpush.msra.mxu0 %v46
    %203 = vmatpush.msra.mxu0 %v45
    %204 = vmatpush.msra.mxu0 %v44
    %205 = vmatpush.msra.mxu0 %v43
    %206 = vmatpush.msra.mxu0 %v42
    %207 = vmatpush.msra.mxu0 %v41
    %208 = vmatpush.msra.mxu0 %v40
    %209 = vmatmul.f32.gmra.mxu0 %v192
    %v210 = vpop.f32.mrf.mxu0
    %v211 = vadd.f32 %v110, %v210
    %212 = vdwg.mxu0
    %v213 = vtanh.pop %v211
    %s214 = scalar_lea.vmem %s0, 16
    %v215 = vld [vmem:[%s214] sm:$0xff]
    %v217 = vsel %vm121, %v215, 0
    %219 = vmatpush.msra.mxu0 0.0
    %220 = vmatpush.msra.mxu0 0.0
    %221 = vmatpush.msra.mxu0 0.0
    %222 = vmatpush.msra.mxu0 0.0
    %223 = vmatpush.msra.mxu0 0.0
    %224 = vmatpush.msra.mxu0 0.0
    %225 = vmatpush.msra.mxu0 0.0
    %226 = vmatpush.msra.mxu0 0.0
    %227 = vmatpush.msra.mxu0 0.0
    %228 = vmatpush.msra.mxu0 0.0
    %229 = vmatpush.msra.mxu0 0.0
    %230 = vmatpush.msra.mxu0 0.0
    %231 = vmatpush.msra.mxu0 0.0
    %232 = vmatpush.msra.mxu0 0.0
    %233 = vmatpush.msra.mxu0 0.0
    %234 = vmatpush.msra.mxu0 %v39
    %235 = vmatmul.f32.gmra.mxu0 %v217
    %v236 = vpop.f32.mrf.mxu0
    %v237 = vadd.f32 %v106, %v236
    %238 = vdwg.mxu0
    %v239 = vtanh.pop %v237
    %240 = vmatpush.msra.mxu0 %v55
    %241 = vmatpush.msra.mxu0 %v54
    %242 = vmatpush.msra.mxu0 %v53
    %243 = vmatpush.msra.mxu0 %v52
    %244 = vmatpush.msra.mxu0 %v51
    %245 = vmatpush.msra.mxu0 %v50
    %246 = vmatpush.msra.mxu0 %v49
    %247 = vmatpush.msra.mxu0 %v48
    %248 = vmatpush.msra.mxu0 %v47
    %249 = vmatpush.msra.mxu0 %v46
    %250 = vmatpush.msra.mxu0 %v45
    %251 = vmatpush.msra.mxu0 %v44
    %252 = vmatpush.msra.mxu0 %v43
    %253 = vmatpush.msra.mxu0 %v42
    %254 = vmatpush.msra.mxu0 %v41
    %255 = vmatpush.msra.mxu0 %v40
    %256 = vmatmul.f32.gmra.mxu0 %v239
    %v257 = vpop.f32.mrf.mxu0
    %v258 = vadd.f32 %v110, %v257
    %259 = vdwg.mxu0
    %v260 = vtanh.pop %v258
    %s261 = scalar_lea.vmem %s0, 24
    %v262 = vld [vmem:[%s261] sm:$0xff]
    %v264 = vsel %vm121, %v262, 0
    %266 = vmatpush.msra.mxu0 0.0
    %267 = vmatpush.msra.mxu0 0.0
    %268 = vmatpush.msra.mxu0 0.0
    %269 = vmatpush.msra.mxu0 0.0
    %270 = vmatpush.msra.mxu0 0.0
    %271 = vmatpush.msra.mxu0 0.0
    %272 = vmatpush.msra.mxu0 0.0
    %273 = vmatpush.msra.mxu0 0.0
    %274 = vmatpush.msra.mxu0 0.0
    %275 = vmatpush.msra.mxu0 0.0
    %276 = vmatpush.msra.mxu0 0.0
    %277 = vmatpush.msra.mxu0 0.0
    %278 = vmatpush.msra.mxu0 0.0
    %279 = vmatpush.msra.mxu0 0.0
    %280 = vmatpush.msra.mxu0 0.0
    %281 = vmatpush.msra.mxu0 %v39
    %282 = vmatmul.f32.gmra.mxu0 %v264
    %v283 = vpop.f32.mrf.mxu0
    %v284 = vadd.f32 %v106, %v283
    %285 = vdwg.mxu0
    %v286 = vtanh.pop %v284
    %287 = vmatpush.msra.mxu0 %v55
    %288 = vmatpush.msra.mxu0 %v54
    %289 = vmatpush.msra.mxu0 %v53
    %290 = vmatpush.msra.mxu0 %v52
    %291 = vmatpush.msra.mxu0 %v51
    %292 = vmatpush.msra.mxu0 %v50
    %293 = vmatpush.msra.mxu0 %v49
    %294 = vmatpush.msra.mxu0 %v48
    %295 = vmatpush.msra.mxu0 %v47
    %296 = vmatpush.msra.mxu0 %v46
    %297 = vmatpush.msra.mxu0 %v45
    %298 = vmatpush.msra.mxu0 %v44
    %299 = vmatpush.msra.mxu0 %v43
    %300 = vmatpush.msra.mxu0 %v42
    %301 = vmatpush.msra.mxu0 %v41
    %302 = vmatpush.msra.mxu0 %v40
    %303 = vmatmul.f32.gmra.mxu0 %v286
    %v304 = vpop.f32.mrf.mxu0
    %v305 = vadd.f32 %v110, %v304
    %306 = vdwg.mxu0
    %v307 = vtanh.pop %v305
    %s308 = scalar_lea.vmem %s0, 32
    %v309 = vld [vmem:[%s308] sm:$0xff]
    %v311 = vsel %vm121, %v309, 0
    %313 = vmatpush.msra.mxu0 0.0
    %314 = vmatpush.msra.mxu0 0.0
    %315 = vmatpush.msra.mxu0 0.0
    %316 = vmatpush.msra.mxu0 0.0
    %317 = vmatpush.msra.mxu0 0.0
    %318 = vmatpush.msra.mxu0 0.0
    %319 = vmatpush.msra.mxu0 0.0
    %320 = vmatpush.msra.mxu0 0.0
    %321 = vmatpush.msra.mxu0 0.0
    %322 = vmatpush.msra.mxu0 0.0
    %323 = vmatpush.msra.mxu0 0.0
    %324 = vmatpush.msra.mxu0 0.0
    %325 = vmatpush.msra.mxu0 0.0
    %326 = vmatpush.msra.mxu0 0.0
    %327 = vmatpush.msra.mxu0 0.0
    %328 = vmatpush.msra.mxu0 %v39
    %329 = vmatmul.f32.gmra.mxu0 %v311
    %v330 = vpop.f32.mrf.mxu0
    %v331 = vadd.f32 %v106, %v330
    %332 = vdwg.mxu0
    %v333 = vtanh.pop %v331
    %334 = vmatpush.msra.mxu0 %v55
    %335 = vmatpush.msra.mxu0 %v54
    %336 = vmatpush.msra.mxu0 %v53
    %337 = vmatpush.msra.mxu0 %v52
    %338 = vmatpush.msra.mxu0 %v51
    %339 = vmatpush.msra.mxu0 %v50
    %340 = vmatpush.msra.mxu0 %v49
    %341 = vmatpush.msra.mxu0 %v48
    %342 = vmatpush.msra.mxu0 %v47
    %343 = vmatpush.msra.mxu0 %v46
    %344 = vmatpush.msra.mxu0 %v45
    %345 = vmatpush.msra.mxu0 %v44
    %346 = vmatpush.msra.mxu0 %v43
    %347 = vmatpush.msra.mxu0 %v42
    %348 = vmatpush.msra.mxu0 %v41
    %349 = vmatpush.msra.mxu0 %v40
    %350 = vmatmul.f32.gmra.mxu0 %v333
    %v351 = vpop.f32.mrf.mxu0
    %v352 = vadd.f32 %v110, %v351
    %353 = vdwg.mxu0
    %v354 = vtanh.pop %v352
    %s355 = scalar_lea.vmem %s0, 40
    %v356 = vld [vmem:[%s355] sm:$0xff]
    %v358 = vsel %vm121, %v356, 0
    %360 = vmatpush.msra.mxu0 0.0
    %361 = vmatpush.msra.mxu0 0.0
    %362 = vmatpush.msra.mxu0 0.0
    %363 = vmatpush.msra.mxu0 0.0
    %364 = vmatpush.msra.mxu0 0.0
    %365 = vmatpush.msra.mxu0 0.0
    %366 = vmatpush.msra.mxu0 0.0
    %367 = vmatpush.msra.mxu0 0.0
    %368 = vmatpush.msra.mxu0 0.0
    %369 = vmatpush.msra.mxu0 0.0
    %370 = vmatpush.msra.mxu0 0.0
    %371 = vmatpush.msra.mxu0 0.0
    %372 = vmatpush.msra.mxu0 0.0
    %373 = vmatpush.msra.mxu0 0.0
    %374 = vmatpush.msra.mxu0 0.0
    %375 = vmatpush.msra.mxu0 %v39
    %376 = vmatmul.f32.gmra.mxu0 %v358
    %v377 = vpop.f32.mrf.mxu0
    %v378 = vadd.f32 %v106, %v377
    %379 = vdwg.mxu0
    %v380 = vtanh.pop %v378
    %381 = vmatpush.msra.mxu0 %v55
    %382 = vmatpush.msra.mxu0 %v54
    %383 = vmatpush.msra.mxu0 %v53
    %384 = vmatpush.msra.mxu0 %v52
    %385 = vmatpush.msra.mxu0 %v51
    %386 = vmatpush.msra.mxu0 %v50
    %387 = vmatpush.msra.mxu0 %v49
    %388 = vmatpush.msra.mxu0 %v48
    %389 = vmatpush.msra.mxu0 %v47
    %390 = vmatpush.msra.mxu0 %v46
    %391 = vmatpush.msra.mxu0 %v45
    %392 = vmatpush.msra.mxu0 %v44
    %393 = vmatpush.msra.mxu0 %v43
    %394 = vmatpush.msra.mxu0 %v42
    %395 = vmatpush.msra.mxu0 %v41
    %396 = vmatpush.msra.mxu0 %v40
    %397 = vmatmul.f32.gmra.mxu0 %v380
    %v398 = vpop.f32.mrf.mxu0
    %v399 = vadd.f32 %v110, %v398
    %400 = vdwg.mxu0
    %v401 = vtanh.pop %v399
    %s402 = scalar_lea.vmem %s0, 48
    %v403 = vld [vmem:[%s402] sm:$0xff]
    %v405 = vsel %vm121, %v403, 0
    %407 = vmatpush.msra.mxu0 0.0
    %408 = vmatpush.msra.mxu0 0.0
    %409 = vmatpush.msra.mxu0 0.0
    %410 = vmatpush.msra.mxu0 0.0
    %411 = vmatpush.msra.mxu0 0.0
    %412 = vmatpush.msra.mxu0 0.0
    %413 = vmatpush.msra.mxu0 0.0
    %414 = vmatpush.msra.mxu0 0.0
    %415 = vmatpush.msra.mxu0 0.0
    %416 = vmatpush.msra.mxu0 0.0
    %417 = vmatpush.msra.mxu0 0.0
    %418 = vmatpush.msra.mxu0 0.0
    %419 = vmatpush.msra.mxu0 0.0
    %420 = vmatpush.msra.mxu0 0.0
    %421 = vmatpush.msra.mxu0 0.0
    %422 = vmatpush.msra.mxu0 %v39
    %423 = vmatmul.f32.gmra.mxu0 %v405
    %v424 = vpop.f32.mrf.mxu0
    %v425 = vadd.f32 %v106, %v424
    %426 = vdwg.mxu0
    %v427 = vtanh.pop %v425
    %428 = vmatpush.msra.mxu0 %v55
    %429 = vmatpush.msra.mxu0 %v54
    %430 = vmatpush.msra.mxu0 %v53
    %431 = vmatpush.msra.mxu0 %v52
    %432 = vmatpush.msra.mxu0 %v51
    %433 = vmatpush.msra.mxu0 %v50
    %434 = vmatpush.msra.mxu0 %v49
    %435 = vmatpush.msra.mxu0 %v48
    %436 = vmatpush.msra.mxu0 %v47
    %437 = vmatpush.msra.mxu0 %v46
    %438 = vmatpush.msra.mxu0 %v45
    %439 = vmatpush.msra.mxu0 %v44
    %440 = vmatpush.msra.mxu0 %v43
    %441 = vmatpush.msra.mxu0 %v42
    %442 = vmatpush.msra.mxu0 %v41
    %443 = vmatpush.msra.mxu0 %v40
    %444 = vmatmul.f32.gmra.mxu0 %v427
    %v445 = vpop.f32.mrf.mxu0
    %v446 = vadd.f32 %v110, %v445
    %447 = vdwg.mxu0
    %v448 = vtanh.pop %v446
    %s449 = scalar_lea.vmem %s0, 56
    %v450 = vld [vmem:[%s449] sm:$0xff]
    %v452 = vsel %vm121, %v450, 0
    %454 = vmatpush.msra.mxu0 0.0
    %455 = vmatpush.msra.mxu0 0.0
    %456 = vmatpush.msra.mxu0 0.0
    %457 = vmatpush.msra.mxu0 0.0
    %458 = vmatpush.msra.mxu0 0.0
    %459 = vmatpush.msra.mxu0 0.0
    %460 = vmatpush.msra.mxu0 0.0
    %461 = vmatpush.msra.mxu0 0.0
    %462 = vmatpush.msra.mxu0 0.0
    %463 = vmatpush.msra.mxu0 0.0
    %464 = vmatpush.msra.mxu0 0.0
    %465 = vmatpush.msra.mxu0 0.0
    %466 = vmatpush.msra.mxu0 0.0
    %467 = vmatpush.msra.mxu0 0.0
    %468 = vmatpush.msra.mxu0 0.0
    %469 = vmatpush.msra.mxu0 %v39
    %470 = vmatmul.f32.gmra.mxu0 %v452
    %v471 = vpop.f32.mrf.mxu0
    %v472 = vadd.f32 %v106, %v471
    %473 = vdwg.mxu0
    %v474 = vtanh.pop %v472
    %475 = vmatpush.msra.mxu0 %v55
    %476 = vmatpush.msra.mxu0 %v54
    %477 = vmatpush.msra.mxu0 %v53
    %478 = vmatpush.msra.mxu0 %v52
    %479 = vmatpush.msra.mxu0 %v51
    %480 = vmatpush.msra.mxu0 %v50
    %481 = vmatpush.msra.mxu0 %v49
    %482 = vmatpush.msra.mxu0 %v48
    %483 = vmatpush.msra.mxu0 %v47
    %484 = vmatpush.msra.mxu0 %v46
    %485 = vmatpush.msra.mxu0 %v45
    %486 = vmatpush.msra.mxu0 %v44
    %487 = vmatpush.msra.mxu0 %v43
    %488 = vmatpush.msra.mxu0 %v42
    %489 = vmatpush.msra.mxu0 %v41
    %490 = vmatpush.msra.mxu0 %v40
    %491 = vmatmul.f32.gmra.mxu0 %v474
    %v492 = vpop.f32.mrf.mxu0
    %v493 = vadd.f32 %v110, %v492
    %494 = vdwg.mxu0
    %v495 = vtanh.pop %v493
    %s496 = scalar_lea.vmem %s0, 64
    %v497 = vld [vmem:[%s496] sm:$0xff]
    %v499 = vsel %vm121, %v497, 0
    %501 = vmatpush.msra.mxu0 0.0
    %502 = vmatpush.msra.mxu0 0.0
    %503 = vmatpush.msra.mxu0 0.0
    %504 = vmatpush.msra.mxu0 0.0
    %505 = vmatpush.msra.mxu0 0.0
    %506 = vmatpush.msra.mxu0 0.0
    %507 = vmatpush.msra.mxu0 0.0
    %508 = vmatpush.msra.mxu0 0.0
    %509 = vmatpush.msra.mxu0 0.0
    %510 = vmatpush.msra.mxu0 0.0
    %511 = vmatpush.msra.mxu0 0.0
    %512 = vmatpush.msra.mxu0 0.0
    %513 = vmatpush.msra.mxu0 0.0
    %514 = vmatpush.msra.mxu0 0.0
    %515 = vmatpush.msra.mxu0 0.0
    %516 = vmatpush.msra.mxu0 %v39
    %517 = vmatmul.f32.gmra.mxu0 %v499
    %v518 = vpop.f32.mrf.mxu0
    %v519 = vadd.f32 %v106, %v518
    %520 = vdwg.mxu0
    %v521 = vtanh.pop %v519
    %522 = vmatpush.msra.mxu0 %v55
    %523 = vmatpush.msra.mxu0 %v54
    %524 = vmatpush.msra.mxu0 %v53
    %525 = vmatpush.msra.mxu0 %v52
    %526 = vmatpush.msra.mxu0 %v51
    %527 = vmatpush.msra.mxu0 %v50
    %528 = vmatpush.msra.mxu0 %v49
    %529 = vmatpush.msra.mxu0 %v48
    %530 = vmatpush.msra.mxu0 %v47
    %531 = vmatpush.msra.mxu0 %v46
    %532 = vmatpush.msra.mxu0 %v45
    %533 = vmatpush.msra.mxu0 %v44
    %534 = vmatpush.msra.mxu0 %v43
    %535 = vmatpush.msra.mxu0 %v42
    %536 = vmatpush.msra.mxu0 %v41
    %537 = vmatpush.msra.mxu0 %v40
    %538 = vmatmul.f32.gmra.mxu0 %v521
    %v539 = vpop.f32.mrf.mxu0
    %v540 = vadd.f32 %v110, %v539
    %541 = vdwg.mxu0
    %v542 = vtanh.pop %v540
    %s543 = scalar_lea.vmem %s0, 72
    %v544 = vld [vmem:[%s543] sm:$0xff]
    %v546 = vsel %vm121, %v544, 0
    %548 = vmatpush.msra.mxu0 0.0
    %549 = vmatpush.msra.mxu0 0.0
    %550 = vmatpush.msra.mxu0 0.0
    %551 = vmatpush.msra.mxu0 0.0
    %552 = vmatpush.msra.mxu0 0.0
    %553 = vmatpush.msra.mxu0 0.0
    %554 = vmatpush.msra.mxu0 0.0
    %555 = vmatpush.msra.mxu0 0.0
    %556 = vmatpush.msra.mxu0 0.0
    %557 = vmatpush.msra.mxu0 0.0
    %558 = vmatpush.msra.mxu0 0.0
    %559 = vmatpush.msra.mxu0 0.0
    %560 = vmatpush.msra.mxu0 0.0
    %561 = vmatpush.msra.mxu0 0.0
    %562 = vmatpush.msra.mxu0 0.0
    %563 = vmatpush.msra.mxu0 %v39
    %564 = vmatmul.f32.gmra.mxu0 %v546
    %v565 = vpop.f32.mrf.mxu0
    %v566 = vadd.f32 %v106, %v565
    %567 = vdwg.mxu0
    %v568 = vtanh.pop %v566
    %569 = vmatpush.msra.mxu0 %v55
    %570 = vmatpush.msra.mxu0 %v54
    %571 = vmatpush.msra.mxu0 %v53
    %572 = vmatpush.msra.mxu0 %v52
    %573 = vmatpush.msra.mxu0 %v51
    %574 = vmatpush.msra.mxu0 %v50
    %575 = vmatpush.msra.mxu0 %v49
    %576 = vmatpush.msra.mxu0 %v48
    %577 = vmatpush.msra.mxu0 %v47
    %578 = vmatpush.msra.mxu0 %v46
    %579 = vmatpush.msra.mxu0 %v45
    %580 = vmatpush.msra.mxu0 %v44
    %581 = vmatpush.msra.mxu0 %v43
    %582 = vmatpush.msra.mxu0 %v42
    %583 = vmatpush.msra.mxu0 %v41
    %584 = vmatpush.msra.mxu0 %v40
    %585 = vmatmul.f32.gmra.mxu0 %v568
    %v586 = vpop.f32.mrf.mxu0
    %v587 = vadd.f32 %v110, %v586
    %588 = vdwg.mxu0
    %v589 = vtanh.pop %v587
    %590 = vmatpush.msra.mxu0 %v101
    %591 = vmatpush.msra.mxu0 %v98
    %592 = vmatpush.msra.mxu0 %v95
    %593 = vmatpush.msra.mxu0 %v92
    %594 = vmatpush.msra.mxu0 %v89
    %595 = vmatpush.msra.mxu0 %v86
    %596 = vmatpush.msra.mxu0 %v83
    %597 = vmatpush.msra.mxu0 %v80
    %598 = vmatpush.msra.mxu0 %v77
    %599 = vmatpush.msra.mxu0 %v74
    %600 = vmatpush.msra.mxu0 %v71
    %601 = vmatpush.msra.mxu0 %v68
    %602 = vmatpush.msra.mxu0 %v65
    %603 = vmatpush.msra.mxu0 %v62
    %604 = vmatpush.msra.mxu0 %v59
    %605 = vmatpush.msra.mxu0 %v56
    %606 = vmatmul.f32.gmra.mxu0 %v589
    %v607 = vpop.f32.mrf.mxu0
    %v608 = vadd.f32 %v114, %v607
    %609 = vdwg.mxu0
    %610 = vmatpush.msra.mxu0 %v102
    %611 = vmatpush.msra.mxu0 %v99
    %612 = vmatpush.msra.mxu0 %v96
    %613 = vmatpush.msra.mxu0 %v93
    %614 = vmatpush.msra.mxu0 %v90
    %615 = vmatpush.msra.mxu0 %v87
    %616 = vmatpush.msra.mxu0 %v84
    %617 = vmatpush.msra.mxu0 %v81
    %618 = vmatpush.msra.mxu0 %v78
    %619 = vmatpush.msra.mxu0 %v75
    %620 = vmatpush.msra.mxu0 %v72
    %621 = vmatpush.msra.mxu0 %v69
    %622 = vmatpush.msra.mxu0 %v66
    %623 = vmatpush.msra.mxu0 %v63
    %624 = vmatpush.msra.mxu0 %v60
    %625 = vmatpush.msra.mxu0 %v57
    %626 = vmatmul.f32.gmra.mxu0 %v589
    %v627 = vpop.f32.mrf.mxu0
    %v628 = vadd.f32 %v115, %v627
    %629 = vdwg.mxu0
    %630 = vmatpush.msra.mxu0 %v103
    %631 = vmatpush.msra.mxu0 %v100
    %632 = vmatpush.msra.mxu0 %v97
    %633 = vmatpush.msra.mxu0 %v94
    %634 = vmatpush.msra.mxu0 %v91
    %635 = vmatpush.msra.mxu0 %v88
    %636 = vmatpush.msra.mxu0 %v85
    %637 = vmatpush.msra.mxu0 %v82
    %638 = vmatpush.msra.mxu0 %v79
    %639 = vmatpush.msra.mxu0 %v76
    %640 = vmatpush.msra.mxu0 %v73
    %641 = vmatpush.msra.mxu0 %v70
    %642 = vmatpush.msra.mxu0 %v67
    %643 = vmatpush.msra.mxu0 %v64
    %644 = vmatpush.msra.mxu0 %v61
    %645 = vmatpush.msra.mxu0 %v58
    %646 = vmatmul.f32.gmra.mxu0 %v589
    %v647 = vpop.f32.mrf.mxu0
    %v648 = vadd.f32 %v116, %v647
    %649 = vdwg.mxu0
    %650 = vmatpush.msra.mxu0 %v101
    %651 = vmatpush.msra.mxu0 %v98
    %652 = vmatpush.msra.mxu0 %v95
    %653 = vmatpush.msra.mxu0 %v92
    %654 = vmatpush.msra.mxu0 %v89
    %655 = vmatpush.msra.mxu0 %v86
    %656 = vmatpush.msra.mxu0 %v83
    %657 = vmatpush.msra.mxu0 %v80
    %658 = vmatpush.msra.mxu0 %v77
    %659 = vmatpush.msra.mxu0 %v74
    %660 = vmatpush.msra.mxu0 %v71
    %661 = vmatpush.msra.mxu0 %v68
    %662 = vmatpush.msra.mxu0 %v65
    %663 = vmatpush.msra.mxu0 %v62
    %664 = vmatpush.msra.mxu0 %v59
    %665 = vmatpush.msra.mxu0 %v56
    %666 = vmatmul.f32.gmra.mxu0 %v166
    %v667 = vpop.f32.mrf.mxu0
    %v668 = vadd.f32 %v114, %v667
    %669 = vdwg.mxu0
    %670 = vmatpush.msra.mxu0 %v102
    %671 = vmatpush.msra.mxu0 %v99
    %672 = vmatpush.msra.mxu0 %v96
    %673 = vmatpush.msra.mxu0 %v93
    %674 = vmatpush.msra.mxu0 %v90
    %675 = vmatpush.msra.mxu0 %v87
    %676 = vmatpush.msra.mxu0 %v84
    %677 = vmatpush.msra.mxu0 %v81
    %678 = vmatpush.msra.mxu0 %v78
    %679 = vmatpush.msra.mxu0 %v75
    %680 = vmatpush.msra.mxu0 %v72
    %681 = vmatpush.msra.mxu0 %v69
    %682 = vmatpush.msra.mxu0 %v66
    %683 = vmatpush.msra.mxu0 %v63
    %684 = vmatpush.msra.mxu0 %v60
    %685 = vmatpush.msra.mxu0 %v57
    %686 = vmatmul.f32.gmra.mxu0 %v166
    %v687 = vpop.f32.mrf.mxu0
    %v688 = vadd.f32 %v115, %v687
    %689 = vdwg.mxu0
    %690 = vmatpush.msra.mxu0 %v103
    %691 = vmatpush.msra.mxu0 %v100
    %692 = vmatpush.msra.mxu0 %v97
    %693 = vmatpush.msra.mxu0 %v94
    %694 = vmatpush.msra.mxu0 %v91
    %695 = vmatpush.msra.mxu0 %v88
    %696 = vmatpush.msra.mxu0 %v85
    %697 = vmatpush.msra.mxu0 %v82
    %698 = vmatpush.msra.mxu0 %v79
    %699 = vmatpush.msra.mxu0 %v76
    %700 = vmatpush.msra.mxu0 %v73
    %701 = vmatpush.msra.mxu0 %v70
    %702 = vmatpush.msra.mxu0 %v67
    %703 = vmatpush.msra.mxu0 %v64
    %704 = vmatpush.msra.mxu0 %v61
    %705 = vmatpush.msra.mxu0 %v58
    %706 = vmatmul.f32.gmra.mxu0 %v166
    %v707 = vpop.f32.mrf.mxu0
    %v708 = vadd.f32 %v116, %v707
    %709 = vdwg.mxu0
    %v710 = vadd.f32 %v166, %v213
    %711 = vmatpush.msra.mxu0 %v101
    %712 = vmatpush.msra.mxu0 %v98
    %713 = vmatpush.msra.mxu0 %v95
    %714 = vmatpush.msra.mxu0 %v92
    %715 = vmatpush.msra.mxu0 %v89
    %716 = vmatpush.msra.mxu0 %v86
    %717 = vmatpush.msra.mxu0 %v83
    %718 = vmatpush.msra.mxu0 %v80
    %719 = vmatpush.msra.mxu0 %v77
    %720 = vmatpush.msra.mxu0 %v74
    %721 = vmatpush.msra.mxu0 %v71
    %722 = vmatpush.msra.mxu0 %v68
    %723 = vmatpush.msra.mxu0 %v65
    %724 = vmatpush.msra.mxu0 %v62
    %725 = vmatpush.msra.mxu0 %v59
    %726 = vmatpush.msra.mxu0 %v56
    %727 = vmatmul.f32.gmra.mxu0 %v710
    %v728 = vpop.f32.mrf.mxu0
    %v729 = vadd.f32 %v114, %v728
    %730 = vdwg.mxu0
    %731 = vmatpush.msra.mxu0 %v102
    %732 = vmatpush.msra.mxu0 %v99
    %733 = vmatpush.msra.mxu0 %v96
    %734 = vmatpush.msra.mxu0 %v93
    %735 = vmatpush.msra.mxu0 %v90
    %736 = vmatpush.msra.mxu0 %v87
    %737 = vmatpush.msra.mxu0 %v84
    %738 = vmatpush.msra.mxu0 %v81
    %739 = vmatpush.msra.mxu0 %v78
    %740 = vmatpush.msra.mxu0 %v75
    %741 = vmatpush.msra.mxu0 %v72
    %742 = vmatpush.msra.mxu0 %v69
    %743 = vmatpush.msra.mxu0 %v66
    %744 = vmatpush.msra.mxu0 %v63
    %745 = vmatpush.msra.mxu0 %v60
    %746 = vmatpush.msra.mxu0 %v57
    %747 = vmatmul.f32.gmra.mxu0 %v710
    %v748 = vpop.f32.mrf.mxu0
    %v749 = vadd.f32 %v115, %v748
    %750 = vdwg.mxu0
    %751 = vmatpush.msra.mxu0 %v103
    %752 = vmatpush.msra.mxu0 %v100
    %753 = vmatpush.msra.mxu0 %v97
    %754 = vmatpush.msra.mxu0 %v94
    %755 = vmatpush.msra.mxu0 %v91
    %756 = vmatpush.msra.mxu0 %v88
    %757 = vmatpush.msra.mxu0 %v85
    %758 = vmatpush.msra.mxu0 %v82
    %759 = vmatpush.msra.mxu0 %v79
    %760 = vmatpush.msra.mxu0 %v76
    %761 = vmatpush.msra.mxu0 %v73
    %762 = vmatpush.msra.mxu0 %v70
    %763 = vmatpush.msra.mxu0 %v67
    %764 = vmatpush.msra.mxu0 %v64
    %765 = vmatpush.msra.mxu0 %v61
    %766 = vmatpush.msra.mxu0 %v58
    %767 = vmatmul.f32.gmra.mxu0 %v710
    %v768 = vpop.f32.mrf.mxu0
    %v769 = vadd.f32 %v116, %v768
    %770 = vdwg.mxu0
    %v771 = vadd.f32 %v213, %v260
    %772 = vmatpush.msra.mxu0 %v101
    %773 = vmatpush.msra.mxu0 %v98
    %774 = vmatpush.msra.mxu0 %v95
    %775 = vmatpush.msra.mxu0 %v92
    %776 = vmatpush.msra.mxu0 %v89
    %777 = vmatpush.msra.mxu0 %v86
    %778 = vmatpush.msra.mxu0 %v83
    %779 = vmatpush.msra.mxu0 %v80
    %780 = vmatpush.msra.mxu0 %v77
    %781 = vmatpush.msra.mxu0 %v74
    %782 = vmatpush.msra.mxu0 %v71
    %783 = vmatpush.msra.mxu0 %v68
    %784 = vmatpush.msra.mxu0 %v65
    %785 = vmatpush.msra.mxu0 %v62
    %786 = vmatpush.msra.mxu0 %v59
    %787 = vmatpush.msra.mxu0 %v56
    %788 = vmatmul.f32.gmra.mxu0 %v771
    %v789 = vpop.f32.mrf.mxu0
    %v790 = vadd.f32 %v114, %v789
    %791 = vdwg.mxu0
    %792 = vmatpush.msra.mxu0 %v102
    %793 = vmatpush.msra.mxu0 %v99
    %794 = vmatpush.msra.mxu0 %v96
    %795 = vmatpush.msra.mxu0 %v93
    %796 = vmatpush.msra.mxu0 %v90
    %797 = vmatpush.msra.mxu0 %v87
    %798 = vmatpush.msra.mxu0 %v84
    %799 = vmatpush.msra.mxu0 %v81
    %800 = vmatpush.msra.mxu0 %v78
    %801 = vmatpush.msra.mxu0 %v75
    %802 = vmatpush.msra.mxu0 %v72
    %803 = vmatpush.msra.mxu0 %v69
    %804 = vmatpush.msra.mxu0 %v66
    %805 = vmatpush.msra.mxu0 %v63
    %806 = vmatpush.msra.mxu0 %v60
    %807 = vmatpush.msra.mxu0 %v57
    %808 = vmatmul.f32.gmra.mxu0 %v771
    %v809 = vpop.f32.mrf.mxu0
    %v810 = vadd.f32 %v115, %v809
    %811 = vdwg.mxu0
    %812 = vmatpush.msra.mxu0 %v103
    %813 = vmatpush.msra.mxu0 %v100
    %814 = vmatpush.msra.mxu0 %v97
    %815 = vmatpush.msra.mxu0 %v94
    %816 = vmatpush.msra.mxu0 %v91
    %817 = vmatpush.msra.mxu0 %v88
    %818 = vmatpush.msra.mxu0 %v85
    %819 = vmatpush.msra.mxu0 %v82
    %820 = vmatpush.msra.mxu0 %v79
    %821 = vmatpush.msra.mxu0 %v76
    %822 = vmatpush.msra.mxu0 %v73
    %823 = vmatpush.msra.mxu0 %v70
    %824 = vmatpush.msra.mxu0 %v67
    %825 = vmatpush.msra.mxu0 %v64
    %826 = vmatpush.msra.mxu0 %v61
    %827 = vmatpush.msra.mxu0 %v58
    %828 = vmatmul.f32.gmra.mxu0 %v771
    %v829 = vpop.f32.mrf.mxu0
    %v830 = vadd.f32 %v116, %v829
    %831 = vdwg.mxu0
    %v832 = vadd.f32 %v260, %v307
    %833 = vmatpush.msra.mxu0 %v101
    %834 = vmatpush.msra.mxu0 %v98
    %835 = vmatpush.msra.mxu0 %v95
    %836 = vmatpush.msra.mxu0 %v92
    %837 = vmatpush.msra.mxu0 %v89
    %838 = vmatpush.msra.mxu0 %v86
    %839 = vmatpush.msra.mxu0 %v83
    %840 = vmatpush.msra.mxu0 %v80
    %841 = vmatpush.msra.mxu0 %v77
    %842 = vmatpush.msra.mxu0 %v74
    %843 = vmatpush.msra.mxu0 %v71
    %844 = vmatpush.msra.mxu0 %v68
    %845 = vmatpush.msra.mxu0 %v65
    %846 = vmatpush.msra.mxu0 %v62
    %847 = vmatpush.msra.mxu0 %v59
    %848 = vmatpush.msra.mxu0 %v56
    %849 = vmatmul.f32.gmra.mxu0 %v832
    %v850 = vpop.f32.mrf.mxu0
    %v851 = vadd.f32 %v114, %v850
    %852 = vdwg.mxu0
    %853 = vmatpush.msra.mxu0 %v102
    %854 = vmatpush.msra.mxu0 %v99
    %855 = vmatpush.msra.mxu0 %v96
    %856 = vmatpush.msra.mxu0 %v93
    %857 = vmatpush.msra.mxu0 %v90
    %858 = vmatpush.msra.mxu0 %v87
    %859 = vmatpush.msra.mxu0 %v84
    %860 = vmatpush.msra.mxu0 %v81
    %861 = vmatpush.msra.mxu0 %v78
    %862 = vmatpush.msra.mxu0 %v75
    %863 = vmatpush.msra.mxu0 %v72
    %864 = vmatpush.msra.mxu0 %v69
    %865 = vmatpush.msra.mxu0 %v66
    %866 = vmatpush.msra.mxu0 %v63
    %867 = vmatpush.msra.mxu0 %v60
    %868 = vmatpush.msra.mxu0 %v57
    %869 = vmatmul.f32.gmra.mxu0 %v832
    %v870 = vpop.f32.mrf.mxu0
    %v871 = vadd.f32 %v115, %v870
    %872 = vdwg.mxu0
    %873 = vmatpush.msra.mxu0 %v103
    %874 = vmatpush.msra.mxu0 %v100
    %875 = vmatpush.msra.mxu0 %v97
    %876 = vmatpush.msra.mxu0 %v94
    %877 = vmatpush.msra.mxu0 %v91
    %878 = vmatpush.msra.mxu0 %v88
    %879 = vmatpush.msra.mxu0 %v85
    %880 = vmatpush.msra.mxu0 %v82
    %881 = vmatpush.msra.mxu0 %v79
    %882 = vmatpush.msra.mxu0 %v76
    %883 = vmatpush.msra.mxu0 %v73
    %884 = vmatpush.msra.mxu0 %v70
    %885 = vmatpush.msra.mxu0 %v67
    %886 = vmatpush.msra.mxu0 %v64
    %887 = vmatpush.msra.mxu0 %v61
    %888 = vmatpush.msra.mxu0 %v58
    %889 = vmatmul.f32.gmra.mxu0 %v832
    %v890 = vpop.f32.mrf.mxu0
    %v891 = vadd.f32 %v116, %v890
    %892 = vdwg.mxu0
    %v893 = vadd.f32 %v307, %v354
    %894 = vmatpush.msra.mxu0 %v101
    %895 = vmatpush.msra.mxu0 %v98
    %896 = vmatpush.msra.mxu0 %v95
    %897 = vmatpush.msra.mxu0 %v92
    %898 = vmatpush.msra.mxu0 %v89
    %899 = vmatpush.msra.mxu0 %v86
    %900 = vmatpush.msra.mxu0 %v83
    %901 = vmatpush.msra.mxu0 %v80
    %902 = vmatpush.msra.mxu0 %v77
    %903 = vmatpush.msra.mxu0 %v74
    %904 = vmatpush.msra.mxu0 %v71
    %905 = vmatpush.msra.mxu0 %v68
    %906 = vmatpush.msra.mxu0 %v65
    %907 = vmatpush.msra.mxu0 %v62
    %908 = vmatpush.msra.mxu0 %v59
    %909 = vmatpush.msra.mxu0 %v56
    %910 = vmatmul.f32.gmra.mxu0 %v893
    %v911 = vpop.f32.mrf.mxu0
    %v912 = vadd.f32 %v114, %v911
    %913 = vdwg.mxu0
    %914 = vmatpush.msra.mxu0 %v102
    %915 = vmatpush.msra.mxu0 %v99
    %916 = vmatpush.msra.mxu0 %v96
    %917 = vmatpush.msra.mxu0 %v93
    %918 = vmatpush.msra.mxu0 %v90
    %919 = vmatpush.msra.mxu0 %v87
    %920 = vmatpush.msra.mxu0 %v84
    %921 = vmatpush.msra.mxu0 %v81
    %922 = vmatpush.msra.mxu0 %v78
    %923 = vmatpush.msra.mxu0 %v75
    %924 = vmatpush.msra.mxu0 %v72
    %925 = vmatpush.msra.mxu0 %v69
    %926 = vmatpush.msra.mxu0 %v66
    %927 = vmatpush.msra.mxu0 %v63
    %928 = vmatpush.msra.mxu0 %v60
    %929 = vmatpush.msra.mxu0 %v57
    %930 = vmatmul.f32.gmra.mxu0 %v893
    %v931 = vpop.f32.mrf.mxu0
    %v932 = vadd.f32 %v115, %v931
    %933 = vdwg.mxu0
    %934 = vmatpush.msra.mxu0 %v103
    %935 = vmatpush.msra.mxu0 %v100
    %936 = vmatpush.msra.mxu0 %v97
    %937 = vmatpush.msra.mxu0 %v94
    %938 = vmatpush.msra.mxu0 %v91
    %939 = vmatpush.msra.mxu0 %v88
    %940 = vmatpush.msra.mxu0 %v85
    %941 = vmatpush.msra.mxu0 %v82
    %942 = vmatpush.msra.mxu0 %v79
    %943 = vmatpush.msra.mxu0 %v76
    %944 = vmatpush.msra.mxu0 %v73
    %945 = vmatpush.msra.mxu0 %v70
    %946 = vmatpush.msra.mxu0 %v67
    %947 = vmatpush.msra.mxu0 %v64
    %948 = vmatpush.msra.mxu0 %v61
    %949 = vmatpush.msra.mxu0 %v58
    %950 = vmatmul.f32.gmra.mxu0 %v893
    %v951 = vpop.f32.mrf.mxu0
    %v952 = vadd.f32 %v116, %v951
    %953 = vdwg.mxu0
    %v954 = vadd.f32 %v354, %v401
    %955 = vmatpush.msra.mxu0 %v101
    %956 = vmatpush.msra.mxu0 %v98
    %957 = vmatpush.msra.mxu0 %v95
    %958 = vmatpush.msra.mxu0 %v92
    %959 = vmatpush.msra.mxu0 %v89
    %960 = vmatpush.msra.mxu0 %v86
    %961 = vmatpush.msra.mxu0 %v83
    %962 = vmatpush.msra.mxu0 %v80
    %963 = vmatpush.msra.mxu0 %v77
    %964 = vmatpush.msra.mxu0 %v74
    %965 = vmatpush.msra.mxu0 %v71
    %966 = vmatpush.msra.mxu0 %v68
    %967 = vmatpush.msra.mxu0 %v65
    %968 = vmatpush.msra.mxu0 %v62
    %969 = vmatpush.msra.mxu0 %v59
    %970 = vmatpush.msra.mxu0 %v56
    %971 = vmatmul.f32.gmra.mxu0 %v954
    %v972 = vpop.f32.mrf.mxu0
    %v973 = vadd.f32 %v114, %v972
    %974 = vdwg.mxu0
    %975 = vmatpush.msra.mxu0 %v102
    %976 = vmatpush.msra.mxu0 %v99
    %977 = vmatpush.msra.mxu0 %v96
    %978 = vmatpush.msra.mxu0 %v93
    %979 = vmatpush.msra.mxu0 %v90
    %980 = vmatpush.msra.mxu0 %v87
    %981 = vmatpush.msra.mxu0 %v84
    %982 = vmatpush.msra.mxu0 %v81
    %983 = vmatpush.msra.mxu0 %v78
    %984 = vmatpush.msra.mxu0 %v75
    %985 = vmatpush.msra.mxu0 %v72
    %986 = vmatpush.msra.mxu0 %v69
    %987 = vmatpush.msra.mxu0 %v66
    %988 = vmatpush.msra.mxu0 %v63
    %989 = vmatpush.msra.mxu0 %v60
    %990 = vmatpush.msra.mxu0 %v57
    %991 = vmatmul.f32.gmra.mxu0 %v954
    %v992 = vpop.f32.mrf.mxu0
    %v993 = vadd.f32 %v115, %v992
    %994 = vdwg.mxu0
    %995 = vmatpush.msra.mxu0 %v103
    %996 = vmatpush.msra.mxu0 %v100
    %997 = vmatpush.msra.mxu0 %v97
    %998 = vmatpush.msra.mxu0 %v94
    %999 = vmatpush.msra.mxu0 %v91
    %1000 = vmatpush.msra.mxu0 %v88
    %1001 = vmatpush.msra.mxu0 %v85
    %1002 = vmatpush.msra.mxu0 %v82
    %1003 = vmatpush.msra.mxu0 %v79
    %1004 = vmatpush.msra.mxu0 %v76
    %1005 = vmatpush.msra.mxu0 %v73
    %1006 = vmatpush.msra.mxu0 %v70
    %1007 = vmatpush.msra.mxu0 %v67
    %1008 = vmatpush.msra.mxu0 %v64
    %1009 = vmatpush.msra.mxu0 %v61
    %1010 = vmatpush.msra.mxu0 %v58
    %1011 = vmatmul.f32.gmra.mxu0 %v954
    %v1012 = vpop.f32.mrf.mxu0
    %v1013 = vadd.f32 %v116, %v1012
    %1014 = vdwg.mxu0
    %v1015 = vadd.f32 %v401, %v448
    %1016 = vmatpush.msra.mxu0 %v101
    %1017 = vmatpush.msra.mxu0 %v98
    %1018 = vmatpush.msra.mxu0 %v95
    %1019 = vmatpush.msra.mxu0 %v92
    %1020 = vmatpush.msra.mxu0 %v89
    %1021 = vmatpush.msra.mxu0 %v86
    %1022 = vmatpush.msra.mxu0 %v83
    %1023 = vmatpush.msra.mxu0 %v80
    %1024 = vmatpush.msra.mxu0 %v77
    %1025 = vmatpush.msra.mxu0 %v74
    %1026 = vmatpush.msra.mxu0 %v71
    %1027 = vmatpush.msra.mxu0 %v68
    %1028 = vmatpush.msra.mxu0 %v65
    %1029 = vmatpush.msra.mxu0 %v62
    %1030 = vmatpush.msra.mxu0 %v59
    %1031 = vmatpush.msra.mxu0 %v56
    %1032 = vmatmul.f32.gmra.mxu0 %v1015
    %v1033 = vpop.f32.mrf.mxu0
    %v1034 = vadd.f32 %v114, %v1033
    %1035 = vdwg.mxu0
    %1036 = vmatpush.msra.mxu0 %v102
    %1037 = vmatpush.msra.mxu0 %v99
    %1038 = vmatpush.msra.mxu0 %v96
    %1039 = vmatpush.msra.mxu0 %v93
    %1040 = vmatpush.msra.mxu0 %v90
    %1041 = vmatpush.msra.mxu0 %v87
    %1042 = vmatpush.msra.mxu0 %v84
    %1043 = vmatpush.msra.mxu0 %v81
    %1044 = vmatpush.msra.mxu0 %v78
    %1045 = vmatpush.msra.mxu0 %v75
    %1046 = vmatpush.msra.mxu0 %v72
    %1047 = vmatpush.msra.mxu0 %v69
    %1048 = vmatpush.msra.mxu0 %v66
    %1049 = vmatpush.msra.mxu0 %v63
    %1050 = vmatpush.msra.mxu0 %v60
    %1051 = vmatpush.msra.mxu0 %v57
    %1052 = vmatmul.f32.gmra.mxu0 %v1015
    %v1053 = vpop.f32.mrf.mxu0
    %v1054 = vadd.f32 %v115, %v1053
    %1055 = vdwg.mxu0
    %1056 = vmatpush.msra.mxu0 %v103
    %1057 = vmatpush.msra.mxu0 %v100
    %1058 = vmatpush.msra.mxu0 %v97
    %1059 = vmatpush.msra.mxu0 %v94
    %1060 = vmatpush.msra.mxu0 %v91
    %1061 = vmatpush.msra.mxu0 %v88
    %1062 = vmatpush.msra.mxu0 %v85
    %1063 = vmatpush.msra.mxu0 %v82
    %1064 = vmatpush.msra.mxu0 %v79
    %1065 = vmatpush.msra.mxu0 %v76
    %1066 = vmatpush.msra.mxu0 %v73
    %1067 = vmatpush.msra.mxu0 %v70
    %1068 = vmatpush.msra.mxu0 %v67
    %1069 = vmatpush.msra.mxu0 %v64
    %1070 = vmatpush.msra.mxu0 %v61
    %1071 = vmatpush.msra.mxu0 %v58
    %1072 = vmatmul.f32.gmra.mxu0 %v1015
    %v1073 = vpop.f32.mrf.mxu0
    %v1074 = vadd.f32 %v116, %v1073
    %1075 = vdwg.mxu0
    %v1076 = vadd.f32 %v448, %v495
    %1077 = vmatpush.msra.mxu0 %v101
    %1078 = vmatpush.msra.mxu0 %v98
    %1079 = vmatpush.msra.mxu0 %v95
    %1080 = vmatpush.msra.mxu0 %v92
    %1081 = vmatpush.msra.mxu0 %v89
    %1082 = vmatpush.msra.mxu0 %v86
    %1083 = vmatpush.msra.mxu0 %v83
    %1084 = vmatpush.msra.mxu0 %v80
    %1085 = vmatpush.msra.mxu0 %v77
    %1086 = vmatpush.msra.mxu0 %v74
    %1087 = vmatpush.msra.mxu0 %v71
    %1088 = vmatpush.msra.mxu0 %v68
    %1089 = vmatpush.msra.mxu0 %v65
    %1090 = vmatpush.msra.mxu0 %v62
    %1091 = vmatpush.msra.mxu0 %v59
    %1092 = vmatpush.msra.mxu0 %v56
    %1093 = vmatmul.f32.gmra.mxu0 %v1076
    %v1094 = vpop.f32.mrf.mxu0
    %v1095 = vadd.f32 %v114, %v1094
    %1096 = vdwg.mxu0
    %1097 = vmatpush.msra.mxu0 %v102
    %1098 = vmatpush.msra.mxu0 %v99
    %1099 = vmatpush.msra.mxu0 %v96
    %1100 = vmatpush.msra.mxu0 %v93
    %1101 = vmatpush.msra.mxu0 %v90
    %1102 = vmatpush.msra.mxu0 %v87
    %1103 = vmatpush.msra.mxu0 %v84
    %1104 = vmatpush.msra.mxu0 %v81
    %1105 = vmatpush.msra.mxu0 %v78
    %1106 = vmatpush.msra.mxu0 %v75
    %1107 = vmatpush.msra.mxu0 %v72
    %1108 = vmatpush.msra.mxu0 %v69
    %1109 = vmatpush.msra.mxu0 %v66
    %1110 = vmatpush.msra.mxu0 %v63
    %1111 = vmatpush.msra.mxu0 %v60
    %1112 = vmatpush.msra.mxu0 %v57
    %1113 = vmatmul.f32.gmra.mxu0 %v1076
    %v1114 = vpop.f32.mrf.mxu0
    %v1115 = vadd.f32 %v115, %v1114
    %1116 = vdwg.mxu0
    %1117 = vmatpush.msra.mxu0 %v103
    %1118 = vmatpush.msra.mxu0 %v100
    %1119 = vmatpush.msra.mxu0 %v97
    %1120 = vmatpush.msra.mxu0 %v94
    %1121 = vmatpush.msra.mxu0 %v91
    %1122 = vmatpush.msra.mxu0 %v88
    %1123 = vmatpush.msra.mxu0 %v85
    %1124 = vmatpush.msra.mxu0 %v82
    %1125 = vmatpush.msra.mxu0 %v79
    %1126 = vmatpush.msra.mxu0 %v76
    %1127 = vmatpush.msra.mxu0 %v73
    %1128 = vmatpush.msra.mxu0 %v70
    %1129 = vmatpush.msra.mxu0 %v67
    %1130 = vmatpush.msra.mxu0 %v64
    %1131 = vmatpush.msra.mxu0 %v61
    %1132 = vmatpush.msra.mxu0 %v58
    %1133 = vmatmul.f32.gmra.mxu0 %v1076
    %v1134 = vpop.f32.mrf.mxu0
    %v1135 = vadd.f32 %v116, %v1134
    %1136 = vdwg.mxu0
    %v1137 = vadd.f32 %v495, %v542
    %1138 = vmatpush.msra.mxu0 %v101
    %1139 = vmatpush.msra.mxu0 %v98
    %1140 = vmatpush.msra.mxu0 %v95
    %1141 = vmatpush.msra.mxu0 %v92
    %1142 = vmatpush.msra.mxu0 %v89
    %1143 = vmatpush.msra.mxu0 %v86
    %1144 = vmatpush.msra.mxu0 %v83
    %1145 = vmatpush.msra.mxu0 %v80
    %1146 = vmatpush.msra.mxu0 %v77
    %1147 = vmatpush.msra.mxu0 %v74
    %1148 = vmatpush.msra.mxu0 %v71
    %1149 = vmatpush.msra.mxu0 %v68
    %1150 = vmatpush.msra.mxu0 %v65
    %1151 = vmatpush.msra.mxu0 %v62
    %1152 = vmatpush.msra.mxu0 %v59
    %1153 = vmatpush.msra.mxu0 %v56
    %1154 = vmatmul.f32.gmra.mxu0 %v1137
    %v1155 = vpop.f32.mrf.mxu0
    %v1156 = vadd.f32 %v114, %v1155
    %1157 = vdwg.mxu0
    %1158 = vmatpush.msra.mxu0 %v102
    %1159 = vmatpush.msra.mxu0 %v99
    %1160 = vmatpush.msra.mxu0 %v96
    %1161 = vmatpush.msra.mxu0 %v93
    %1162 = vmatpush.msra.mxu0 %v90
    %1163 = vmatpush.msra.mxu0 %v87
    %1164 = vmatpush.msra.mxu0 %v84
    %1165 = vmatpush.msra.mxu0 %v81
    %1166 = vmatpush.msra.mxu0 %v78
    %1167 = vmatpush.msra.mxu0 %v75
    %1168 = vmatpush.msra.mxu0 %v72
    %1169 = vmatpush.msra.mxu0 %v69
    %1170 = vmatpush.msra.mxu0 %v66
    %1171 = vmatpush.msra.mxu0 %v63
    %1172 = vmatpush.msra.mxu0 %v60
    %1173 = vmatpush.msra.mxu0 %v57
    %1174 = vmatmul.f32.gmra.mxu0 %v1137
    %v1175 = vpop.f32.mrf.mxu0
    %v1176 = vadd.f32 %v115, %v1175
    %1177 = vdwg.mxu0
    %1178 = vmatpush.msra.mxu0 %v103
    %1179 = vmatpush.msra.mxu0 %v100
    %1180 = vmatpush.msra.mxu0 %v97
    %1181 = vmatpush.msra.mxu0 %v94
    %1182 = vmatpush.msra.mxu0 %v91
    %1183 = vmatpush.msra.mxu0 %v88
    %1184 = vmatpush.msra.mxu0 %v85
    %1185 = vmatpush.msra.mxu0 %v82
    %1186 = vmatpush.msra.mxu0 %v79
    %1187 = vmatpush.msra.mxu0 %v76
    %1188 = vmatpush.msra.mxu0 %v73
    %1189 = vmatpush.msra.mxu0 %v70
    %1190 = vmatpush.msra.mxu0 %v67
    %1191 = vmatpush.msra.mxu0 %v64
    %1192 = vmatpush.msra.mxu0 %v61
    %1193 = vmatpush.msra.mxu0 %v58
    %1194 = vmatmul.f32.gmra.mxu0 %v1137
    %v1195 = vpop.f32.mrf.mxu0
    %v1196 = vadd.f32 %v116, %v1195
    %1197 = vdwg.mxu0
    %v1198 = vld [vmem:[%s7] sm:$0xff]
    %v1199 = vld [vmem:[%s7 + $0x8] sm:$0xff]
    %v1200 = vld [vmem:[%s7 + $0x10] sm:$0xff]
    %v1201 = vld [vmem:[%s7 + $0x18] sm:$0xff]
    %v1202 = vld [vmem:[%s7 + $0x20] sm:$0xff]
    %v1203 = vld [vmem:[%s7 + $0x28] sm:$0xff]
    %v1204 = vld [vmem:[%s7 + $0x30] sm:$0xff]
    %v1205 = vld [vmem:[%s7 + $0x38] sm:$0xff]
    %v1206 = vld [vmem:[%s7 + $0x40] sm:$0xff]
    %v1207 = vld [vmem:[%s7 + $0x48] sm:$0xff]
    %v1208 = vld [vmem:[%s7 + $0x50] sm:$0xff]
    %v1209 = vld [vmem:[%s7 + $0x58] sm:$0xff]
    %v1210 = vld [vmem:[%s7 + $0x60] sm:$0xff]
    %v1211 = vld [vmem:[%s7 + $0x68] sm:$0xff]
    %v1212 = vld [vmem:[%s7 + $0x70] sm:$0xff]
    %v1213 = vld [vmem:[%s7 + $0x78] sm:$0xff]
    %v1214 = vld [vmem:[%s7 + $0x80] sm:$0xff]
    %v1215 = vld [vmem:[%s7 + $0x88] sm:$0xff]
    %v1216 = vld [vmem:[%s7 + $0x90] sm:$0xff]
    %v1217 = vld [vmem:[%s7 + $0x98] sm:$0xff]
    %v1218 = vld [vmem:[%s7 + $0xa0] sm:$0xff]
    %v1219 = vld [vmem:[%s7 + $0xa8] sm:$0xff]
    %v1220 = vld [vmem:[%s7 + $0xb0] sm:$0xff]
    %v1221 = vld [vmem:[%s7 + $0xb8] sm:$0xff]
    %v1222 = vld [vmem:[%s7 + $0xc0] sm:$0xff]
    %v1223 = vld [vmem:[%s7 + $0xc8] sm:$0xff]
    %v1224 = vld [vmem:[%s7 + $0xd0] sm:$0xff]
    %v1225 = vld [vmem:[%s7 + $0xd8] sm:$0xff]
    %v1226 = vld [vmem:[%s7 + $0xe0] sm:$0xff]
    %v1227 = vld [vmem:[%s7 + $0xe8] sm:$0xff]
    %v1228 = vld [vmem:[%s7 + $0xf0] sm:$0xff]
    %v1229 = vld [vmem:[%s7 + $0xf8] sm:$0xff]
    %v1230 = vld [vmem:[%s7 + $0x100] sm:$0xff]
    %v1231 = vld [vmem:[%s7 + $0x108] sm:$0xff]
    %v1232 = vld [vmem:[%s7 + $0x110] sm:$0xff]
    %v1233 = vld [vmem:[%s7 + $0x118] sm:$0xff]
    %v1234 = vld [vmem:[%s7 + $0x120] sm:$0xff]
    %v1235 = vld [vmem:[%s7 + $0x128] sm:$0xff]
    %v1236 = vld [vmem:[%s7 + $0x130] sm:$0xff]
    %v1237 = vld [vmem:[%s7 + $0x138] sm:$0xff]
    %v1238 = vld [vmem:[%s7 + $0x140] sm:$0xff]
    %v1239 = vld [vmem:[%s7 + $0x148] sm:$0xff]
    %v1240 = vld [vmem:[%s7 + $0x150] sm:$0xff]
    %v1241 = vld [vmem:[%s7 + $0x158] sm:$0xff]
    %v1242 = vld [vmem:[%s7 + $0x160] sm:$0xff]
    %v1243 = vld [vmem:[%s7 + $0x168] sm:$0xff]
    %v1244 = vld [vmem:[%s7 + $0x170] sm:$0xff]
    %v1245 = vld [vmem:[%s7 + $0x178] sm:$0xff]
    %v1246 = vld [vmem:[%s8] sm:$0x1]
    %v1248 = vperm.slane %v1246, 0
    %1250 = vmatpush.msra.mxu0 %v1243
    %1251 = vmatpush.msra.mxu0 %v1240
    %1252 = vmatpush.msra.mxu0 %v1237
    %1253 = vmatpush.msra.mxu0 %v1234
    %1254 = vmatpush.msra.mxu0 %v1231
    %1255 = vmatpush.msra.mxu0 %v1228
    %1256 = vmatpush.msra.mxu0 %v1225
    %1257 = vmatpush.msra.mxu0 %v1222
    %1258 = vmatpush.msra.mxu0 %v1219
    %1259 = vmatpush.msra.mxu0 %v1216
    %1260 = vmatpush.msra.mxu0 %v1213
    %1261 = vmatpush.msra.mxu0 %v1210
    %1262 = vmatpush.msra.mxu0 %v1207
    %1263 = vmatpush.msra.mxu0 %v1204
    %1264 = vmatpush.msra.mxu0 %v1201
    %1265 = vmatpush.msra.mxu0 %v1198
    %1266 = vmatmul.f32.gmra.mxu0 0.0
    %v1267 = vpop.f32.mrf.mxu0
    %v1268 = vadd.f32 0.0, %v1267
    %1269 = vdwg.mxu0
    %1270 = vmatpush.msra.mxu0 %v1244
    %1271 = vmatpush.msra.mxu0 %v1241
    %1272 = vmatpush.msra.mxu0 %v1238
    %1273 = vmatpush.msra.mxu0 %v1235
    %1274 = vmatpush.msra.mxu0 %v1232
    %1275 = vmatpush.msra.mxu0 %v1229
    %1276 = vmatpush.msra.mxu0 %v1226
    %1277 = vmatpush.msra.mxu0 %v1223
    %1278 = vmatpush.msra.mxu0 %v1220
    %1279 = vmatpush.msra.mxu0 %v1217
    %1280 = vmatpush.msra.mxu0 %v1214
    %1281 = vmatpush.msra.mxu0 %v1211
    %1282 = vmatpush.msra.mxu0 %v1208
    %1283 = vmatpush.msra.mxu0 %v1205
    %1284 = vmatpush.msra.mxu0 %v1202
    %1285 = vmatpush.msra.mxu0 %v1199
    %1286 = vmatmul.f32.gmra.mxu0 0.0
    %v1287 = vpop.f32.mrf.mxu0
    %v1288 = vadd.f32 0.0, %v1287
    %1289 = vdwg.mxu0
    %1290 = vmatpush.msra.mxu0 %v1245
    %1291 = vmatpush.msra.mxu0 %v1242
    %1292 = vmatpush.msra.mxu0 %v1239
    %1293 = vmatpush.msra.mxu0 %v1236
    %1294 = vmatpush.msra.mxu0 %v1233
    %1295 = vmatpush.msra.mxu0 %v1230
    %1296 = vmatpush.msra.mxu0 %v1227
    %1297 = vmatpush.msra.mxu0 %v1224
    %1298 = vmatpush.msra.mxu0 %v1221
    %1299 = vmatpush.msra.mxu0 %v1218
    %1300 = vmatpush.msra.mxu0 %v1215
    %1301 = vmatpush.msra.mxu0 %v1212
    %1302 = vmatpush.msra.mxu0 %v1209
    %1303 = vmatpush.msra.mxu0 %v1206
    %1304 = vmatpush.msra.mxu0 %v1203
    %1305 = vmatpush.msra.mxu0 %v1200
    %1306 = vmatmul.f32.gmra.mxu0 0.0
    %v1307 = vpop.f32.mrf.mxu0
    %v1308 = vadd.f32 0.0, %v1307
    %1309 = vdwg.mxu0
    %v1310 = vadd.f32 %v608, %v1268
    %v1311 = vadd.f32 %v628, %v1288
    %v1312 = vxor.u32 %v1310, 2147483648
    %v1313 = vxor.u32 %v1311, 2147483648
    %v1314 = vmul.f32 %v1312, 1.442695
    %v1315 = vpow.pop %v1314
    %v1316 = vmul.f32 %v1313, 1.442695
    %v1317 = vpow.pop %v1316
    %v1318 = vadd.f32 %v1315, 1.0
    %v1319 = vadd.f32 %v1317, 1.0
    %v1320 = vrcp.pop %v1318
    %v1321 = vmul.f32 %v1318, %v1320
    %v1322 = vsub.f32 1.0, %v1321
    %v1323 = vmul.f32 %v1320, %v1322
    %v1324 = vadd.f32 %v1320, %v1323
    %vm1325 = vweird.f32 %v1318
    %vm1326 = vweird.f32 %v1320
    %vm1327 = vmor %vm1325, %vm1326
    %v1328 = vsel %vm1327, %v1320, %v1324
    %v1329 = vand.u32 2147483647, %v1318
    %vm1330 = vcmp.eq.f32.partialorder %v1329, 8.507059e+37
    %v1331 = vand.u32 %v1318, 2147483648
    %v1332 = vor.u32 1.1754944e-38, %v1331
    %v1333 = vsel %vm1330, %v1332, %v1328
    %v1334 = vmul.f32 1.0, %v1333
    %v1335 = vrcp.pop %v1319
    %v1336 = vmul.f32 %v1319, %v1335
    %v1337 = vsub.f32 1.0, %v1336
    %v1338 = vmul.f32 %v1335, %v1337
    %v1339 = vadd.f32 %v1335, %v1338
    %vm1340 = vweird.f32 %v1319
    %vm1341 = vweird.f32 %v1335
    %vm1342 = vmor %vm1340, %vm1341
    %v1343 = vsel %vm1342, %v1335, %v1339
    %v1344 = vand.u32 2147483647, %v1319
    %vm1345 = vcmp.eq.f32.partialorder %v1344, 8.507059e+37
    %v1346 = vand.u32 %v1319, 2147483648
    %v1347 = vor.u32 1.1754944e-38, %v1346
    %v1348 = vsel %vm1345, %v1347, %v1343
    %v1349 = vmul.f32 1.0, %v1348
    %v1350 = vadd.f32 %v1308, %v1248
    %v1351 = vmul.f32 %v1334, %v1350
    %v1352 = vadd.f32 %v648, %v1351
    %v1353 = vtanh.pop %v1352
    %v1354 = vsub.f32 1.0, %v1349
    %v1355 = vmul.f32 %v1354, %v1353
    %v1356 = vmul.f32 %v1349, 0.0
    %v1357 = vadd.f32 %v1355, %v1356
    %v1358 = vld [vmem:[%s9] sm:$0xff]
    %v1359 = vld [vmem:[%s9 + $0x8] sm:$0xff]
    %v1360 = vld [vmem:[%s9 + $0x10] sm:$0xff]
    %v1361 = vld [vmem:[%s9 + $0x18] sm:$0xff]
    %v1362 = vld [vmem:[%s9 + $0x20] sm:$0xff]
    %v1363 = vld [vmem:[%s9 + $0x28] sm:$0xff]
    %v1364 = vld [vmem:[%s9 + $0x30] sm:$0xff]
    %v1365 = vld [vmem:[%s9 + $0x38] sm:$0xff]
    %v1366 = vld [vmem:[%s9 + $0x40] sm:$0xff]
    %v1367 = vld [vmem:[%s9 + $0x48] sm:$0xff]
    %v1368 = vld [vmem:[%s9 + $0x50] sm:$0xff]
    %v1369 = vld [vmem:[%s9 + $0x58] sm:$0xff]
    %v1370 = vld [vmem:[%s9 + $0x60] sm:$0xff]
    %v1371 = vld [vmem:[%s9 + $0x68] sm:$0xff]
    %v1372 = vld [vmem:[%s9 + $0x70] sm:$0xff]
    %v1373 = vld [vmem:[%s9 + $0x78] sm:$0xff]
    %1374 = vmatpush.msra.mxu0 %v1243
    %1375 = vmatpush.msra.mxu0 %v1240
    %1376 = vmatpush.msra.mxu0 %v1237
    %1377 = vmatpush.msra.mxu0 %v1234
    %1378 = vmatpush.msra.mxu0 %v1231
    %1379 = vmatpush.msra.mxu0 %v1228
    %1380 = vmatpush.msra.mxu0 %v1225
    %1381 = vmatpush.msra.mxu0 %v1222
    %1382 = vmatpush.msra.mxu0 %v1219
    %1383 = vmatpush.msra.mxu0 %v1216
    %1384 = vmatpush.msra.mxu0 %v1213
    %1385 = vmatpush.msra.mxu0 %v1210
    %1386 = vmatpush.msra.mxu0 %v1207
    %1387 = vmatpush.msra.mxu0 %v1204
    %1388 = vmatpush.msra.mxu0 %v1201
    %1389 = vmatpush.msra.mxu0 %v1198
    %1390 = vmatmul.f32.gmra.mxu0 %v1357
    %v1391 = vpop.f32.mrf.mxu0
    %v1392 = vadd.f32 0.0, %v1391
    %1393 = vdwg.mxu0
    %1394 = vmatpush.msra.mxu0 %v1244
    %1395 = vmatpush.msra.mxu0 %v1241
    %1396 = vmatpush.msra.mxu0 %v1238
    %1397 = vmatpush.msra.mxu0 %v1235
    %1398 = vmatpush.msra.mxu0 %v1232
    %1399 = vmatpush.msra.mxu0 %v1229
    %1400 = vmatpush.msra.mxu0 %v1226
    %1401 = vmatpush.msra.mxu0 %v1223
    %1402 = vmatpush.msra.mxu0 %v1220
    %1403 = vmatpush.msra.mxu0 %v1217
    %1404 = vmatpush.msra.mxu0 %v1214
    %1405 = vmatpush.msra.mxu0 %v1211
    %1406 = vmatpush.msra.mxu0 %v1208
    %1407 = vmatpush.msra.mxu0 %v1205
    %1408 = vmatpush.msra.mxu0 %v1202
    %1409 = vmatpush.msra.mxu0 %v1199
    %1410 = vmatmul.f32.gmra.mxu0 %v1357
    %v1411 = vpop.f32.mrf.mxu0
    %v1412 = vadd.f32 0.0, %v1411
    %1413 = vdwg.mxu0
    %1414 = vmatpush.msra.mxu0 %v1245
    %1415 = vmatpush.msra.mxu0 %v1242
    %1416 = vmatpush.msra.mxu0 %v1239
    %1417 = vmatpush.msra.mxu0 %v1236
    %1418 = vmatpush.msra.mxu0 %v1233
    %1419 = vmatpush.msra.mxu0 %v1230
    %1420 = vmatpush.msra.mxu0 %v1227
    %1421 = vmatpush.msra.mxu0 %v1224
    %1422 = vmatpush.msra.mxu0 %v1221
    %1423 = vmatpush.msra.mxu0 %v1218
    %1424 = vmatpush.msra.mxu0 %v1215
    %1425 = vmatpush.msra.mxu0 %v1212
    %1426 = vmatpush.msra.mxu0 %v1209
    %1427 = vmatpush.msra.mxu0 %v1206
    %1428 = vmatpush.msra.mxu0 %v1203
    %1429 = vmatpush.msra.mxu0 %v1200
    %1430 = vmatmul.f32.gmra.mxu0 %v1357
    %v1431 = vpop.f32.mrf.mxu0
    %v1432 = vadd.f32 0.0, %v1431
    %1433 = vdwg.mxu0
    %v1434 = vadd.f32 %v668, %v1392
    %v1435 = vadd.f32 %v688, %v1412
    %v1436 = vxor.u32 %v1434, 2147483648
    %v1437 = vxor.u32 %v1435, 2147483648
    %v1438 = vmul.f32 %v1436, 1.442695
    %v1439 = vpow.pop %v1438
    %v1440 = vmul.f32 %v1437, 1.442695
    %v1441 = vpow.pop %v1440
    %v1442 = vadd.f32 %v1439, 1.0
    %v1443 = vadd.f32 %v1441, 1.0
    %v1444 = vrcp.pop %v1442
    %v1445 = vmul.f32 %v1442, %v1444
    %v1446 = vsub.f32 1.0, %v1445
    %v1447 = vmul.f32 %v1444, %v1446
    %v1448 = vadd.f32 %v1444, %v1447
    %vm1449 = vweird.f32 %v1442
    %vm1450 = vweird.f32 %v1444
    %vm1451 = vmor %vm1449, %vm1450
    %v1452 = vsel %vm1451, %v1444, %v1448
    %v1453 = vand.u32 2147483647, %v1442
    %vm1454 = vcmp.eq.f32.partialorder %v1453, 8.507059e+37
    %v1455 = vand.u32 %v1442, 2147483648
    %v1456 = vor.u32 1.1754944e-38, %v1455
    %v1457 = vsel %vm1454, %v1456, %v1452
    %v1458 = vmul.f32 1.0, %v1457
    %v1459 = vrcp.pop %v1443
    %v1460 = vmul.f32 %v1443, %v1459
    %v1461 = vsub.f32 1.0, %v1460
    %v1462 = vmul.f32 %v1459, %v1461
    %v1463 = vadd.f32 %v1459, %v1462
    %vm1464 = vweird.f32 %v1443
    %vm1465 = vweird.f32 %v1459
    %vm1466 = vmor %vm1464, %vm1465
    %v1467 = vsel %vm1466, %v1459, %v1463
    %v1468 = vand.u32 2147483647, %v1443
    %vm1469 = vcmp.eq.f32.partialorder %v1468, 8.507059e+37
    %v1470 = vand.u32 %v1443, 2147483648
    %v1471 = vor.u32 1.1754944e-38, %v1470
    %v1472 = vsel %vm1469, %v1471, %v1467
    %v1473 = vmul.f32 1.0, %v1472
    %v1474 = vadd.f32 %v1432, %v1248
    %v1475 = vmul.f32 %v1458, %v1474
    %v1476 = vadd.f32 %v708, %v1475
    %v1477 = vtanh.pop %v1476
    %v1478 = vsub.f32 1.0, %v1473
    %v1479 = vmul.f32 %v1478, %v1477
    %v1480 = vmul.f32 %v1473, %v1357
    %v1481 = vadd.f32 %v1479, %v1480
    %s1482 = scalar_lea.vmem %s9, 128
    %v1483 = vld [vmem:[%s1482] sm:$0xff]
    %v1484 = vld [vmem:[%s1482 + $0x8] sm:$0xff]
    %v1485 = vld [vmem:[%s1482 + $0x10] sm:$0xff]
    %v1486 = vld [vmem:[%s1482 + $0x18] sm:$0xff]
    %v1487 = vld [vmem:[%s1482 + $0x20] sm:$0xff]
    %v1488 = vld [vmem:[%s1482 + $0x28] sm:$0xff]
    %v1489 = vld [vmem:[%s1482 + $0x30] sm:$0xff]
    %v1490 = vld [vmem:[%s1482 + $0x38] sm:$0xff]
    %v1491 = vld [vmem:[%s1482 + $0x40] sm:$0xff]
    %v1492 = vld [vmem:[%s1482 + $0x48] sm:$0xff]
    %v1493 = vld [vmem:[%s1482 + $0x50] sm:$0xff]
    %v1494 = vld [vmem:[%s1482 + $0x58] sm:$0xff]
    %v1495 = vld [vmem:[%s1482 + $0x60] sm:$0xff]
    %v1496 = vld [vmem:[%s1482 + $0x68] sm:$0xff]
    %v1497 = vld [vmem:[%s1482 + $0x70] sm:$0xff]
    %v1498 = vld [vmem:[%s1482 + $0x78] sm:$0xff]
    %1499 = vmatpush.msra.mxu0 %v1498
    %1500 = vmatpush.msra.mxu0 %v1497
    %1501 = vmatpush.msra.mxu0 %v1496
    %1502 = vmatpush.msra.mxu0 %v1495
    %1503 = vmatpush.msra.mxu0 %v1494
    %1504 = vmatpush.msra.mxu0 %v1493
    %1505 = vmatpush.msra.mxu0 %v1492
    %1506 = vmatpush.msra.mxu0 %v1491
    %1507 = vmatpush.msra.mxu0 %v1490
    %1508 = vmatpush.msra.mxu0 %v1489
    %1509 = vmatpush.msra.mxu0 %v1488
    %1510 = vmatpush.msra.mxu0 %v1487
    %1511 = vmatpush.msra.mxu0 %v1486
    %1512 = vmatpush.msra.mxu0 %v1485
    %1513 = vmatpush.msra.mxu0 %v1484
    %1514 = vmatpush.msra.mxu0 %v1483
    %1515 = vmatmul.f32.gmra.mxu0 %v1481
    %v1516 = vpop.f32.mrf.mxu0
    %v1517 = vadd.f32 0.0, %v1516
    %1518 = vdwg.mxu0
    %1519 = vmatpush.msra.mxu0 %v1373
    %1520 = vmatpush.msra.mxu0 %v1372
    %1521 = vmatpush.msra.mxu0 %v1371
    %1522 = vmatpush.msra.mxu0 %v1370
    %1523 = vmatpush.msra.mxu0 %v1369
    %1524 = vmatpush.msra.mxu0 %v1368
    %1525 = vmatpush.msra.mxu0 %v1367
    %1526 = vmatpush.msra.mxu0 %v1366
    %1527 = vmatpush.msra.mxu0 %v1365
    %1528 = vmatpush.msra.mxu0 %v1364
    %1529 = vmatpush.msra.mxu0 %v1363
    %1530 = vmatpush.msra.mxu0 %v1362
    %1531 = vmatpush.msra.mxu0 %v1361
    %1532 = vmatpush.msra.mxu0 %v1360
    %1533 = vmatpush.msra.mxu0 %v1359
    %1534 = vmatpush.msra.mxu0 %v1358
    %1535 = vmatmul.f32.gmra.mxu0 %v1357
    %v1536 = vpop.f32.mrf.mxu0
    %v1537 = vadd.f32 %v1517, %v1536
    %1538 = vdwg.mxu0
    %1539 = vmatpush.msra.mxu0 %v1243
    %1540 = vmatpush.msra.mxu0 %v1240
    %1541 = vmatpush.msra.mxu0 %v1237
    %1542 = vmatpush.msra.mxu0 %v1234
    %1543 = vmatpush.msra.mxu0 %v1231
    %1544 = vmatpush.msra.mxu0 %v1228
    %1545 = vmatpush.msra.mxu0 %v1225
    %1546 = vmatpush.msra.mxu0 %v1222
    %1547 = vmatpush.msra.mxu0 %v1219
    %1548 = vmatpush.msra.mxu0 %v1216
    %1549 = vmatpush.msra.mxu0 %v1213
    %1550 = vmatpush.msra.mxu0 %v1210
    %1551 = vmatpush.msra.mxu0 %v1207
    %1552 = vmatpush.msra.mxu0 %v1204
    %1553 = vmatpush.msra.mxu0 %v1201
    %1554 = vmatpush.msra.mxu0 %v1198
    %1555 = vmatmul.f32.gmra.mxu0 %v1481
    %v1556 = vpop.f32.mrf.mxu0
    %v1557 = vadd.f32 0.0, %v1556
    %1558 = vdwg.mxu0
    %1559 = vmatpush.msra.mxu0 %v1244
    %1560 = vmatpush.msra.mxu0 %v1241
    %1561 = vmatpush.msra.mxu0 %v1238
    %1562 = vmatpush.msra.mxu0 %v1235
    %1563 = vmatpush.msra.mxu0 %v1232
    %1564 = vmatpush.msra.mxu0 %v1229
    %1565 = vmatpush.msra.mxu0 %v1226
    %1566 = vmatpush.msra.mxu0 %v1223
    %1567 = vmatpush.msra.mxu0 %v1220
    %1568 = vmatpush.msra.mxu0 %v1217
    %1569 = vmatpush.msra.mxu0 %v1214
    %1570 = vmatpush.msra.mxu0 %v1211
    %1571 = vmatpush.msra.mxu0 %v1208
    %1572 = vmatpush.msra.mxu0 %v1205
    %1573 = vmatpush.msra.mxu0 %v1202
    %1574 = vmatpush.msra.mxu0 %v1199
    %1575 = vmatmul.f32.gmra.mxu0 %v1481
    %v1576 = vpop.f32.mrf.mxu0
    %v1577 = vadd.f32 0.0, %v1576
    %1578 = vdwg.mxu0
    %1579 = vmatpush.msra.mxu0 %v1245
    %1580 = vmatpush.msra.mxu0 %v1242
    %1581 = vmatpush.msra.mxu0 %v1239
    %1582 = vmatpush.msra.mxu0 %v1236
    %1583 = vmatpush.msra.mxu0 %v1233
    %1584 = vmatpush.msra.mxu0 %v1230
    %1585 = vmatpush.msra.mxu0 %v1227
    %1586 = vmatpush.msra.mxu0 %v1224
    %1587 = vmatpush.msra.mxu0 %v1221
    %1588 = vmatpush.msra.mxu0 %v1218
    %1589 = vmatpush.msra.mxu0 %v1215
    %1590 = vmatpush.msra.mxu0 %v1212
    %1591 = vmatpush.msra.mxu0 %v1209
    %1592 = vmatpush.msra.mxu0 %v1206
    %1593 = vmatpush.msra.mxu0 %v1203
    %1594 = vmatpush.msra.mxu0 %v1200
    %1595 = vmatmul.f32.gmra.mxu0 %v1481
    %v1596 = vpop.f32.mrf.mxu0
    %v1597 = vadd.f32 0.0, %v1596
    %1598 = vdwg.mxu0
    %v1599 = vadd.f32 %v729, %v1557
    %v1600 = vadd.f32 %v749, %v1577
    %v1601 = vxor.u32 %v1599, 2147483648
    %v1602 = vxor.u32 %v1600, 2147483648
    %v1603 = vmul.f32 %v1601, 1.442695
    %v1604 = vpow.pop %v1603
    %v1605 = vmul.f32 %v1602, 1.442695
    %v1606 = vpow.pop %v1605
    %v1607 = vadd.f32 %v1604, 1.0
    %v1608 = vadd.f32 %v1606, 1.0
    %v1609 = vrcp.pop %v1607
    %v1610 = vmul.f32 %v1607, %v1609
    %v1611 = vsub.f32 1.0, %v1610
    %v1612 = vmul.f32 %v1609, %v1611
    %v1613 = vadd.f32 %v1609, %v1612
    %vm1614 = vweird.f32 %v1607
    %vm1615 = vweird.f32 %v1609
    %vm1616 = vmor %vm1614, %vm1615
    %v1617 = vsel %vm1616, %v1609, %v1613
    %v1618 = vand.u32 2147483647, %v1607
    %vm1619 = vcmp.eq.f32.partialorder %v1618, 8.507059e+37
    %v1620 = vand.u32 %v1607, 2147483648
    %v1621 = vor.u32 1.1754944e-38, %v1620
    %v1622 = vsel %vm1619, %v1621, %v1617
    %v1623 = vmul.f32 1.0, %v1622
    %v1624 = vrcp.pop %v1608
    %v1625 = vmul.f32 %v1608, %v1624
    %v1626 = vsub.f32 1.0, %v1625
    %v1627 = vmul.f32 %v1624, %v1626
    %v1628 = vadd.f32 %v1624, %v1627
    %vm1629 = vweird.f32 %v1608
    %vm1630 = vweird.f32 %v1624
    %vm1631 = vmor %vm1629, %vm1630
    %v1632 = vsel %vm1631, %v1624, %v1628
    %v1633 = vand.u32 2147483647, %v1608
    %vm1634 = vcmp.eq.f32.partialorder %v1633, 8.507059e+37
    %v1635 = vand.u32 %v1608, 2147483648
    %v1636 = vor.u32 1.1754944e-38, %v1635
    %v1637 = vsel %vm1634, %v1636, %v1632
    %v1638 = vmul.f32 1.0, %v1637
    %v1639 = vadd.f32 %v1597, %v1248
    %v1640 = vmul.f32 %v1623, %v1639
    %v1641 = vadd.f32 %v769, %v1640
    %v1642 = vtanh.pop %v1641
    %v1643 = vsub.f32 1.0, %v1638
    %v1644 = vmul.f32 %v1643, %v1642
    %v1645 = vmul.f32 %v1638, %v1481
    %v1646 = vadd.f32 %v1644, %v1645
    %s1647 = scalar_lea.vmem %s9, 256
    %v1648 = vld [vmem:[%s1647] sm:$0xff]
    %v1649 = vld [vmem:[%s1647 + $0x8] sm:$0xff]
    %v1650 = vld [vmem:[%s1647 + $0x10] sm:$0xff]
    %v1651 = vld [vmem:[%s1647 + $0x18] sm:$0xff]
    %v1652 = vld [vmem:[%s1647 + $0x20] sm:$0xff]
    %v1653 = vld [vmem:[%s1647 + $0x28] sm:$0xff]
    %v1654 = vld [vmem:[%s1647 + $0x30] sm:$0xff]
    %v1655 = vld [vmem:[%s1647 + $0x38] sm:$0xff]
    %v1656 = vld [vmem:[%s1647 + $0x40] sm:$0xff]
    %v1657 = vld [vmem:[%s1647 + $0x48] sm:$0xff]
    %v1658 = vld [vmem:[%s1647 + $0x50] sm:$0xff]
    %v1659 = vld [vmem:[%s1647 + $0x58] sm:$0xff]
    %v1660 = vld [vmem:[%s1647 + $0x60] sm:$0xff]
    %v1661 = vld [vmem:[%s1647 + $0x68] sm:$0xff]
    %v1662 = vld [vmem:[%s1647 + $0x70] sm:$0xff]
    %v1663 = vld [vmem:[%s1647 + $0x78] sm:$0xff]
    %1664 = vmatpush.msra.mxu0 %v1663
    %1665 = vmatpush.msra.mxu0 %v1662
    %1666 = vmatpush.msra.mxu0 %v1661
    %1667 = vmatpush.msra.mxu0 %v1660
    %1668 = vmatpush.msra.mxu0 %v1659
    %1669 = vmatpush.msra.mxu0 %v1658
    %1670 = vmatpush.msra.mxu0 %v1657
    %1671 = vmatpush.msra.mxu0 %v1656
    %1672 = vmatpush.msra.mxu0 %v1655
    %1673 = vmatpush.msra.mxu0 %v1654
    %1674 = vmatpush.msra.mxu0 %v1653
    %1675 = vmatpush.msra.mxu0 %v1652
    %1676 = vmatpush.msra.mxu0 %v1651
    %1677 = vmatpush.msra.mxu0 %v1650
    %1678 = vmatpush.msra.mxu0 %v1649
    %1679 = vmatpush.msra.mxu0 %v1648
    %1680 = vmatmul.f32.gmra.mxu0 %v1646
    %v1681 = vpop.f32.mrf.mxu0
    %v1682 = vadd.f32 0.0, %v1681
    %1683 = vdwg.mxu0
    %v1684 = vadd.f32 %v1537, %v1682
    %1685 = vmatpush.msra.mxu0 %v1243
    %1686 = vmatpush.msra.mxu0 %v1240
    %1687 = vmatpush.msra.mxu0 %v1237
    %1688 = vmatpush.msra.mxu0 %v1234
    %1689 = vmatpush.msra.mxu0 %v1231
    %1690 = vmatpush.msra.mxu0 %v1228
    %1691 = vmatpush.msra.mxu0 %v1225
    %1692 = vmatpush.msra.mxu0 %v1222
    %1693 = vmatpush.msra.mxu0 %v1219
    %1694 = vmatpush.msra.mxu0 %v1216
    %1695 = vmatpush.msra.mxu0 %v1213
    %1696 = vmatpush.msra.mxu0 %v1210
    %1697 = vmatpush.msra.mxu0 %v1207
    %1698 = vmatpush.msra.mxu0 %v1204
    %1699 = vmatpush.msra.mxu0 %v1201
    %1700 = vmatpush.msra.mxu0 %v1198
    %1701 = vmatmul.f32.gmra.mxu0 %v1646
    %v1702 = vpop.f32.mrf.mxu0
    %v1703 = vadd.f32 0.0, %v1702
    %1704 = vdwg.mxu0
    %1705 = vmatpush.msra.mxu0 %v1244
    %1706 = vmatpush.msra.mxu0 %v1241
    %1707 = vmatpush.msra.mxu0 %v1238
    %1708 = vmatpush.msra.mxu0 %v1235
    %1709 = vmatpush.msra.mxu0 %v1232
    %1710 = vmatpush.msra.mxu0 %v1229
    %1711 = vmatpush.msra.mxu0 %v1226
    %1712 = vmatpush.msra.mxu0 %v1223
    %1713 = vmatpush.msra.mxu0 %v1220
    %1714 = vmatpush.msra.mxu0 %v1217
    %1715 = vmatpush.msra.mxu0 %v1214
    %1716 = vmatpush.msra.mxu0 %v1211
    %1717 = vmatpush.msra.mxu0 %v1208
    %1718 = vmatpush.msra.mxu0 %v1205
    %1719 = vmatpush.msra.mxu0 %v1202
    %1720 = vmatpush.msra.mxu0 %v1199
    %1721 = vmatmul.f32.gmra.mxu0 %v1646
    %v1722 = vpop.f32.mrf.mxu0
    %v1723 = vadd.f32 0.0, %v1722
    %1724 = vdwg.mxu0
    %1725 = vmatpush.msra.mxu0 %v1245
    %1726 = vmatpush.msra.mxu0 %v1242
    %1727 = vmatpush.msra.mxu0 %v1239
    %1728 = vmatpush.msra.mxu0 %v1236
    %1729 = vmatpush.msra.mxu0 %v1233
    %1730 = vmatpush.msra.mxu0 %v1230
    %1731 = vmatpush.msra.mxu0 %v1227
    %1732 = vmatpush.msra.mxu0 %v1224
    %1733 = vmatpush.msra.mxu0 %v1221
    %1734 = vmatpush.msra.mxu0 %v1218
    %1735 = vmatpush.msra.mxu0 %v1215
    %1736 = vmatpush.msra.mxu0 %v1212
    %1737 = vmatpush.msra.mxu0 %v1209
    %1738 = vmatpush.msra.mxu0 %v1206
    %1739 = vmatpush.msra.mxu0 %v1203
    %1740 = vmatpush.msra.mxu0 %v1200
    %1741 = vmatmul.f32.gmra.mxu0 %v1646
    %v1742 = vpop.f32.mrf.mxu0
    %v1743 = vadd.f32 0.0, %v1742
    %1744 = vdwg.mxu0
    %v1745 = vadd.f32 %v790, %v1703
    %v1746 = vadd.f32 %v810, %v1723
    %v1747 = vxor.u32 %v1745, 2147483648
    %v1748 = vxor.u32 %v1746, 2147483648
    %v1749 = vmul.f32 %v1747, 1.442695
    %v1750 = vpow.pop %v1749
    %v1751 = vmul.f32 %v1748, 1.442695
    %v1752 = vpow.pop %v1751
    %v1753 = vadd.f32 %v1750, 1.0
    %v1754 = vadd.f32 %v1752, 1.0
    %v1755 = vrcp.pop %v1753
    %v1756 = vmul.f32 %v1753, %v1755
    %v1757 = vsub.f32 1.0, %v1756
    %v1758 = vmul.f32 %v1755, %v1757
    %v1759 = vadd.f32 %v1755, %v1758
    %vm1760 = vweird.f32 %v1753
    %vm1761 = vweird.f32 %v1755
    %vm1762 = vmor %vm1760, %vm1761
    %v1763 = vsel %vm1762, %v1755, %v1759
    %v1764 = vand.u32 2147483647, %v1753
    %vm1765 = vcmp.eq.f32.partialorder %v1764, 8.507059e+37
    %v1766 = vand.u32 %v1753, 2147483648
    %v1767 = vor.u32 1.1754944e-38, %v1766
    %v1768 = vsel %vm1765, %v1767, %v1763
    %v1769 = vmul.f32 1.0, %v1768
    %v1770 = vrcp.pop %v1754
    %v1771 = vmul.f32 %v1754, %v1770
    %v1772 = vsub.f32 1.0, %v1771
    %v1773 = vmul.f32 %v1770, %v1772
    %v1774 = vadd.f32 %v1770, %v1773
    %vm1775 = vweird.f32 %v1754
    %vm1776 = vweird.f32 %v1770
    %vm1777 = vmor %vm1775, %vm1776
    %v1778 = vsel %vm1777, %v1770, %v1774
    %v1779 = vand.u32 2147483647, %v1754
    %vm1780 = vcmp.eq.f32.partialorder %v1779, 8.507059e+37
    %v1781 = vand.u32 %v1754, 2147483648
    %v1782 = vor.u32 1.1754944e-38, %v1781
    %v1783 = vsel %vm1780, %v1782, %v1778
    %v1784 = vmul.f32 1.0, %v1783
    %v1785 = vadd.f32 %v1743, %v1248
    %v1786 = vmul.f32 %v1769, %v1785
    %v1787 = vadd.f32 %v830, %v1786
    %v1788 = vtanh.pop %v1787
    %v1789 = vsub.f32 1.0, %v1784
    %v1790 = vmul.f32 %v1789, %v1788
    %v1791 = vmul.f32 %v1784, %v1646
    %v1792 = vadd.f32 %v1790, %v1791
    %s1793 = scalar_lea.vmem %s9, 384
    %v1794 = vld [vmem:[%s1793] sm:$0xff]
    %v1795 = vld [vmem:[%s1793 + $0x8] sm:$0xff]
    %v1796 = vld [vmem:[%s1793 + $0x10] sm:$0xff]
    %v1797 = vld [vmem:[%s1793 + $0x18] sm:$0xff]
    %v1798 = vld [vmem:[%s1793 + $0x20] sm:$0xff]
    %v1799 = vld [vmem:[%s1793 + $0x28] sm:$0xff]
    %v1800 = vld [vmem:[%s1793 + $0x30] sm:$0xff]
    %v1801 = vld [vmem:[%s1793 + $0x38] sm:$0xff]
    %v1802 = vld [vmem:[%s1793 + $0x40] sm:$0xff]
    %v1803 = vld [vmem:[%s1793 + $0x48] sm:$0xff]
    %v1804 = vld [vmem:[%s1793 + $0x50] sm:$0xff]
    %v1805 = vld [vmem:[%s1793 + $0x58] sm:$0xff]
    %v1806 = vld [vmem:[%s1793 + $0x60] sm:$0xff]
    %v1807 = vld [vmem:[%s1793 + $0x68] sm:$0xff]
    %v1808 = vld [vmem:[%s1793 + $0x70] sm:$0xff]
    %v1809 = vld [vmem:[%s1793 + $0x78] sm:$0xff]
    %1810 = vmatpush.msra.mxu0 %v1809
    %1811 = vmatpush.msra.mxu0 %v1808
    %1812 = vmatpush.msra.mxu0 %v1807
    %1813 = vmatpush.msra.mxu0 %v1806
    %1814 = vmatpush.msra.mxu0 %v1805
    %1815 = vmatpush.msra.mxu0 %v1804
    %1816 = vmatpush.msra.mxu0 %v1803
    %1817 = vmatpush.msra.mxu0 %v1802
    %1818 = vmatpush.msra.mxu0 %v1801
    %1819 = vmatpush.msra.mxu0 %v1800
    %1820 = vmatpush.msra.mxu0 %v1799
    %1821 = vmatpush.msra.mxu0 %v1798
    %1822 = vmatpush.msra.mxu0 %v1797
    %1823 = vmatpush.msra.mxu0 %v1796
    %1824 = vmatpush.msra.mxu0 %v1795
    %1825 = vmatpush.msra.mxu0 %v1794
    %1826 = vmatmul.f32.gmra.mxu0 %v1792
    %v1827 = vpop.f32.mrf.mxu0
    %v1828 = vadd.f32 0.0, %v1827
    %1829 = vdwg.mxu0
    %v1830 = vadd.f32 %v1684, %v1828
    %1831 = vmatpush.msra.mxu0 %v1243
    %1832 = vmatpush.msra.mxu0 %v1240
    %1833 = vmatpush.msra.mxu0 %v1237
    %1834 = vmatpush.msra.mxu0 %v1234
    %1835 = vmatpush.msra.mxu0 %v1231
    %1836 = vmatpush.msra.mxu0 %v1228
    %1837 = vmatpush.msra.mxu0 %v1225
    %1838 = vmatpush.msra.mxu0 %v1222
    %1839 = vmatpush.msra.mxu0 %v1219
    %1840 = vmatpush.msra.mxu0 %v1216
    %1841 = vmatpush.msra.mxu0 %v1213
    %1842 = vmatpush.msra.mxu0 %v1210
    %1843 = vmatpush.msra.mxu0 %v1207
    %1844 = vmatpush.msra.mxu0 %v1204
    %1845 = vmatpush.msra.mxu0 %v1201
    %1846 = vmatpush.msra.mxu0 %v1198
    %1847 = vmatmul.f32.gmra.mxu0 %v1792
    %v1848 = vpop.f32.mrf.mxu0
    %v1849 = vadd.f32 0.0, %v1848
    %1850 = vdwg.mxu0
    %1851 = vmatpush.msra.mxu0 %v1244
    %1852 = vmatpush.msra.mxu0 %v1241
    %1853 = vmatpush.msra.mxu0 %v1238
    %1854 = vmatpush.msra.mxu0 %v1235
    %1855 = vmatpush.msra.mxu0 %v1232
    %1856 = vmatpush.msra.mxu0 %v1229
    %1857 = vmatpush.msra.mxu0 %v1226
    %1858 = vmatpush.msra.mxu0 %v1223
    %1859 = vmatpush.msra.mxu0 %v1220
    %1860 = vmatpush.msra.mxu0 %v1217
    %1861 = vmatpush.msra.mxu0 %v1214
    %1862 = vmatpush.msra.mxu0 %v1211
    %1863 = vmatpush.msra.mxu0 %v1208
    %1864 = vmatpush.msra.mxu0 %v1205
    %1865 = vmatpush.msra.mxu0 %v1202
    %1866 = vmatpush.msra.mxu0 %v1199
    %1867 = vmatmul.f32.gmra.mxu0 %v1792
    %v1868 = vpop.f32.mrf.mxu0
    %v1869 = vadd.f32 0.0, %v1868
    %1870 = vdwg.mxu0
    %1871 = vmatpush.msra.mxu0 %v1245
    %1872 = vmatpush.msra.mxu0 %v1242
    %1873 = vmatpush.msra.mxu0 %v1239
    %1874 = vmatpush.msra.mxu0 %v1236
    %1875 = vmatpush.msra.mxu0 %v1233
    %1876 = vmatpush.msra.mxu0 %v1230
    %1877 = vmatpush.msra.mxu0 %v1227
    %1878 = vmatpush.msra.mxu0 %v1224
    %1879 = vmatpush.msra.mxu0 %v1221
    %1880 = vmatpush.msra.mxu0 %v1218
    %1881 = vmatpush.msra.mxu0 %v1215
    %1882 = vmatpush.msra.mxu0 %v1212
    %1883 = vmatpush.msra.mxu0 %v1209
    %1884 = vmatpush.msra.mxu0 %v1206
    %1885 = vmatpush.msra.mxu0 %v1203
    %1886 = vmatpush.msra.mxu0 %v1200
    %1887 = vmatmul.f32.gmra.mxu0 %v1792
    %v1888 = vpop.f32.mrf.mxu0
    %v1889 = vadd.f32 0.0, %v1888
    %1890 = vdwg.mxu0
    %v1891 = vadd.f32 %v851, %v1849
    %v1892 = vadd.f32 %v871, %v1869
    %v1893 = vxor.u32 %v1891, 2147483648
    %v1894 = vxor.u32 %v1892, 2147483648
    %v1895 = vmul.f32 %v1893, 1.442695
    %v1896 = vpow.pop %v1895
    %v1897 = vmul.f32 %v1894, 1.442695
    %v1898 = vpow.pop %v1897
    %v1899 = vadd.f32 %v1896, 1.0
    %v1900 = vadd.f32 %v1898, 1.0
    %v1901 = vrcp.pop %v1899
    %v1902 = vmul.f32 %v1899, %v1901
    %v1903 = vsub.f32 1.0, %v1902
    %v1904 = vmul.f32 %v1901, %v1903
    %v1905 = vadd.f32 %v1901, %v1904
    %vm1906 = vweird.f32 %v1899
    %vm1907 = vweird.f32 %v1901
    %vm1908 = vmor %vm1906, %vm1907
    %v1909 = vsel %vm1908, %v1901, %v1905
    %v1910 = vand.u32 2147483647, %v1899
    %vm1911 = vcmp.eq.f32.partialorder %v1910, 8.507059e+37
    %v1912 = vand.u32 %v1899, 2147483648
    %v1913 = vor.u32 1.1754944e-38, %v1912
    %v1914 = vsel %vm1911, %v1913, %v1909
    %v1915 = vmul.f32 1.0, %v1914
    %v1916 = vrcp.pop %v1900
    %v1917 = vmul.f32 %v1900, %v1916
    %v1918 = vsub.f32 1.0, %v1917
    %v1919 = vmul.f32 %v1916, %v1918
    %v1920 = vadd.f32 %v1916, %v1919
    %vm1921 = vweird.f32 %v1900
    %vm1922 = vweird.f32 %v1916
    %vm1923 = vmor %vm1921, %vm1922
    %v1924 = vsel %vm1923, %v1916, %v1920
    %v1925 = vand.u32 2147483647, %v1900
    %vm1926 = vcmp.eq.f32.partialorder %v1925, 8.507059e+37
    %v1927 = vand.u32 %v1900, 2147483648
    %v1928 = vor.u32 1.1754944e-38, %v1927
    %v1929 = vsel %vm1926, %v1928, %v1924
    %v1930 = vmul.f32 1.0, %v1929
    %v1931 = vadd.f32 %v1889, %v1248
    %v1932 = vmul.f32 %v1915, %v1931
    %v1933 = vadd.f32 %v891, %v1932
    %v1934 = vtanh.pop %v1933
    %v1935 = vsub.f32 1.0, %v1930
    %v1936 = vmul.f32 %v1935, %v1934
    %v1937 = vmul.f32 %v1930, %v1792
    %v1938 = vadd.f32 %v1936, %v1937
    %s1939 = scalar_lea.vmem %s9, 512
    %v1940 = vld [vmem:[%s1939] sm:$0xff]
    %v1941 = vld [vmem:[%s1939 + $0x8] sm:$0xff]
    %v1942 = vld [vmem:[%s1939 + $0x10] sm:$0xff]
    %v1943 = vld [vmem:[%s1939 + $0x18] sm:$0xff]
    %v1944 = vld [vmem:[%s1939 + $0x20] sm:$0xff]
    %v1945 = vld [vmem:[%s1939 + $0x28] sm:$0xff]
    %v1946 = vld [vmem:[%s1939 + $0x30] sm:$0xff]
    %v1947 = vld [vmem:[%s1939 + $0x38] sm:$0xff]
    %v1948 = vld [vmem:[%s1939 + $0x40] sm:$0xff]
    %v1949 = vld [vmem:[%s1939 + $0x48] sm:$0xff]
    %v1950 = vld [vmem:[%s1939 + $0x50] sm:$0xff]
    %v1951 = vld [vmem:[%s1939 + $0x58] sm:$0xff]
    %v1952 = vld [vmem:[%s1939 + $0x60] sm:$0xff]
    %v1953 = vld [vmem:[%s1939 + $0x68] sm:$0xff]
    %v1954 = vld [vmem:[%s1939 + $0x70] sm:$0xff]
    %v1955 = vld [vmem:[%s1939 + $0x78] sm:$0xff]
    %1956 = vmatpush.msra.mxu0 %v1955
    %1957 = vmatpush.msra.mxu0 %v1954
    %1958 = vmatpush.msra.mxu0 %v1953
    %1959 = vmatpush.msra.mxu0 %v1952
    %1960 = vmatpush.msra.mxu0 %v1951
    %1961 = vmatpush.msra.mxu0 %v1950
    %1962 = vmatpush.msra.mxu0 %v1949
    %1963 = vmatpush.msra.mxu0 %v1948
    %1964 = vmatpush.msra.mxu0 %v1947
    %1965 = vmatpush.msra.mxu0 %v1946
    %1966 = vmatpush.msra.mxu0 %v1945
    %1967 = vmatpush.msra.mxu0 %v1944
    %1968 = vmatpush.msra.mxu0 %v1943
    %1969 = vmatpush.msra.mxu0 %v1942
    %1970 = vmatpush.msra.mxu0 %v1941
    %1971 = vmatpush.msra.mxu0 %v1940
    %1972 = vmatmul.f32.gmra.mxu0 %v1938
    %v1973 = vpop.f32.mrf.mxu0
    %v1974 = vadd.f32 0.0, %v1973
    %1975 = vdwg.mxu0
    %v1976 = vadd.f32 %v1830, %v1974
    %1977 = vmatpush.msra.mxu0 %v1243
    %1978 = vmatpush.msra.mxu0 %v1240
    %1979 = vmatpush.msra.mxu0 %v1237
    %1980 = vmatpush.msra.mxu0 %v1234
    %1981 = vmatpush.msra.mxu0 %v1231
    %1982 = vmatpush.msra.mxu0 %v1228
    %1983 = vmatpush.msra.mxu0 %v1225
    %1984 = vmatpush.msra.mxu0 %v1222
    %1985 = vmatpush.msra.mxu0 %v1219
    %1986 = vmatpush.msra.mxu0 %v1216
    %1987 = vmatpush.msra.mxu0 %v1213
    %1988 = vmatpush.msra.mxu0 %v1210
    %1989 = vmatpush.msra.mxu0 %v1207
    %1990 = vmatpush.msra.mxu0 %v1204
    %1991 = vmatpush.msra.mxu0 %v1201
    %1992 = vmatpush.msra.mxu0 %v1198
    %1993 = vmatmul.f32.gmra.mxu0 %v1938
    %v1994 = vpop.f32.mrf.mxu0
    %v1995 = vadd.f32 0.0, %v1994
    %1996 = vdwg.mxu0
    %1997 = vmatpush.msra.mxu0 %v1244
    %1998 = vmatpush.msra.mxu0 %v1241
    %1999 = vmatpush.msra.mxu0 %v1238
    %2000 = vmatpush.msra.mxu0 %v1235
    %2001 = vmatpush.msra.mxu0 %v1232
    %2002 = vmatpush.msra.mxu0 %v1229
    %2003 = vmatpush.msra.mxu0 %v1226
    %2004 = vmatpush.msra.mxu0 %v1223
    %2005 = vmatpush.msra.mxu0 %v1220
    %2006 = vmatpush.msra.mxu0 %v1217
    %2007 = vmatpush.msra.mxu0 %v1214
    %2008 = vmatpush.msra.mxu0 %v1211
    %2009 = vmatpush.msra.mxu0 %v1208
    %2010 = vmatpush.msra.mxu0 %v1205
    %2011 = vmatpush.msra.mxu0 %v1202
    %2012 = vmatpush.msra.mxu0 %v1199
    %2013 = vmatmul.f32.gmra.mxu0 %v1938
    %v2014 = vpop.f32.mrf.mxu0
    %v2015 = vadd.f32 0.0, %v2014
    %2016 = vdwg.mxu0
    %2017 = vmatpush.msra.mxu0 %v1245
    %2018 = vmatpush.msra.mxu0 %v1242
    %2019 = vmatpush.msra.mxu0 %v1239
    %2020 = vmatpush.msra.mxu0 %v1236
    %2021 = vmatpush.msra.mxu0 %v1233
    %2022 = vmatpush.msra.mxu0 %v1230
    %2023 = vmatpush.msra.mxu0 %v1227
    %2024 = vmatpush.msra.mxu0 %v1224
    %2025 = vmatpush.msra.mxu0 %v1221
    %2026 = vmatpush.msra.mxu0 %v1218
    %2027 = vmatpush.msra.mxu0 %v1215
    %2028 = vmatpush.msra.mxu0 %v1212
    %2029 = vmatpush.msra.mxu0 %v1209
    %2030 = vmatpush.msra.mxu0 %v1206
    %2031 = vmatpush.msra.mxu0 %v1203
    %2032 = vmatpush.msra.mxu0 %v1200
    %2033 = vmatmul.f32.gmra.mxu0 %v1938
    %v2034 = vpop.f32.mrf.mxu0
    %v2035 = vadd.f32 0.0, %v2034
    %2036 = vdwg.mxu0
    %v2037 = vadd.f32 %v912, %v1995
    %v2038 = vadd.f32 %v932, %v2015
    %v2039 = vxor.u32 %v2037, 2147483648
    %v2040 = vxor.u32 %v2038, 2147483648
    %v2041 = vmul.f32 %v2039, 1.442695
    %v2042 = vpow.pop %v2041
    %v2043 = vmul.f32 %v2040, 1.442695
    %v2044 = vpow.pop %v2043
    %v2045 = vadd.f32 %v2042, 1.0
    %v2046 = vadd.f32 %v2044, 1.0
    %v2047 = vrcp.pop %v2045
    %v2048 = vmul.f32 %v2045, %v2047
    %v2049 = vsub.f32 1.0, %v2048
    %v2050 = vmul.f32 %v2047, %v2049
    %v2051 = vadd.f32 %v2047, %v2050
    %vm2052 = vweird.f32 %v2045
    %vm2053 = vweird.f32 %v2047
    %vm2054 = vmor %vm2052, %vm2053
    %v2055 = vsel %vm2054, %v2047, %v2051
    %v2056 = vand.u32 2147483647, %v2045
    %vm2057 = vcmp.eq.f32.partialorder %v2056, 8.507059e+37
    %v2058 = vand.u32 %v2045, 2147483648
    %v2059 = vor.u32 1.1754944e-38, %v2058
    %v2060 = vsel %vm2057, %v2059, %v2055
    %v2061 = vmul.f32 1.0, %v2060
    %v2062 = vrcp.pop %v2046
    %v2063 = vmul.f32 %v2046, %v2062
    %v2064 = vsub.f32 1.0, %v2063
    %v2065 = vmul.f32 %v2062, %v2064
    %v2066 = vadd.f32 %v2062, %v2065
    %vm2067 = vweird.f32 %v2046
    %vm2068 = vweird.f32 %v2062
    %vm2069 = vmor %vm2067, %vm2068
    %v2070 = vsel %vm2069, %v2062, %v2066
    %v2071 = vand.u32 2147483647, %v2046
    %vm2072 = vcmp.eq.f32.partialorder %v2071, 8.507059e+37
    %v2073 = vand.u32 %v2046, 2147483648
    %v2074 = vor.u32 1.1754944e-38, %v2073
    %v2075 = vsel %vm2072, %v2074, %v2070
    %v2076 = vmul.f32 1.0, %v2075
    %v2077 = vadd.f32 %v2035, %v1248
    %v2078 = vmul.f32 %v2061, %v2077
    %v2079 = vadd.f32 %v952, %v2078
    %v2080 = vtanh.pop %v2079
    %v2081 = vsub.f32 1.0, %v2076
    %v2082 = vmul.f32 %v2081, %v2080
    %v2083 = vmul.f32 %v2076, %v1938
    %v2084 = vadd.f32 %v2082, %v2083
    %s2085 = scalar_lea.vmem %s9, 640
    %v2086 = vld [vmem:[%s2085] sm:$0xff]
    %v2087 = vld [vmem:[%s2085 + $0x8] sm:$0xff]
    %v2088 = vld [vmem:[%s2085 + $0x10] sm:$0xff]
    %v2089 = vld [vmem:[%s2085 + $0x18] sm:$0xff]
    %v2090 = vld [vmem:[%s2085 + $0x20] sm:$0xff]
    %v2091 = vld [vmem:[%s2085 + $0x28] sm:$0xff]
    %v2092 = vld [vmem:[%s2085 + $0x30] sm:$0xff]
    %v2093 = vld [vmem:[%s2085 + $0x38] sm:$0xff]
    %v2094 = vld [vmem:[%s2085 + $0x40] sm:$0xff]
    %v2095 = vld [vmem:[%s2085 + $0x48] sm:$0xff]
    %v2096 = vld [vmem:[%s2085 + $0x50] sm:$0xff]
    %v2097 = vld [vmem:[%s2085 + $0x58] sm:$0xff]
    %v2098 = vld [vmem:[%s2085 + $0x60] sm:$0xff]
    %v2099 = vld [vmem:[%s2085 + $0x68] sm:$0xff]
    %v2100 = vld [vmem:[%s2085 + $0x70] sm:$0xff]
    %v2101 = vld [vmem:[%s2085 + $0x78] sm:$0xff]
    %2102 = vmatpush.msra.mxu0 %v2101
    %2103 = vmatpush.msra.mxu0 %v2100
    %2104 = vmatpush.msra.mxu0 %v2099
    %2105 = vmatpush.msra.mxu0 %v2098
    %2106 = vmatpush.msra.mxu0 %v2097
    %2107 = vmatpush.msra.mxu0 %v2096
    %2108 = vmatpush.msra.mxu0 %v2095
    %2109 = vmatpush.msra.mxu0 %v2094
    %2110 = vmatpush.msra.mxu0 %v2093
    %2111 = vmatpush.msra.mxu0 %v2092
    %2112 = vmatpush.msra.mxu0 %v2091
    %2113 = vmatpush.msra.mxu0 %v2090
    %2114 = vmatpush.msra.mxu0 %v2089
    %2115 = vmatpush.msra.mxu0 %v2088
    %2116 = vmatpush.msra.mxu0 %v2087
    %2117 = vmatpush.msra.mxu0 %v2086
    %2118 = vmatmul.f32.gmra.mxu0 %v2084
    %v2119 = vpop.f32.mrf.mxu0
    %v2120 = vadd.f32 0.0, %v2119
    %2121 = vdwg.mxu0
    %v2122 = vadd.f32 %v1976, %v2120
    %2123 = vmatpush.msra.mxu0 %v1243
    %2124 = vmatpush.msra.mxu0 %v1240
    %2125 = vmatpush.msra.mxu0 %v1237
    %2126 = vmatpush.msra.mxu0 %v1234
    %2127 = vmatpush.msra.mxu0 %v1231
    %2128 = vmatpush.msra.mxu0 %v1228
    %2129 = vmatpush.msra.mxu0 %v1225
    %2130 = vmatpush.msra.mxu0 %v1222
    %2131 = vmatpush.msra.mxu0 %v1219
    %2132 = vmatpush.msra.mxu0 %v1216
    %2133 = vmatpush.msra.mxu0 %v1213
    %2134 = vmatpush.msra.mxu0 %v1210
    %2135 = vmatpush.msra.mxu0 %v1207
    %2136 = vmatpush.msra.mxu0 %v1204
    %2137 = vmatpush.msra.mxu0 %v1201
    %2138 = vmatpush.msra.mxu0 %v1198
    %2139 = vmatmul.f32.gmra.mxu0 %v2084
    %v2140 = vpop.f32.mrf.mxu0
    %v2141 = vadd.f32 0.0, %v2140
    %2142 = vdwg.mxu0
    %2143 = vmatpush.msra.mxu0 %v1244
    %2144 = vmatpush.msra.mxu0 %v1241
    %2145 = vmatpush.msra.mxu0 %v1238
    %2146 = vmatpush.msra.mxu0 %v1235
    %2147 = vmatpush.msra.mxu0 %v1232
    %2148 = vmatpush.msra.mxu0 %v1229
    %2149 = vmatpush.msra.mxu0 %v1226
    %2150 = vmatpush.msra.mxu0 %v1223
    %2151 = vmatpush.msra.mxu0 %v1220
    %2152 = vmatpush.msra.mxu0 %v1217
    %2153 = vmatpush.msra.mxu0 %v1214
    %2154 = vmatpush.msra.mxu0 %v1211
    %2155 = vmatpush.msra.mxu0 %v1208
    %2156 = vmatpush.msra.mxu0 %v1205
    %2157 = vmatpush.msra.mxu0 %v1202
    %2158 = vmatpush.msra.mxu0 %v1199
    %2159 = vmatmul.f32.gmra.mxu0 %v2084
    %v2160 = vpop.f32.mrf.mxu0
    %v2161 = vadd.f32 0.0, %v2160
    %2162 = vdwg.mxu0
    %2163 = vmatpush.msra.mxu0 %v1245
    %2164 = vmatpush.msra.mxu0 %v1242
    %2165 = vmatpush.msra.mxu0 %v1239
    %2166 = vmatpush.msra.mxu0 %v1236
    %2167 = vmatpush.msra.mxu0 %v1233
    %2168 = vmatpush.msra.mxu0 %v1230
    %2169 = vmatpush.msra.mxu0 %v1227
    %2170 = vmatpush.msra.mxu0 %v1224
    %2171 = vmatpush.msra.mxu0 %v1221
    %2172 = vmatpush.msra.mxu0 %v1218
    %2173 = vmatpush.msra.mxu0 %v1215
    %2174 = vmatpush.msra.mxu0 %v1212
    %2175 = vmatpush.msra.mxu0 %v1209
    %2176 = vmatpush.msra.mxu0 %v1206
    %2177 = vmatpush.msra.mxu0 %v1203
    %2178 = vmatpush.msra.mxu0 %v1200
    %2179 = vmatmul.f32.gmra.mxu0 %v2084
    %v2180 = vpop.f32.mrf.mxu0
    %v2181 = vadd.f32 0.0, %v2180
    %2182 = vdwg.mxu0
    %v2183 = vadd.f32 %v973, %v2141
    %v2184 = vadd.f32 %v993, %v2161
    %v2185 = vxor.u32 %v2183, 2147483648
    %v2186 = vxor.u32 %v2184, 2147483648
    %v2187 = vmul.f32 %v2185, 1.442695
    %v2188 = vpow.pop %v2187
    %v2189 = vmul.f32 %v2186, 1.442695
    %v2190 = vpow.pop %v2189
    %v2191 = vadd.f32 %v2188, 1.0
    %v2192 = vadd.f32 %v2190, 1.0
    %v2193 = vrcp.pop %v2191
    %v2194 = vmul.f32 %v2191, %v2193
    %v2195 = vsub.f32 1.0, %v2194
    %v2196 = vmul.f32 %v2193, %v2195
    %v2197 = vadd.f32 %v2193, %v2196
    %vm2198 = vweird.f32 %v2191
    %vm2199 = vweird.f32 %v2193
    %vm2200 = vmor %vm2198, %vm2199
    %v2201 = vsel %vm2200, %v2193, %v2197
    %v2202 = vand.u32 2147483647, %v2191
    %vm2203 = vcmp.eq.f32.partialorder %v2202, 8.507059e+37
    %v2204 = vand.u32 %v2191, 2147483648
    %v2205 = vor.u32 1.1754944e-38, %v2204
    %v2206 = vsel %vm2203, %v2205, %v2201
    %v2207 = vmul.f32 1.0, %v2206
    %v2208 = vrcp.pop %v2192
    %v2209 = vmul.f32 %v2192, %v2208
    %v2210 = vsub.f32 1.0, %v2209
    %v2211 = vmul.f32 %v2208, %v2210
    %v2212 = vadd.f32 %v2208, %v2211
    %vm2213 = vweird.f32 %v2192
    %vm2214 = vweird.f32 %v2208
    %vm2215 = vmor %vm2213, %vm2214
    %v2216 = vsel %vm2215, %v2208, %v2212
    %v2217 = vand.u32 2147483647, %v2192
    %vm2218 = vcmp.eq.f32.partialorder %v2217, 8.507059e+37
    %v2219 = vand.u32 %v2192, 2147483648
    %v2220 = vor.u32 1.1754944e-38, %v2219
    %v2221 = vsel %vm2218, %v2220, %v2216
    %v2222 = vmul.f32 1.0, %v2221
    %v2223 = vadd.f32 %v2181, %v1248
    %v2224 = vmul.f32 %v2207, %v2223
    %v2225 = vadd.f32 %v1013, %v2224
    %v2226 = vtanh.pop %v2225
    %v2227 = vsub.f32 1.0, %v2222
    %v2228 = vmul.f32 %v2227, %v2226
    %v2229 = vmul.f32 %v2222, %v2084
    %v2230 = vadd.f32 %v2228, %v2229
    %s2231 = scalar_lea.vmem %s9, 768
    %v2232 = vld [vmem:[%s2231] sm:$0xff]
    %v2233 = vld [vmem:[%s2231 + $0x8] sm:$0xff]
    %v2234 = vld [vmem:[%s2231 + $0x10] sm:$0xff]
    %v2235 = vld [vmem:[%s2231 + $0x18] sm:$0xff]
    %v2236 = vld [vmem:[%s2231 + $0x20] sm:$0xff]
    %v2237 = vld [vmem:[%s2231 + $0x28] sm:$0xff]
    %v2238 = vld [vmem:[%s2231 + $0x30] sm:$0xff]
    %v2239 = vld [vmem:[%s2231 + $0x38] sm:$0xff]
    %v2240 = vld [vmem:[%s2231 + $0x40] sm:$0xff]
    %v2241 = vld [vmem:[%s2231 + $0x48] sm:$0xff]
    %v2242 = vld [vmem:[%s2231 + $0x50] sm:$0xff]
    %v2243 = vld [vmem:[%s2231 + $0x58] sm:$0xff]
    %v2244 = vld [vmem:[%s2231 + $0x60] sm:$0xff]
    %v2245 = vld [vmem:[%s2231 + $0x68] sm:$0xff]
    %v2246 = vld [vmem:[%s2231 + $0x70] sm:$0xff]
    %v2247 = vld [vmem:[%s2231 + $0x78] sm:$0xff]
    %2248 = vmatpush.msra.mxu0 %v2247
    %2249 = vmatpush.msra.mxu0 %v2246
    %2250 = vmatpush.msra.mxu0 %v2245
    %2251 = vmatpush.msra.mxu0 %v2244
    %2252 = vmatpush.msra.mxu0 %v2243
    %2253 = vmatpush.msra.mxu0 %v2242
    %2254 = vmatpush.msra.mxu0 %v2241
    %2255 = vmatpush.msra.mxu0 %v2240
    %2256 = vmatpush.msra.mxu0 %v2239
    %2257 = vmatpush.msra.mxu0 %v2238
    %2258 = vmatpush.msra.mxu0 %v2237
    %2259 = vmatpush.msra.mxu0 %v2236
    %2260 = vmatpush.msra.mxu0 %v2235
    %2261 = vmatpush.msra.mxu0 %v2234
    %2262 = vmatpush.msra.mxu0 %v2233
    %2263 = vmatpush.msra.mxu0 %v2232
    %2264 = vmatmul.f32.gmra.mxu0 %v2230
    %v2265 = vpop.f32.mrf.mxu0
    %v2266 = vadd.f32 0.0, %v2265
    %2267 = vdwg.mxu0
    %v2268 = vadd.f32 %v2122, %v2266
    %2269 = vmatpush.msra.mxu0 %v1243
    %2270 = vmatpush.msra.mxu0 %v1240
    %2271 = vmatpush.msra.mxu0 %v1237
    %2272 = vmatpush.msra.mxu0 %v1234
    %2273 = vmatpush.msra.mxu0 %v1231
    %2274 = vmatpush.msra.mxu0 %v1228
    %2275 = vmatpush.msra.mxu0 %v1225
    %2276 = vmatpush.msra.mxu0 %v1222
    %2277 = vmatpush.msra.mxu0 %v1219
    %2278 = vmatpush.msra.mxu0 %v1216
    %2279 = vmatpush.msra.mxu0 %v1213
    %2280 = vmatpush.msra.mxu0 %v1210
    %2281 = vmatpush.msra.mxu0 %v1207
    %2282 = vmatpush.msra.mxu0 %v1204
    %2283 = vmatpush.msra.mxu0 %v1201
    %2284 = vmatpush.msra.mxu0 %v1198
    %2285 = vmatmul.f32.gmra.mxu0 %v2230
    %v2286 = vpop.f32.mrf.mxu0
    %v2287 = vadd.f32 0.0, %v2286
    %2288 = vdwg.mxu0
    %2289 = vmatpush.msra.mxu0 %v1244
    %2290 = vmatpush.msra.mxu0 %v1241
    %2291 = vmatpush.msra.mxu0 %v1238
    %2292 = vmatpush.msra.mxu0 %v1235
    %2293 = vmatpush.msra.mxu0 %v1232
    %2294 = vmatpush.msra.mxu0 %v1229
    %2295 = vmatpush.msra.mxu0 %v1226
    %2296 = vmatpush.msra.mxu0 %v1223
    %2297 = vmatpush.msra.mxu0 %v1220
    %2298 = vmatpush.msra.mxu0 %v1217
    %2299 = vmatpush.msra.mxu0 %v1214
    %2300 = vmatpush.msra.mxu0 %v1211
    %2301 = vmatpush.msra.mxu0 %v1208
    %2302 = vmatpush.msra.mxu0 %v1205
    %2303 = vmatpush.msra.mxu0 %v1202
    %2304 = vmatpush.msra.mxu0 %v1199
    %2305 = vmatmul.f32.gmra.mxu0 %v2230
    %v2306 = vpop.f32.mrf.mxu0
    %v2307 = vadd.f32 0.0, %v2306
    %2308 = vdwg.mxu0
    %2309 = vmatpush.msra.mxu0 %v1245
    %2310 = vmatpush.msra.mxu0 %v1242
    %2311 = vmatpush.msra.mxu0 %v1239
    %2312 = vmatpush.msra.mxu0 %v1236
    %2313 = vmatpush.msra.mxu0 %v1233
    %2314 = vmatpush.msra.mxu0 %v1230
    %2315 = vmatpush.msra.mxu0 %v1227
    %2316 = vmatpush.msra.mxu0 %v1224
    %2317 = vmatpush.msra.mxu0 %v1221
    %2318 = vmatpush.msra.mxu0 %v1218
    %2319 = vmatpush.msra.mxu0 %v1215
    %2320 = vmatpush.msra.mxu0 %v1212
    %2321 = vmatpush.msra.mxu0 %v1209
    %2322 = vmatpush.msra.mxu0 %v1206
    %2323 = vmatpush.msra.mxu0 %v1203
    %2324 = vmatpush.msra.mxu0 %v1200
    %2325 = vmatmul.f32.gmra.mxu0 %v2230
    %v2326 = vpop.f32.mrf.mxu0
    %v2327 = vadd.f32 0.0, %v2326
    %2328 = vdwg.mxu0
    %v2329 = vadd.f32 %v1034, %v2287
    %v2330 = vadd.f32 %v1054, %v2307
    %v2331 = vxor.u32 %v2329, 2147483648
    %v2332 = vxor.u32 %v2330, 2147483648
    %v2333 = vmul.f32 %v2331, 1.442695
    %v2334 = vpow.pop %v2333
    %v2335 = vmul.f32 %v2332, 1.442695
    %v2336 = vpow.pop %v2335
    %v2337 = vadd.f32 %v2334, 1.0
    %v2338 = vadd.f32 %v2336, 1.0
    %v2339 = vrcp.pop %v2337
    %v2340 = vmul.f32 %v2337, %v2339
    %v2341 = vsub.f32 1.0, %v2340
    %v2342 = vmul.f32 %v2339, %v2341
    %v2343 = vadd.f32 %v2339, %v2342
    %vm2344 = vweird.f32 %v2337
    %vm2345 = vweird.f32 %v2339
    %vm2346 = vmor %vm2344, %vm2345
    %v2347 = vsel %vm2346, %v2339, %v2343
    %v2348 = vand.u32 2147483647, %v2337
    %vm2349 = vcmp.eq.f32.partialorder %v2348, 8.507059e+37
    %v2350 = vand.u32 %v2337, 2147483648
    %v2351 = vor.u32 1.1754944e-38, %v2350
    %v2352 = vsel %vm2349, %v2351, %v2347
    %v2353 = vmul.f32 1.0, %v2352
    %v2354 = vrcp.pop %v2338
    %v2355 = vmul.f32 %v2338, %v2354
    %v2356 = vsub.f32 1.0, %v2355
    %v2357 = vmul.f32 %v2354, %v2356
    %v2358 = vadd.f32 %v2354, %v2357
    %vm2359 = vweird.f32 %v2338
    %vm2360 = vweird.f32 %v2354
    %vm2361 = vmor %vm2359, %vm2360
    %v2362 = vsel %vm2361, %v2354, %v2358
    %v2363 = vand.u32 2147483647, %v2338
    %vm2364 = vcmp.eq.f32.partialorder %v2363, 8.507059e+37
    %v2365 = vand.u32 %v2338, 2147483648
    %v2366 = vor.u32 1.1754944e-38, %v2365
    %v2367 = vsel %vm2364, %v2366, %v2362
    %v2368 = vmul.f32 1.0, %v2367
    %v2369 = vadd.f32 %v2327, %v1248
    %v2370 = vmul.f32 %v2353, %v2369
    %v2371 = vadd.f32 %v1074, %v2370
    %v2372 = vtanh.pop %v2371
    %v2373 = vsub.f32 1.0, %v2368
    %v2374 = vmul.f32 %v2373, %v2372
    %v2375 = vmul.f32 %v2368, %v2230
    %v2376 = vadd.f32 %v2374, %v2375
    %s2377 = scalar_lea.vmem %s9, 896
    %v2378 = vld [vmem:[%s2377] sm:$0xff]
    %v2379 = vld [vmem:[%s2377 + $0x8] sm:$0xff]
    %v2380 = vld [vmem:[%s2377 + $0x10] sm:$0xff]
    %v2381 = vld [vmem:[%s2377 + $0x18] sm:$0xff]
    %v2382 = vld [vmem:[%s2377 + $0x20] sm:$0xff]
    %v2383 = vld [vmem:[%s2377 + $0x28] sm:$0xff]
    %v2384 = vld [vmem:[%s2377 + $0x30] sm:$0xff]
    %v2385 = vld [vmem:[%s2377 + $0x38] sm:$0xff]
    %v2386 = vld [vmem:[%s2377 + $0x40] sm:$0xff]
    %v2387 = vld [vmem:[%s2377 + $0x48] sm:$0xff]
    %v2388 = vld [vmem:[%s2377 + $0x50] sm:$0xff]
    %v2389 = vld [vmem:[%s2377 + $0x58] sm:$0xff]
    %v2390 = vld [vmem:[%s2377 + $0x60] sm:$0xff]
    %v2391 = vld [vmem:[%s2377 + $0x68] sm:$0xff]
    %v2392 = vld [vmem:[%s2377 + $0x70] sm:$0xff]
    %v2393 = vld [vmem:[%s2377 + $0x78] sm:$0xff]
    %2394 = vmatpush.msra.mxu0 %v2393
    %2395 = vmatpush.msra.mxu0 %v2392
    %2396 = vmatpush.msra.mxu0 %v2391
    %2397 = vmatpush.msra.mxu0 %v2390
    %2398 = vmatpush.msra.mxu0 %v2389
    %2399 = vmatpush.msra.mxu0 %v2388
    %2400 = vmatpush.msra.mxu0 %v2387
    %2401 = vmatpush.msra.mxu0 %v2386
    %2402 = vmatpush.msra.mxu0 %v2385
    %2403 = vmatpush.msra.mxu0 %v2384
    %2404 = vmatpush.msra.mxu0 %v2383
    %2405 = vmatpush.msra.mxu0 %v2382
    %2406 = vmatpush.msra.mxu0 %v2381
    %2407 = vmatpush.msra.mxu0 %v2380
    %2408 = vmatpush.msra.mxu0 %v2379
    %2409 = vmatpush.msra.mxu0 %v2378
    %2410 = vmatmul.f32.gmra.mxu0 %v2376
    %v2411 = vpop.f32.mrf.mxu0
    %v2412 = vadd.f32 0.0, %v2411
    %2413 = vdwg.mxu0
    %v2414 = vadd.f32 %v2268, %v2412
    %2415 = vmatpush.msra.mxu0 %v1243
    %2416 = vmatpush.msra.mxu0 %v1240
    %2417 = vmatpush.msra.mxu0 %v1237
    %2418 = vmatpush.msra.mxu0 %v1234
    %2419 = vmatpush.msra.mxu0 %v1231
    %2420 = vmatpush.msra.mxu0 %v1228
    %2421 = vmatpush.msra.mxu0 %v1225
    %2422 = vmatpush.msra.mxu0 %v1222
    %2423 = vmatpush.msra.mxu0 %v1219
    %2424 = vmatpush.msra.mxu0 %v1216
    %2425 = vmatpush.msra.mxu0 %v1213
    %2426 = vmatpush.msra.mxu0 %v1210
    %2427 = vmatpush.msra.mxu0 %v1207
    %2428 = vmatpush.msra.mxu0 %v1204
    %2429 = vmatpush.msra.mxu0 %v1201
    %2430 = vmatpush.msra.mxu0 %v1198
    %2431 = vmatmul.f32.gmra.mxu0 %v2376
    %v2432 = vpop.f32.mrf.mxu0
    %v2433 = vadd.f32 0.0, %v2432
    %2434 = vdwg.mxu0
    %2435 = vmatpush.msra.mxu0 %v1244
    %2436 = vmatpush.msra.mxu0 %v1241
    %2437 = vmatpush.msra.mxu0 %v1238
    %2438 = vmatpush.msra.mxu0 %v1235
    %2439 = vmatpush.msra.mxu0 %v1232
    %2440 = vmatpush.msra.mxu0 %v1229
    %2441 = vmatpush.msra.mxu0 %v1226
    %2442 = vmatpush.msra.mxu0 %v1223
    %2443 = vmatpush.msra.mxu0 %v1220
    %2444 = vmatpush.msra.mxu0 %v1217
    %2445 = vmatpush.msra.mxu0 %v1214
    %2446 = vmatpush.msra.mxu0 %v1211
    %2447 = vmatpush.msra.mxu0 %v1208
    %2448 = vmatpush.msra.mxu0 %v1205
    %2449 = vmatpush.msra.mxu0 %v1202
    %2450 = vmatpush.msra.mxu0 %v1199
    %2451 = vmatmul.f32.gmra.mxu0 %v2376
    %v2452 = vpop.f32.mrf.mxu0
    %v2453 = vadd.f32 0.0, %v2452
    %2454 = vdwg.mxu0
    %2455 = vmatpush.msra.mxu0 %v1245
    %2456 = vmatpush.msra.mxu0 %v1242
    %2457 = vmatpush.msra.mxu0 %v1239
    %2458 = vmatpush.msra.mxu0 %v1236
    %2459 = vmatpush.msra.mxu0 %v1233
    %2460 = vmatpush.msra.mxu0 %v1230
    %2461 = vmatpush.msra.mxu0 %v1227
    %2462 = vmatpush.msra.mxu0 %v1224
    %2463 = vmatpush.msra.mxu0 %v1221
    %2464 = vmatpush.msra.mxu0 %v1218
    %2465 = vmatpush.msra.mxu0 %v1215
    %2466 = vmatpush.msra.mxu0 %v1212
    %2467 = vmatpush.msra.mxu0 %v1209
    %2468 = vmatpush.msra.mxu0 %v1206
    %2469 = vmatpush.msra.mxu0 %v1203
    %2470 = vmatpush.msra.mxu0 %v1200
    %2471 = vmatmul.f32.gmra.mxu0 %v2376
    %v2472 = vpop.f32.mrf.mxu0
    %v2473 = vadd.f32 0.0, %v2472
    %2474 = vdwg.mxu0
    %v2475 = vadd.f32 %v1095, %v2433
    %v2476 = vadd.f32 %v1115, %v2453
    %v2477 = vxor.u32 %v2475, 2147483648
    %v2478 = vxor.u32 %v2476, 2147483648
    %v2479 = vmul.f32 %v2477, 1.442695
    %v2480 = vpow.pop %v2479
    %v2481 = vmul.f32 %v2478, 1.442695
    %v2482 = vpow.pop %v2481
    %v2483 = vadd.f32 %v2480, 1.0
    %v2484 = vadd.f32 %v2482, 1.0
    %v2485 = vrcp.pop %v2483
    %v2486 = vmul.f32 %v2483, %v2485
    %v2487 = vsub.f32 1.0, %v2486
    %v2488 = vmul.f32 %v2485, %v2487
    %v2489 = vadd.f32 %v2485, %v2488
    %vm2490 = vweird.f32 %v2483
    %vm2491 = vweird.f32 %v2485
    %vm2492 = vmor %vm2490, %vm2491
    %v2493 = vsel %vm2492, %v2485, %v2489
    %v2494 = vand.u32 2147483647, %v2483
    %vm2495 = vcmp.eq.f32.partialorder %v2494, 8.507059e+37
    %v2496 = vand.u32 %v2483, 2147483648
    %v2497 = vor.u32 1.1754944e-38, %v2496
    %v2498 = vsel %vm2495, %v2497, %v2493
    %v2499 = vmul.f32 1.0, %v2498
    %v2500 = vrcp.pop %v2484
    %v2501 = vmul.f32 %v2484, %v2500
    %v2502 = vsub.f32 1.0, %v2501
    %v2503 = vmul.f32 %v2500, %v2502
    %v2504 = vadd.f32 %v2500, %v2503
    %vm2505 = vweird.f32 %v2484
    %vm2506 = vweird.f32 %v2500
    %vm2507 = vmor %vm2505, %vm2506
    %v2508 = vsel %vm2507, %v2500, %v2504
    %v2509 = vand.u32 2147483647, %v2484
    %vm2510 = vcmp.eq.f32.partialorder %v2509, 8.507059e+37
    %v2511 = vand.u32 %v2484, 2147483648
    %v2512 = vor.u32 1.1754944e-38, %v2511
    %v2513 = vsel %vm2510, %v2512, %v2508
    %v2514 = vmul.f32 1.0, %v2513
    %v2515 = vadd.f32 %v2473, %v1248
    %v2516 = vmul.f32 %v2499, %v2515
    %v2517 = vadd.f32 %v1135, %v2516
    %v2518 = vtanh.pop %v2517
    %v2519 = vsub.f32 1.0, %v2514
    %v2520 = vmul.f32 %v2519, %v2518
    %v2521 = vmul.f32 %v2514, %v2376
    %v2522 = vadd.f32 %v2520, %v2521
    %s2523 = scalar_lea.vmem %s9, 1024
    %v2524 = vld [vmem:[%s2523] sm:$0xff]
    %v2525 = vld [vmem:[%s2523 + $0x8] sm:$0xff]
    %v2526 = vld [vmem:[%s2523 + $0x10] sm:$0xff]
    %v2527 = vld [vmem:[%s2523 + $0x18] sm:$0xff]
    %v2528 = vld [vmem:[%s2523 + $0x20] sm:$0xff]
    %v2529 = vld [vmem:[%s2523 + $0x28] sm:$0xff]
    %v2530 = vld [vmem:[%s2523 + $0x30] sm:$0xff]
    %v2531 = vld [vmem:[%s2523 + $0x38] sm:$0xff]
    %v2532 = vld [vmem:[%s2523 + $0x40] sm:$0xff]
    %v2533 = vld [vmem:[%s2523 + $0x48] sm:$0xff]
    %v2534 = vld [vmem:[%s2523 + $0x50] sm:$0xff]
    %v2535 = vld [vmem:[%s2523 + $0x58] sm:$0xff]
    %v2536 = vld [vmem:[%s2523 + $0x60] sm:$0xff]
    %v2537 = vld [vmem:[%s2523 + $0x68] sm:$0xff]
    %v2538 = vld [vmem:[%s2523 + $0x70] sm:$0xff]
    %v2539 = vld [vmem:[%s2523 + $0x78] sm:$0xff]
    %2540 = vmatpush.msra.mxu0 %v2539
    %2541 = vmatpush.msra.mxu0 %v2538
    %2542 = vmatpush.msra.mxu0 %v2537
    %2543 = vmatpush.msra.mxu0 %v2536
    %2544 = vmatpush.msra.mxu0 %v2535
    %2545 = vmatpush.msra.mxu0 %v2534
    %2546 = vmatpush.msra.mxu0 %v2533
    %2547 = vmatpush.msra.mxu0 %v2532
    %2548 = vmatpush.msra.mxu0 %v2531
    %2549 = vmatpush.msra.mxu0 %v2530
    %2550 = vmatpush.msra.mxu0 %v2529
    %2551 = vmatpush.msra.mxu0 %v2528
    %2552 = vmatpush.msra.mxu0 %v2527
    %2553 = vmatpush.msra.mxu0 %v2526
    %2554 = vmatpush.msra.mxu0 %v2525
    %2555 = vmatpush.msra.mxu0 %v2524
    %2556 = vmatmul.f32.gmra.mxu0 %v2522
    %v2557 = vpop.f32.mrf.mxu0
    %v2558 = vadd.f32 0.0, %v2557
    %2559 = vdwg.mxu0
    %v2560 = vadd.f32 %v2414, %v2558
    %2561 = vmatpush.msra.mxu0 %v1243
    %2562 = vmatpush.msra.mxu0 %v1240
    %2563 = vmatpush.msra.mxu0 %v1237
    %2564 = vmatpush.msra.mxu0 %v1234
    %2565 = vmatpush.msra.mxu0 %v1231
    %2566 = vmatpush.msra.mxu0 %v1228
    %2567 = vmatpush.msra.mxu0 %v1225
    %2568 = vmatpush.msra.mxu0 %v1222
    %2569 = vmatpush.msra.mxu0 %v1219
    %2570 = vmatpush.msra.mxu0 %v1216
    %2571 = vmatpush.msra.mxu0 %v1213
    %2572 = vmatpush.msra.mxu0 %v1210
    %2573 = vmatpush.msra.mxu0 %v1207
    %2574 = vmatpush.msra.mxu0 %v1204
    %2575 = vmatpush.msra.mxu0 %v1201
    %2576 = vmatpush.msra.mxu0 %v1198
    %2577 = vmatmul.f32.gmra.mxu0 %v2522
    %v2578 = vpop.f32.mrf.mxu0
    %v2579 = vadd.f32 0.0, %v2578
    %2580 = vdwg.mxu0
    %2581 = vmatpush.msra.mxu0 %v1244
    %2582 = vmatpush.msra.mxu0 %v1241
    %2583 = vmatpush.msra.mxu0 %v1238
    %2584 = vmatpush.msra.mxu0 %v1235
    %2585 = vmatpush.msra.mxu0 %v1232
    %2586 = vmatpush.msra.mxu0 %v1229
    %2587 = vmatpush.msra.mxu0 %v1226
    %2588 = vmatpush.msra.mxu0 %v1223
    %2589 = vmatpush.msra.mxu0 %v1220
    %2590 = vmatpush.msra.mxu0 %v1217
    %2591 = vmatpush.msra.mxu0 %v1214
    %2592 = vmatpush.msra.mxu0 %v1211
    %2593 = vmatpush.msra.mxu0 %v1208
    %2594 = vmatpush.msra.mxu0 %v1205
    %2595 = vmatpush.msra.mxu0 %v1202
    %2596 = vmatpush.msra.mxu0 %v1199
    %2597 = vmatmul.f32.gmra.mxu0 %v2522
    %v2598 = vpop.f32.mrf.mxu0
    %v2599 = vadd.f32 0.0, %v2598
    %2600 = vdwg.mxu0
    %2601 = vmatpush.msra.mxu0 %v1245
    %2602 = vmatpush.msra.mxu0 %v1242
    %2603 = vmatpush.msra.mxu0 %v1239
    %2604 = vmatpush.msra.mxu0 %v1236
    %2605 = vmatpush.msra.mxu0 %v1233
    %2606 = vmatpush.msra.mxu0 %v1230
    %2607 = vmatpush.msra.mxu0 %v1227
    %2608 = vmatpush.msra.mxu0 %v1224
    %2609 = vmatpush.msra.mxu0 %v1221
    %2610 = vmatpush.msra.mxu0 %v1218
    %2611 = vmatpush.msra.mxu0 %v1215
    %2612 = vmatpush.msra.mxu0 %v1212
    %2613 = vmatpush.msra.mxu0 %v1209
    %2614 = vmatpush.msra.mxu0 %v1206
    %2615 = vmatpush.msra.mxu0 %v1203
    %2616 = vmatpush.msra.mxu0 %v1200
    %2617 = vmatmul.f32.gmra.mxu0 %v2522
    %v2618 = vpop.f32.mrf.mxu0
    %v2619 = vadd.f32 0.0, %v2618
    %2620 = vdwg.mxu0
    %v2621 = vadd.f32 %v1156, %v2579
    %v2622 = vadd.f32 %v1176, %v2599
    %v2623 = vxor.u32 %v2621, 2147483648
    %v2624 = vxor.u32 %v2622, 2147483648
    %v2625 = vmul.f32 %v2623, 1.442695
    %v2626 = vpow.pop %v2625
    %v2627 = vmul.f32 %v2624, 1.442695
    %v2628 = vpow.pop %v2627
    %v2629 = vadd.f32 %v2626, 1.0
    %v2630 = vadd.f32 %v2628, 1.0
    %v2631 = vrcp.pop %v2629
    %v2632 = vmul.f32 %v2629, %v2631
    %v2633 = vsub.f32 1.0, %v2632
    %v2634 = vmul.f32 %v2631, %v2633
    %v2635 = vadd.f32 %v2631, %v2634
    %vm2636 = vweird.f32 %v2629
    %vm2637 = vweird.f32 %v2631
    %vm2638 = vmor %vm2636, %vm2637
    %v2639 = vsel %vm2638, %v2631, %v2635
    %v2640 = vand.u32 2147483647, %v2629
    %vm2641 = vcmp.eq.f32.partialorder %v2640, 8.507059e+37
    %v2642 = vand.u32 %v2629, 2147483648
    %v2643 = vor.u32 1.1754944e-38, %v2642
    %v2644 = vsel %vm2641, %v2643, %v2639
    %v2645 = vmul.f32 1.0, %v2644
    %v2646 = vrcp.pop %v2630
    %v2647 = vmul.f32 %v2630, %v2646
    %v2648 = vsub.f32 1.0, %v2647
    %v2649 = vmul.f32 %v2646, %v2648
    %v2650 = vadd.f32 %v2646, %v2649
    %vm2651 = vweird.f32 %v2630
    %vm2652 = vweird.f32 %v2646
    %vm2653 = vmor %vm2651, %vm2652
    %v2654 = vsel %vm2653, %v2646, %v2650
    %v2655 = vand.u32 2147483647, %v2630
    %vm2656 = vcmp.eq.f32.partialorder %v2655, 8.507059e+37
    %v2657 = vand.u32 %v2630, 2147483648
    %v2658 = vor.u32 1.1754944e-38, %v2657
    %v2659 = vsel %vm2656, %v2658, %v2654
    %v2660 = vmul.f32 1.0, %v2659
    %v2661 = vadd.f32 %v2619, %v1248
    %v2662 = vmul.f32 %v2645, %v2661
    %v2663 = vadd.f32 %v1196, %v2662
    %v2664 = vtanh.pop %v2663
    %v2665 = vsub.f32 1.0, %v2660
    %v2666 = vmul.f32 %v2665, %v2664
    %v2667 = vmul.f32 %v2660, %v2522
    %v2668 = vadd.f32 %v2666, %v2667
    %s2669 = scalar_lea.vmem %s9, 1152
    %v2670 = vld [vmem:[%s2669] sm:$0xff]
    %v2671 = vld [vmem:[%s2669 + $0x8] sm:$0xff]
    %v2672 = vld [vmem:[%s2669 + $0x10] sm:$0xff]
    %v2673 = vld [vmem:[%s2669 + $0x18] sm:$0xff]
    %v2674 = vld [vmem:[%s2669 + $0x20] sm:$0xff]
    %v2675 = vld [vmem:[%s2669 + $0x28] sm:$0xff]
    %v2676 = vld [vmem:[%s2669 + $0x30] sm:$0xff]
    %v2677 = vld [vmem:[%s2669 + $0x38] sm:$0xff]
    %v2678 = vld [vmem:[%s2669 + $0x40] sm:$0xff]
    %v2679 = vld [vmem:[%s2669 + $0x48] sm:$0xff]
    %v2680 = vld [vmem:[%s2669 + $0x50] sm:$0xff]
    %v2681 = vld [vmem:[%s2669 + $0x58] sm:$0xff]
    %v2682 = vld [vmem:[%s2669 + $0x60] sm:$0xff]
    %v2683 = vld [vmem:[%s2669 + $0x68] sm:$0xff]
    %v2684 = vld [vmem:[%s2669 + $0x70] sm:$0xff]
    %v2685 = vld [vmem:[%s2669 + $0x78] sm:$0xff]
    %2686 = vmatpush.msra.mxu0 %v2685
    %2687 = vmatpush.msra.mxu0 %v2684
    %2688 = vmatpush.msra.mxu0 %v2683
    %2689 = vmatpush.msra.mxu0 %v2682
    %2690 = vmatpush.msra.mxu0 %v2681
    %2691 = vmatpush.msra.mxu0 %v2680
    %2692 = vmatpush.msra.mxu0 %v2679
    %2693 = vmatpush.msra.mxu0 %v2678
    %2694 = vmatpush.msra.mxu0 %v2677
    %2695 = vmatpush.msra.mxu0 %v2676
    %2696 = vmatpush.msra.mxu0 %v2675
    %2697 = vmatpush.msra.mxu0 %v2674
    %2698 = vmatpush.msra.mxu0 %v2673
    %2699 = vmatpush.msra.mxu0 %v2672
    %2700 = vmatpush.msra.mxu0 %v2671
    %2701 = vmatpush.msra.mxu0 %v2670
    %2702 = vmatmul.f32.gmra.mxu0 %v2668
    %v2703 = vpop.f32.mrf.mxu0
    %v2704 = vadd.f32 0.0, %v2703
    %2705 = vdwg.mxu0
    %v2706 = vadd.f32 %v2560, %v2704
    %v2707 = vld [vmem:[%s10] sm:$0x1]
    %v2709 = vperm.slane %v2707, 0
    %v2711 = vadd.f32 %v2706, %v2709
    %vm2712 = vcmask 130048
    %2713 = vst.msk [vmem:[#allocation2] sm:$0xff] %vm2712, %v2711
    // Predicated region
    $region46: #{tpu_custom_call.1} parent=1 // pred_check
      _
    $region47: #{tpu_custom_call.1} parent=1 // pred_check_branch
      %2715 = sbr.rel (0) target = $region49
    $region48: #{tpu_custom_call.1} parent=1 // pred_region
      %2717 = vsyncadd [#allocation3], 0
      %s2719 = sshll.u32 [#allocation2], 4
      %s2720 = int_to_ptr.vmem [resolvable:$true] %s2719
      %s2721 = sshll.u32 %s11, 4
      %s2722 = int_to_ptr.hbm [resolvable:$true] %s2721
      %2724 = dma.vmem_to_hbm [thread:$0]  %s2720, 128, %s2722, [#allocation3]
    $region49: #{tpu_custom_call.1} parent=1 // pred_fallthru
      _
    // Predicated region
    $region50: #{tpu_custom_call.1} parent=1 // pred_check
      _
    $region51: #{tpu_custom_call.1} parent=1 // pred_check_branch
      %2726 = sbr.rel (0) target = $region53
    $region52: #{tpu_custom_call.1} parent=1 // pred_region
      %2728 = dma.done [#allocation3], 128
    $region53: #{tpu_custom_call.1} parent=1 // pred_fallthru
      _
    %2729 = vsyncpa [#allocation3], 1

</llo_original>
